<compile_context>
chip_gen: v6e
topology: v6e:2x2x1
jax: 0.10.0
libtpu: 0.0.40
codegen_flags: <defaults>
</compile_context>

<pallas_src>
import functools

import jax
import jax.numpy as jnp
from jax.experimental import pallas as pl
from jax.experimental.pallas import tpu as pltpu

_EPS = 1e-8  # GroupNorm eps per the reference module


def _prelu(x, a):
    return jnp.where(x >= 0.0, x, a * x)


# --------------------------------------------------------------------------
# Kernel A: encoder matmul + GroupNorm(input_norm) + input 1x1 conv
# --------------------------------------------------------------------------

def _enc_stage_kernel(frames_ref, enc_w_ref, gn_g_ref, gn_b_ref,
                      in_w_ref, in_b_ref, feats_ref, x0_ref, *, eps):
    feats = jnp.dot(frames_ref[...], enc_w_ref[...],
                    preferred_element_type=jnp.float32)
    feats_ref[...] = feats                      # needed again for mask*feats
    mean = jnp.mean(feats)
    var = jnp.mean(jnp.square(feats - mean))
    fn = (feats - mean) * jax.lax.rsqrt(var + eps)
    fn = fn * gn_g_ref[...] + gn_b_ref[...]
    x0_ref[...] = (jnp.dot(fn, in_w_ref[...], preferred_element_type=jnp.float32)
                   + in_b_ref[...])


def encoder_and_input_stage(frames, enc_w, gn_g, gn_b, in_w, in_b):
    """frames: [B, T, L] -> (feats [B, T, N], bottleneck x0 [B, T, Bn])."""
    B, T, L = frames.shape
    N = enc_w.shape[1]
    Bn = in_w.shape[1]
    return pl.pallas_call(
        functools.partial(_enc_stage_kernel, eps=_EPS),
        out_shape=(jax.ShapeDtypeStruct((B, T, N), jnp.float32),
                   jax.ShapeDtypeStruct((B, T, Bn), jnp.float32)),
        grid_spec=pltpu.PrefetchScalarGridSpec(
            num_scalar_prefetch=0,
            grid=(B,),
            in_specs=[
                pl.BlockSpec((None, T, L), lambda b: (b, 0, 0)),
                pl.BlockSpec((L, N), lambda b: (0, 0)),
                pl.BlockSpec((1, N), lambda b: (0, 0)),
                pl.BlockSpec((1, N), lambda b: (0, 0)),
                pl.BlockSpec((N, Bn), lambda b: (0, 0)),
                pl.BlockSpec((1, Bn), lambda b: (0, 0)),
            ],
            out_specs=[
                pl.BlockSpec((None, T, N), lambda b: (b, 0, 0)),
                pl.BlockSpec((None, T, Bn), lambda b: (b, 0, 0)),
            ],
        ),
        compiler_params=pltpu.CompilerParams(
            dimension_semantics=("parallel",)),
    )(frames.astype(jnp.float32), enc_w,
      gn_g.reshape(1, N), gn_b.reshape(1, N),
      in_w, in_b.reshape(1, Bn))


# --------------------------------------------------------------------------
# Kernel B: one whole ConvBlock (non-causal)
# --------------------------------------------------------------------------

def _conv_block_kernel(x_ref, skip_ref, c1w_ref, c1b_ref, a1_ref,
                       g1g_ref, g1b_ref, dww_ref, dwb_ref, a2_ref,
                       g2g_ref, g2b_ref, rsw_ref, rsb_ref,
                       xo_ref, so_ref, hpad_ref, *, dilation, eps):
    T, Bn = x_ref.shape
    H = c1w_ref.shape[1]
    P = dww_ref.shape[0]
    S = so_ref.shape[1]
    pad = (P - 1) * dilation
    pad_l = pad // 2
    pad_r = pad - pad_l
    has_res = rsw_ref.shape[1] != S           # combined weight is [H, Bn+S]
    a1 = a1_ref[...]
    a2 = a2_ref[...]
    x = x_ref[...]

    # 1x1 conv + PReLU.  The reference pads the BLOCK INPUT before the 1x1
    # conv, so padded rows become PReLU(bias) and take part in GN statistics.
    h = jnp.dot(x, c1w_ref[...], preferred_element_type=jnp.float32) + c1b_ref[...]
    h = _prelu(h, a1)
    hpad_ref[pad_l:pad_l + T, :] = h
    pad_row = _prelu(c1b_ref[...], a1)        # what a zero input row maps to
    if pad_l > 0:
        hpad_ref[0:pad_l, :] = jnp.broadcast_to(pad_row, (pad_l, H))
    if pad_r > 0:
        hpad_ref[pad_l + T:pad_l + T + pad_r, :] = jnp.broadcast_to(
            pad_row, (pad_r, H))

    # GroupNorm(num_groups=1) over the padded (T+pad, H) activation.
    h1 = hpad_ref[...]
    mean1 = jnp.mean(h1)
    var1 = jnp.mean(jnp.square(h1 - mean1))
    h1 = (h1 - mean1) * jax.lax.rsqrt(var1 + eps) * g1g_ref[...] + g1b_ref[...]
    hpad_ref[...] = h1

    # Depthwise dilated 'valid' conv + bias + PReLU (static unroll over taps).
    acc = jnp.zeros((T, H), jnp.float32)
    for k in range(P):
        acc = acc + (hpad_ref[k * dilation:k * dilation + T, :]
                     * dww_ref[k:k + 1, :])
    acc = _prelu(acc + dwb_ref[...], a2)

    # GroupNorm(num_groups=1) over (T, H).
    mean2 = jnp.mean(acc)
    var2 = jnp.mean(jnp.square(acc - mean2))
    h2 = (acc - mean2) * jax.lax.rsqrt(var2 + eps) * g2g_ref[...] + g2b_ref[...]

    # Combined residual+skip 1x1 convs (single lane-dense matmul), fused
    # residual add and skip-sum accumulation — nothing leaves VMEM in between.
    rs = jnp.dot(h2, rsw_ref[...], preferred_element_type=jnp.float32) + rsb_ref[...]
    if has_res:
        xo_ref[...] = x + rs[:, :Bn]
        so_ref[...] = skip_ref[...] + rs[:, Bn:]
    else:
        xo_ref[...] = x
        so_ref[...] = skip_ref[...] + rs


def conv_block_forward(blk, x, skip_sum, dilation):
    """x: [B, T, Bn], skip_sum: [B, T, S] -> (x + residual, skip_sum + skip)."""
    B, T, Bn = x.shape
    S = skip_sum.shape[-1]
    H = blk["c1_w"].shape[1]
    P = blk["dw_w"].shape[0]
    C_rs = blk["rs_w"].shape[1]
    T_pad = T + (P - 1) * dilation

    def wspec(r, c):
        return pl.BlockSpec((r, c), lambda b: (0, 0))

    return pl.pallas_call(
        functools.partial(_conv_block_kernel, dilation=dilation, eps=_EPS),
        out_shape=(jax.ShapeDtypeStruct((B, T, Bn), jnp.float32),
                   jax.ShapeDtypeStruct((B, T, S), jnp.float32)),
        grid_spec=pltpu.PrefetchScalarGridSpec(
            num_scalar_prefetch=0,
            grid=(B,),
            in_specs=[
                pl.BlockSpec((None, T, Bn), lambda b: (b, 0, 0)),
                pl.BlockSpec((None, T, S), lambda b: (b, 0, 0)),
                wspec(Bn, H), wspec(1, H), wspec(1, 1),
                wspec(1, H), wspec(1, H),
                wspec(P, H), wspec(1, H), wspec(1, 1),
                wspec(1, H), wspec(1, H),
                wspec(H, C_rs), wspec(1, C_rs),
            ],
            out_specs=[
                pl.BlockSpec((None, T, Bn), lambda b: (b, 0, 0)),
                pl.BlockSpec((None, T, S), lambda b: (b, 0, 0)),
            ],
            scratch_shapes=[pltpu.VMEM((T_pad, H), jnp.float32)],
        ),
        compiler_params=pltpu.CompilerParams(
            dimension_semantics=("parallel",)),
    )(x, skip_sum,
      blk["c1_w"], blk["c1_b"].reshape(1, H), blk["a1"],
      blk["gn1_g"].reshape(1, H), blk["gn1_b"].reshape(1, H),
      blk["dw_w"], blk["dw_b"].reshape(1, H), blk["a2"],
      blk["gn2_g"].reshape(1, H), blk["gn2_b"].reshape(1, H),
      blk["rs_w"], blk["rs_b"].reshape(1, C_rs))


# --------------------------------------------------------------------------
# Kernel C: output PReLU + (adjust) + mask conv + activation + mask*feats
#           + decoder matmul
# --------------------------------------------------------------------------

def _mask_decode_kernel(skip_ref, feats_ref, a_ref, adj_w_ref, adj_b_ref,
                        out_w_ref, dec_w_ref, dec_ref, *, act):
    Bn = out_w_ref.shape[0]
    has_adjust = skip_ref.shape[1] != Bn
    h = _prelu(skip_ref[...], a_ref[...])
    if has_adjust:
        h = (jnp.dot(h, adj_w_ref[...], preferred_element_type=jnp.float32)
             + adj_b_ref[...])
    m = jnp.dot(h, out_w_ref[...], preferred_element_type=jnp.float32)
    if act == "sigmoid":
        m = jax.nn.sigmoid(m)
    else:                                       # "relu"
        m = jnp.maximum(m, 0.0)
    masked = m * feats_ref[...]
    dec_ref[...] = jnp.dot(masked, dec_w_ref[...],
                           preferred_element_type=jnp.float32)


def _row_tiles(M, tm_max=512):
    """Large M-tiles, no explicit pad-copy (boundary block handled by Pallas)."""
    if M <= tm_max:
        return M, 1
    return tm_max, pl.cdiv(M, tm_max)


def mask_decode_stage(skip_sum, feats, mg, dec_w, msk_activate):
    """skip_sum: [B,T,S], feats: [B,T,N] -> decoder frames [B,T,L]."""
    B, T, S = skip_sum.shape
    N = feats.shape[-1]
    Bn = mg["out_conv_w"].shape[0]
    L = dec_w.shape[1]
    M = B * T
    tm, gm = _row_tiles(M)
    dec = pl.pallas_call(
        functools.partial(_mask_decode_kernel, act=msk_activate),
        out_shape=jax.ShapeDtypeStruct((M, L), jnp.float32),
        grid_spec=pltpu.PrefetchScalarGridSpec(
            num_scalar_prefetch=0,
            grid=(gm,),
            in_specs=[
                pl.BlockSpec((tm, S), lambda i: (i, 0)),
                pl.BlockSpec((tm, N), lambda i: (i, 0)),
                pl.BlockSpec((1, 1), lambda i: (0, 0)),
                pl.BlockSpec((S, Bn), lambda i: (0, 0)),
                pl.BlockSpec((1, Bn), lambda i: (0, 0)),
                pl.BlockSpec((Bn, N), lambda i: (0, 0)),
                pl.BlockSpec((N, L), lambda i: (0, 0)),
            ],
            out_specs=pl.BlockSpec((tm, L), lambda i: (i, 0)),
        ),
        compiler_params=pltpu.CompilerParams(
            dimension_semantics=("parallel",)),
    )(skip_sum.reshape(M, S), feats.reshape(M, N), mg["out_prelu_alpha"],
      mg["adj_w"], mg["adj_b"].reshape(1, Bn), mg["out_conv_w"], dec_w)
    return dec.reshape(B, T, L)


# --------------------------------------------------------------------------
# Full forward pass
# --------------------------------------------------------------------------

def conv_tasnet_forward(params, x, cfg):
    """x: [batch, 1, nsample] (PyTorch NCW) -> [batch, 1, nsample]."""
    assert not cfg.get("causal", False)  # TODO(synk): cLN causal path
    L = cfg["L"]
    s = L // 2
    Bsz, ch, nsample = x.shape
    assert ch == 1
    sig = x[:, 0, :].astype(jnp.float32)

    # pad_signal (stride zeros each side + `rest` to a stride multiple),
    # folded together with the encoder Conv1d's padding=stride.
    total = ((nsample - 1) // s + 1) * s
    rest = total + L - s - nsample
    sig_p = jnp.pad(sig, ((0, 0), (2 * s, rest + 2 * s)))
    T_sig = sig_p.shape[1]
    T_f = T_sig // s - 1

    # 50%-overlap framing without a gather: frame[t] = sig_p[t*s : t*s + L].
    chunks = sig_p.reshape(Bsz, T_f + 1, s)
    frames = jnp.concatenate([chunks[:, :T_f], chunks[:, 1:]], axis=-1)

    mg = params["mask_gen"]
    feats, xcur = encoder_and_input_stage(
        frames, params["enc_w"], mg["in_norm_g"], mg["in_norm_b"],
        mg["in_conv_w"], mg["in_conv_b"])

    skip_sum = jnp.zeros((Bsz, T_f, cfg["S"]), jnp.float32)
    X = cfg["X"]
    for idx, blk in enumerate(mg["blocks"]):
        dilation = 2 ** (idx % X)               # static per block
        xcur, skip_sum = conv_block_forward(blk, xcur, skip_sum, dilation)

    dec_frames = mask_decode_stage(skip_sum, feats, mg, params["dec_w"],
                                   cfg["msk_activate"])

    # Decoder ConvTranspose1d == per-frame matmul (kernel C) + 50% overlap-add
    # + padding crop.
    out_len = (T_f - 1) * s + L
    out = jnp.zeros((Bsz, out_len), jnp.float32)
    out = out.at[:, :T_f * s].add(dec_frames[:, :, :s].reshape(Bsz, T_f * s))
    out = out.at[:, s:].add(dec_frames[:, :, s:].reshape(Bsz, T_f * s))
    out = out[:, s:out_len - s]                 # transpose-conv padding crop

    start = s
    end = s + rest
    if end > 0:
        out = out[:, start:-end]
    else:
        out = out[:, start:]
    return out[:, None, :]


# --------------------------------------------------------------------------
# Parameter initialization (mirrors the PyTorch module's parameter set)
# --------------------------------------------------------------------------

def init_params(key, cfg):
    L, N, P = cfg["L"], cfg["N"], cfg["P"]
    B_, S, H, X, R = cfg["B"], cfg["S"], cfg["H"], cfg["X"], cfg["R"]
    cnt = [0]

    def nxt():
        cnt[0] += 1
        return jax.random.fold_in(key, cnt[0])

    def rnd(shape, scale=0.1):
        return (scale * jax.random.normal(nxt(), shape)).astype(jnp.float32)

    def alpha():                                # torch.nn.PReLU() init = 0.25
        return jnp.full((1, 1), 0.25, jnp.float32)

    params = {
        "enc_w": rnd((L, N)),      # torch encoder weight (N, 1, L) transposed
        "dec_w": rnd((N, L)),      # torch decoder weight (N, 1, L)
    }
    blocks = []
    for s_i in range(R):
        for l_i in range(X):
            no_res = (l_i == X - 1 and s_i == R - 1)
            c_rs = S if no_res else (B_ + S)    # residual & skip convs fused
            blocks.append({
                "c1_w": rnd((B_, H)), "c1_b": rnd((H,), 0.05), "a1": alpha(),
                "gn1_g": jnp.ones((H,), jnp.float32) + rnd((H,), 0.01),
                "gn1_b": rnd((H,), 0.01),
                "dw_w": rnd((P, H)), "dw_b": rnd((H,), 0.05), "a2": alpha(),
                "gn2_g": jnp.ones((H,), jnp.float32) + rnd((H,), 0.01),
                "gn2_b": rnd((H,), 0.01),
                "rs_w": rnd((H, c_rs)), "rs_b": rnd((c_rs,), 0.05),
            })
    params["mask_gen"] = {
        "in_norm_g": jnp.ones((N,), jnp.float32),
        "in_norm_b": jnp.zeros((N,), jnp.float32),
        "in_conv_w": rnd((N, B_)), "in_conv_b": rnd((B_,), 0.05),
        "blocks": blocks,
        "out_prelu_alpha": alpha(),
        "adj_w": rnd((S, B_)), "adj_b": rnd((B_,), 0.05),   # used iff S != B_
        "out_conv_w": rnd((B_, N)),             # bias=False per reference
    }
    return params


# --------------------------------------------------------------------------
# main
# --------------------------------------------------------------------------

if __name__ == "__main__":
    cfg = dict(L=16, N=64, P=3, B=32, S=32, H=64, X=2, R=2,
               msk_activate="sigmoid", causal=False)
    key = jax.random.PRNGKey(0)
    params = init_params(key, cfg)
    x = jax.random.normal(jax.random.fold_in(key, 12345), (2, 1, 96),
                          jnp.float32)

    fwd = jax.jit(lambda p, inp: conv_tasnet_forward(p, inp, cfg))
    out = jax.block_until_ready(fwd(params, x))

    assert out.shape == (2, 1, 96), out.shape
    assert jnp.all(jnp.isfinite(out))
    print("KERNEL_OK")
</pallas_src>

<mosaic_0001>
module attributes {stable_mosaic.version = 11 : i64} {
  func.func @_conv_block_kernel(%arg0: i32, %arg1: memref<1x16x32xf32, #tpu.memory_space<vmem>>, %arg2: memref<1x16x32xf32, #tpu.memory_space<vmem>>, %arg3: memref<32x64xf32, #tpu.memory_space<vmem>>, %arg4: memref<1x64xf32, #tpu.memory_space<vmem>>, %arg5: memref<1x1xf32, #tpu.memory_space<vmem>>, %arg6: memref<1x64xf32, #tpu.memory_space<vmem>>, %arg7: memref<1x64xf32, #tpu.memory_space<vmem>>, %arg8: memref<3x64xf32, #tpu.memory_space<vmem>>, %arg9: memref<1x64xf32, #tpu.memory_space<vmem>>, %arg10: memref<1x1xf32, #tpu.memory_space<vmem>>, %arg11: memref<1x64xf32, #tpu.memory_space<vmem>>, %arg12: memref<1x64xf32, #tpu.memory_space<vmem>>, %arg13: memref<64x64xf32, #tpu.memory_space<vmem>>, %arg14: memref<1x64xf32, #tpu.memory_space<vmem>>, %arg15: memref<1x16x32xf32, #tpu.memory_space<vmem>>, %arg16: memref<1x16x32xf32, #tpu.memory_space<vmem>>, %arg17: memref<18x64xf32, #tpu.memory_space<vmem>>) attributes {dimension_semantics = [#tpu.dimension_semantics<parallel>], iteration_bounds = array<i64: 2>, scalar_prefetch = 0 : i64, scratch_operands = 1 : i64, tpu.core_type = #tpu.core_type<tc>, window_params = [{transform_indices = @transform_0, window_bounds = array<i64: 1, 16, 32>}, {transform_indices = @transform_1, window_bounds = array<i64: 1, 16, 32>}, {pipeline_mode = #tpu.pipeline_mode<synchronous>, transform_indices = @transform_2, window_bounds = array<i64: 32, 64>}, {pipeline_mode = #tpu.pipeline_mode<synchronous>, transform_indices = @transform_3, window_bounds = array<i64: 1, 64>}, {pipeline_mode = #tpu.pipeline_mode<synchronous>, transform_indices = @transform_4, window_bounds = array<i64: 1, 1>}, {pipeline_mode = #tpu.pipeline_mode<synchronous>, transform_indices = @transform_5, window_bounds = array<i64: 1, 64>}, {pipeline_mode = #tpu.pipeline_mode<synchronous>, transform_indices = @transform_6, window_bounds = array<i64: 1, 64>}, {pipeline_mode = #tpu.pipeline_mode<synchronous>, transform_indices = @transform_7, window_bounds = array<i64: 3, 64>}, {pipeline_mode = #tpu.pipeline_mode<synchronous>, transform_indices = @transform_8, window_bounds = array<i64: 1, 64>}, {pipeline_mode = #tpu.pipeline_mode<synchronous>, transform_indices = @transform_9, window_bounds = array<i64: 1, 1>}, {pipeline_mode = #tpu.pipeline_mode<synchronous>, transform_indices = @transform_10, window_bounds = array<i64: 1, 64>}, {pipeline_mode = #tpu.pipeline_mode<synchronous>, transform_indices = @transform_11, window_bounds = array<i64: 1, 64>}, {pipeline_mode = #tpu.pipeline_mode<synchronous>, transform_indices = @transform_12, window_bounds = array<i64: 64, 64>}, {pipeline_mode = #tpu.pipeline_mode<synchronous>, transform_indices = @transform_13, window_bounds = array<i64: 1, 64>}, {transform_indices = @transform_14, window_bounds = array<i64: 1, 16, 32>}, {transform_indices = @transform_15, window_bounds = array<i64: 1, 16, 32>}]} {
    %c0 = arith.constant 0 : index
    %c0_0 = arith.constant 0 : index
    %0 = vector.load %arg5[%c0, %c0_0] : memref<1x1xf32, #tpu.memory_space<vmem>>, vector<1x1xf32>
    %c0_1 = arith.constant 0 : index
    %c0_2 = arith.constant 0 : index
    %1 = vector.load %arg10[%c0_1, %c0_2] : memref<1x1xf32, #tpu.memory_space<vmem>>, vector<1x1xf32>
    %c0_3 = arith.constant 0 : index
    %c0_4 = arith.constant 0 : index
    %c0_5 = arith.constant 0 : index
    %2 = vector.load %arg1[%c0_3, %c0_4, %c0_5] : memref<1x16x32xf32, #tpu.memory_space<vmem>>, vector<1x16x32xf32>
    %3 = vector.shape_cast %2 : vector<1x16x32xf32> to vector<16x32xf32>
    %c0_6 = arith.constant 0 : index
    %c0_7 = arith.constant 0 : index
    %4 = vector.load %arg3[%c0_6, %c0_7] : memref<32x64xf32, #tpu.memory_space<vmem>>, vector<32x64xf32>
    %cst = arith.constant dense<0.000000e+00> : vector<16x64xf32>
    %5 = tpu.matmul %3, %4, %cst {dimension_numbers = #tpu.dot_dimension_numbers<[1], [0], [0], [1], [0, 0, 1, 1], [], []>} : vector<16x32xf32>, vector<32x64xf32>, vector<16x64xf32> -> vector<16x64xf32>
    %c0_8 = arith.constant 0 : index
    %c0_9 = arith.constant 0 : index
    %6 = vector.load %arg4[%c0_8, %c0_9] : memref<1x64xf32, #tpu.memory_space<vmem>>, vector<1x64xf32>
    %7 = vector.broadcast %6 : vector<1x64xf32> to vector<16x64xf32>
    %8 = arith.addf %5, %7 : vector<16x64xf32>
    %cst_10 = arith.constant 0.000000e+00 : f32
    %9 = vector.broadcast %cst_10 : f32 to vector<16x64xf32>
    %10 = arith.cmpf oge, %8, %9 : vector<16x64xf32>
    %11 = vector.broadcast %0 : vector<1x1xf32> to vector<16x64xf32>
    %12 = arith.mulf %11, %8 : vector<16x64xf32>
    %13 = arith.select %10, %8, %12 : vector<16x64xi1>, vector<16x64xf32>
    %c1 = arith.constant 1 : index
    %c0_11 = arith.constant 0 : index
    %14 = vector.load %arg17[%c1, %c0_11] : memref<18x64xf32, #tpu.memory_space<vmem>>, vector<16x64xf32>
    tpu.vector_store %arg17[%c1, %c0_11], %13 {strides = array<i32>} : memref<18x64xf32, #tpu.memory_space<vmem>>, vector<16x64xf32>,
    %c0_12 = arith.constant 0 : index
    %c0_13 = arith.constant 0 : index
    %15 = vector.load %arg4[%c0_12, %c0_13] : memref<1x64xf32, #tpu.memory_space<vmem>>, vector<1x64xf32>
    %cst_14 = arith.constant 0.000000e+00 : f32
    %16 = vector.broadcast %cst_14 : f32 to vector<1x64xf32>
    %17 = arith.cmpf oge, %15, %16 : vector<1x64xf32>
    %18 = vector.broadcast %0 : vector<1x1xf32> to vector<1x64xf32>
    %19 = arith.mulf %18, %15 : vector<1x64xf32>
    %20 = arith.select %17, %15, %19 : vector<1x64xi1>, vector<1x64xf32>
    %c0_15 = arith.constant 0 : index
    %c0_16 = arith.constant 0 : index
    %21 = vector.load %arg17[%c0_15, %c0_16] : memref<18x64xf32, #tpu.memory_space<vmem>>, vector<1x64xf32>
    tpu.vector_store %arg17[%c0_15, %c0_16], %20 {strides = array<i32>} : memref<18x64xf32, #tpu.memory_space<vmem>>, vector<1x64xf32>,
    %c17 = arith.constant 17 : index
    %c0_17 = arith.constant 0 : index
    %22 = vector.load %arg17[%c17, %c0_17] : memref<18x64xf32, #tpu.memory_space<vmem>>, vector<1x64xf32>
    tpu.vector_store %arg17[%c17, %c0_17], %20 {strides = array<i32>} : memref<18x64xf32, #tpu.memory_space<vmem>>, vector<1x64xf32>,
    %c0_18 = arith.constant 0 : index
    %c0_19 = arith.constant 0 : index
    %23 = vector.load %arg17[%c0_18, %c0_19] : memref<18x64xf32, #tpu.memory_space<vmem>>, vector<18x64xf32>
    %24 = vector.shape_cast %23 : vector<18x64xf32> to vector<1x18x64xf32>
    %cst_20 = arith.constant dense<0.000000e+00> : vector<1xf32>
    %25 = vector.multi_reduction <add>, %24, %cst_20 [1, 2] : vector<1x18x64xf32> to vector<1xf32>
    %26 = vector.shape_cast %25 : vector<1xf32> to vector<1x1x1xf32>
    %27 = vector.extract %26[0, 0, 0] : f32 from vector<1x1x1xf32>
    %cst_21 = arith.constant 1.152000e+03 : f32
    %28 = arith.divf %27, %cst_21 : f32
    %29 = vector.broadcast %28 : f32 to vector<18x64xf32>
    %30 = arith.subf %23, %29 : vector<18x64xf32>
    %31 = arith.mulf %30, %30 : vector<18x64xf32>
    %32 = vector.shape_cast %31 : vector<18x64xf32> to vector<1x18x64xf32>
    %cst_22 = arith.constant dense<0.000000e+00> : vector<1xf32>
    %33 = vector.multi_reduction <add>, %32, %cst_22 [1, 2] : vector<1x18x64xf32> to vector<1xf32>
    %34 = vector.shape_cast %33 : vector<1xf32> to vector<1x1x1xf32>
    %35 = vector.extract %34[0, 0, 0] : f32 from vector<1x1x1xf32>
    %cst_23 = arith.constant 1.152000e+03 : f32
    %36 = arith.divf %35, %cst_23 : f32
    %37 = vector.broadcast %28 : f32 to vector<18x64xf32>
    %38 = arith.subf %23, %37 : vector<18x64xf32>
    %cst_24 = arith.constant 9.99999993E-9 : f32
    %39 = arith.addf %36, %cst_24 : f32
    %40 = math.rsqrt %39 : f32
    %41 = vector.broadcast %40 : f32 to vector<18x64xf32>
    %42 = arith.mulf %38, %41 : vector<18x64xf32>
    %c0_25 = arith.constant 0 : index
    %c0_26 = arith.constant 0 : index
    %43 = vector.load %arg6[%c0_25, %c0_26] : memref<1x64xf32, #tpu.memory_space<vmem>>, vector<1x64xf32>
    %44 = vector.broadcast %43 : vector<1x64xf32> to vector<18x64xf32>
    %45 = arith.mulf %42, %44 : vector<18x64xf32>
    %c0_27 = arith.constant 0 : index
    %c0_28 = arith.constant 0 : index
    %46 = vector.load %arg7[%c0_27, %c0_28] : memref<1x64xf32, #tpu.memory_space<vmem>>, vector<1x64xf32>
    %47 = vector.broadcast %46 : vector<1x64xf32> to vector<18x64xf32>
    %48 = arith.addf %45, %47 : vector<18x64xf32>
    %c0_29 = arith.constant 0 : index
    %c0_30 = arith.constant 0 : index
    %49 = vector.load %arg17[%c0_29, %c0_30] : memref<18x64xf32, #tpu.memory_space<vmem>>, vector<18x64xf32>
    tpu.vector_store %arg17[%c0_29, %c0_30], %48 {strides = array<i32>} : memref<18x64xf32, #tpu.memory_space<vmem>>, vector<18x64xf32>,
    %cst_31 = arith.constant 0.000000e+00 : f32
    %50 = vector.broadcast %cst_31 : f32 to vector<16x64xf32>
    %c0_32 = arith.constant 0 : index
    %c0_33 = arith.constant 0 : index
    %51 = vector.load %arg17[%c0_32, %c0_33] : memref<18x64xf32, #tpu.memory_space<vmem>>, vector<16x64xf32>
    %c0_34 = arith.constant 0 : index
    %c0_35 = arith.constant 0 : index
    %52 = vector.load %arg8[%c0_34, %c0_35] : memref<3x64xf32, #tpu.memory_space<vmem>>, vector<1x64xf32>
    %53 = vector.broadcast %52 : vector<1x64xf32> to vector<16x64xf32>
    %54 = arith.mulf %51, %53 : vector<16x64xf32>
    %55 = arith.addf %50, %54 : vector<16x64xf32>
    %c1_36 = arith.constant 1 : index
    %c0_37 = arith.constant 0 : index
    %56 = vector.load %arg17[%c1_36, %c0_37] : memref<18x64xf32, #tpu.memory_space<vmem>>, vector<16x64xf32>
    %c1_38 = arith.constant 1 : index
    %c0_39 = arith.constant 0 : index
    %57 = vector.load %arg8[%c1_38, %c0_39] : memref<3x64xf32, #tpu.memory_space<vmem>>, vector<1x64xf32>
    %58 = vector.broadcast %57 : vector<1x64xf32> to vector<16x64xf32>
    %59 = arith.mulf %56, %58 : vector<16x64xf32>
    %60 = arith.addf %55, %59 : vector<16x64xf32>
    %c2 = arith.constant 2 : index
    %c0_40 = arith.constant 0 : index
    %61 = vector.load %arg17[%c2, %c0_40] : memref<18x64xf32, #tpu.memory_space<vmem>>, vector<16x64xf32>
    %c2_41 = arith.constant 2 : index
    %c0_42 = arith.constant 0 : index
    %62 = vector.load %arg8[%c2_41, %c0_42] : memref<3x64xf32, #tpu.memory_space<vmem>>, vector<1x64xf32>
    %63 = vector.broadcast %62 : vector<1x64xf32> to vector<16x64xf32>
    %64 = arith.mulf %61, %63 : vector<16x64xf32>
    %65 = arith.addf %60, %64 : vector<16x64xf32>
    %c0_43 = arith.constant 0 : index
    %c0_44 = arith.constant 0 : index
    %66 = vector.load %arg9[%c0_43, %c0_44] : memref<1x64xf32, #tpu.memory_space<vmem>>, vector<1x64xf32>
    %67 = vector.broadcast %66 : vector<1x64xf32> to vector<16x64xf32>
    %68 = arith.addf %65, %67 : vector<16x64xf32>
    %cst_45 = arith.constant 0.000000e+00 : f32
    %69 = vector.broadcast %cst_45 : f32 to vector<16x64xf32>
    %70 = arith.cmpf oge, %68, %69 : vector<16x64xf32>
    %71 = vector.broadcast %1 : vector<1x1xf32> to vector<16x64xf32>
    %72 = arith.mulf %71, %68 : vector<16x64xf32>
    %73 = arith.select %70, %68, %72 : vector<16x64xi1>, vector<16x64xf32>
    %74 = vector.shape_cast %73 : vector<16x64xf32> to vector<1x16x64xf32>
    %cst_46 = arith.constant dense<0.000000e+00> : vector<1xf32>
    %75 = vector.multi_reduction <add>, %74, %cst_46 [1, 2] : vector<1x16x64xf32> to vector<1xf32>
    %76 = vector.shape_cast %75 : vector<1xf32> to vector<1x1x1xf32>
    %77 = vector.extract %76[0, 0, 0] : f32 from vector<1x1x1xf32>
    %cst_47 = arith.constant 1.024000e+03 : f32
    %78 = arith.divf %77, %cst_47 : f32
    %79 = vector.broadcast %78 : f32 to vector<16x64xf32>
    %80 = arith.subf %73, %79 : vector<16x64xf32>
    %81 = arith.mulf %80, %80 : vector<16x64xf32>
    %82 = vector.shape_cast %81 : vector<16x64xf32> to vector<1x16x64xf32>
    %cst_48 = arith.constant dense<0.000000e+00> : vector<1xf32>
    %83 = vector.multi_reduction <add>, %82, %cst_48 [1, 2] : vector<1x16x64xf32> to vector<1xf32>
    %84 = vector.shape_cast %83 : vector<1xf32> to vector<1x1x1xf32>
    %85 = vector.extract %84[0, 0, 0] : f32 from vector<1x1x1xf32>
    %cst_49 = arith.constant 1.024000e+03 : f32
    %86 = arith.divf %85, %cst_49 : f32
    %87 = vector.broadcast %78 : f32 to vector<16x64xf32>
    %88 = arith.subf %73, %87 : vector<16x64xf32>
    %cst_50 = arith.constant 9.99999993E-9 : f32
    %89 = arith.addf %86, %cst_50 : f32
    %90 = math.rsqrt %89 : f32
    %91 = vector.broadcast %90 : f32 to vector<16x64xf32>
    %92 = arith.mulf %88, %91 : vector<16x64xf32>
    %c0_51 = arith.constant 0 : index
    %c0_52 = arith.constant 0 : index
    %93 = vector.load %arg11[%c0_51, %c0_52] : memref<1x64xf32, #tpu.memory_space<vmem>>, vector<1x64xf32>
    %94 = vector.broadcast %93 : vector<1x64xf32> to vector<16x64xf32>
    %95 = arith.mulf %92, %94 : vector<16x64xf32>
    %c0_53 = arith.constant 0 : index
    %c0_54 = arith.constant 0 : index
    %96 = vector.load %arg12[%c0_53, %c0_54] : memref<1x64xf32, #tpu.memory_space<vmem>>, vector<1x64xf32>
    %97 = vector.broadcast %96 : vector<1x64xf32> to vector<16x64xf32>
    %98 = arith.addf %95, %97 : vector<16x64xf32>
    %c0_55 = arith.constant 0 : index
    %c0_56 = arith.constant 0 : index
    %99 = vector.load %arg13[%c0_55, %c0_56] : memref<64x64xf32, #tpu.memory_space<vmem>>, vector<64x64xf32>
    %cst_57 = arith.constant dense<0.000000e+00> : vector<16x64xf32>
    %100 = tpu.matmul %98, %99, %cst_57 {dimension_numbers = #tpu.dot_dimension_numbers<[1], [0], [0], [1], [0, 0, 1, 1], [], []>} : vector<16x64xf32>, vector<64x64xf32>, vector<16x64xf32> -> vector<16x64xf32>
    %c0_58 = arith.constant 0 : index
    %c0_59 = arith.constant 0 : index
    %101 = vector.load %arg14[%c0_58, %c0_59] : memref<1x64xf32, #tpu.memory_space<vmem>>, vector<1x64xf32>
    %102 = vector.broadcast %101 : vector<1x64xf32> to vector<16x64xf32>
    %103 = arith.addf %100, %102 : vector<16x64xf32>
    %104 = vector.extract_strided_slice %103 {offsets = [0, 0], sizes = [16, 32], strides = [1, 1]} : vector<16x64xf32> to vector<16x32xf32>
    %105 = arith.addf %3, %104 : vector<16x32xf32>
    %c0_60 = arith.constant 0 : index
    %c0_61 = arith.constant 0 : index
    %c0_62 = arith.constant 0 : index
    %106 = vector.load %arg15[%c0_60, %c0_61, %c0_62] : memref<1x16x32xf32, #tpu.memory_space<vmem>>, vector<1x16x32xf32>
    %107 = vector.shape_cast %106 : vector<1x16x32xf32> to vector<16x32xf32>
    %108 = vector.shape_cast %105 : vector<16x32xf32> to vector<1x16x32xf32>
    tpu.vector_store %arg15[%c0_60, %c0_61, %c0_62], %108 {strides = array<i32>} : memref<1x16x32xf32, #tpu.memory_space<vmem>>, vector<1x16x32xf32>,
    %c0_63 = arith.constant 0 : index
    %c0_64 = arith.constant 0 : index
    %c0_65 = arith.constant 0 : index
    %109 = vector.load %arg2[%c0_63, %c0_64, %c0_65] : memref<1x16x32xf32, #tpu.memory_space<vmem>>, vector<1x16x32xf32>
    %110 = vector.shape_cast %109 : vector<1x16x32xf32> to vector<16x32xf32>
    %111 = vector.extract_strided_slice %103 {offsets = [0, 32], sizes = [16, 32], strides = [1, 1]} : vector<16x64xf32> to vector<16x32xf32>
    %112 = arith.addf %110, %111 : vector<16x32xf32>
    %c0_66 = arith.constant 0 : index
    %c0_67 = arith.constant 0 : index
    %c0_68 = arith.constant 0 : index
    %113 = vector.load %arg16[%c0_66, %c0_67, %c0_68] : memref<1x16x32xf32, #tpu.memory_space<vmem>>, vector<1x16x32xf32>
    %114 = vector.shape_cast %113 : vector<1x16x32xf32> to vector<16x32xf32>
    %115 = vector.shape_cast %112 : vector<16x32xf32> to vector<1x16x32xf32>
    tpu.vector_store %arg16[%c0_66, %c0_67, %c0_68], %115 {strides = array<i32>} : memref<1x16x32xf32, #tpu.memory_space<vmem>>, vector<1x16x32xf32>,
    return
  }
  func.func @transform_0(%arg0: i32) -> (i32, i32, i32) {
    %c0_i32 = arith.constant 0 : i32
    %c0_i32_0 = arith.constant 0 : i32
    %c0_i32_1 = arith.constant 0 : i32
    return %arg0, %c0_i32, %c0_i32_0 : i32, i32, i32
  }
  func.func @transform_1(%arg0: i32) -> (i32, i32, i32) {
    %c0_i32 = arith.constant 0 : i32
    %c0_i32_0 = arith.constant 0 : i32
    %c0_i32_1 = arith.constant 0 : i32
    return %arg0, %c0_i32, %c0_i32_0 : i32, i32, i32
  }
  func.func @transform_2(%arg0: i32) -> (i32, i32) {
    %c0_i32 = arith.constant 0 : i32
    %c0_i32_0 = arith.constant 0 : i32
    %c0_i32_1 = arith.constant 0 : i32
    return %c0_i32, %c0_i32_0 : i32, i32
  }
  func.func @transform_3(%arg0: i32) -> (i32, i32) {
    %c0_i32 = arith.constant 0 : i32
    %c0_i32_0 = arith.constant 0 : i32
    %c0_i32_1 = arith.constant 0 : i32
    return %c0_i32, %c0_i32_0 : i32, i32
  }
  func.func @transform_4(%arg0: i32) -> (i32, i32) {
    %c0_i32 = arith.constant 0 : i32
    %c0_i32_0 = arith.constant 0 : i32
    %c0_i32_1 = arith.constant 0 : i32
    return %c0_i32, %c0_i32_0 : i32, i32
  }
  func.func @transform_5(%arg0: i32) -> (i32, i32) {
    %c0_i32 = arith.constant 0 : i32
    %c0_i32_0 = arith.constant 0 : i32
    %c0_i32_1 = arith.constant 0 : i32
    return %c0_i32, %c0_i32_0 : i32, i32
  }
  func.func @transform_6(%arg0: i32) -> (i32, i32) {
    %c0_i32 = arith.constant 0 : i32
    %c0_i32_0 = arith.constant 0 : i32
    %c0_i32_1 = arith.constant 0 : i32
    return %c0_i32, %c0_i32_0 : i32, i32
  }
  func.func @transform_7(%arg0: i32) -> (i32, i32) {
    %c0_i32 = arith.constant 0 : i32
    %c0_i32_0 = arith.constant 0 : i32
    %c0_i32_1 = arith.constant 0 : i32
    return %c0_i32, %c0_i32_0 : i32, i32
  }
  func.func @transform_8(%arg0: i32) -> (i32, i32) {
    %c0_i32 = arith.constant 0 : i32
    %c0_i32_0 = arith.constant 0 : i32
    %c0_i32_1 = arith.constant 0 : i32
    return %c0_i32, %c0_i32_0 : i32, i32
  }
  func.func @transform_9(%arg0: i32) -> (i32, i32) {
    %c0_i32 = arith.constant 0 : i32
    %c0_i32_0 = arith.constant 0 : i32
    %c0_i32_1 = arith.constant 0 : i32
    return %c0_i32, %c0_i32_0 : i32, i32
  }
  func.func @transform_10(%arg0: i32) -> (i32, i32) {
    %c0_i32 = arith.constant 0 : i32
    %c0_i32_0 = arith.constant 0 : i32
    %c0_i32_1 = arith.constant 0 : i32
    return %c0_i32, %c0_i32_0 : i32, i32
  }
  func.func @transform_11(%arg0: i32) -> (i32, i32) {
    %c0_i32 = arith.constant 0 : i32
    %c0_i32_0 = arith.constant 0 : i32
    %c0_i32_1 = arith.constant 0 : i32
    return %c0_i32, %c0_i32_0 : i32, i32
  }
  func.func @transform_12(%arg0: i32) -> (i32, i32) {
    %c0_i32 = arith.constant 0 : i32
    %c0_i32_0 = arith.constant 0 : i32
    %c0_i32_1 = arith.constant 0 : i32
    return %c0_i32, %c0_i32_0 : i32, i32
  }
  func.func @transform_13(%arg0: i32) -> (i32, i32) {
    %c0_i32 = arith.constant 0 : i32
    %c0_i32_0 = arith.constant 0 : i32
    %c0_i32_1 = arith.constant 0 : i32
    return %c0_i32, %c0_i32_0 : i32, i32
  }
  func.func @transform_14(%arg0: i32) -> (i32, i32, i32) {
    %c0_i32 = arith.constant 0 : i32
    %c0_i32_0 = arith.constant 0 : i32
    %c0_i32_1 = arith.constant 0 : i32
    return %arg0, %c0_i32, %c0_i32_0 : i32, i32, i32
  }
  func.func @transform_15(%arg0: i32) -> (i32, i32, i32) {
    %c0_i32 = arith.constant 0 : i32
    %c0_i32_0 = arith.constant 0 : i32
    %c0_i32_1 = arith.constant 0 : i32
    return %arg0, %c0_i32, %c0_i32_0 : i32, i32, i32
  }
}

module attributes {stable_mosaic.version = 11 : i64} {
  func.func @_enc_stage_kernel(%arg0: i32, %arg1: memref<1x16x16xf32, #tpu.memory_space<vmem>>, %arg2: memref<16x64xf32, #tpu.memory_space<vmem>>, %arg3: memref<1x64xf32, #tpu.memory_space<vmem>>, %arg4: memref<1x64xf32, #tpu.memory_space<vmem>>, %arg5: memref<64x32xf32, #tpu.memory_space<vmem>>, %arg6: memref<1x32xf32, #tpu.memory_space<vmem>>, %arg7: memref<1x16x64xf32, #tpu.memory_space<vmem>>, %arg8: memref<1x16x32xf32, #tpu.memory_space<vmem>>) attributes {dimension_semantics = [#tpu.dimension_semantics<parallel>], iteration_bounds = array<i64: 2>, scalar_prefetch = 0 : i64, scratch_operands = 0 : i64, tpu.core_type = #tpu.core_type<tc>, window_params = [{transform_indices = @transform_0, window_bounds = array<i64: 1, 16, 16>}, {pipeline_mode = #tpu.pipeline_mode<synchronous>, transform_indices = @transform_1, window_bounds = array<i64: 16, 64>}, {pipeline_mode = #tpu.pipeline_mode<synchronous>, transform_indices = @transform_2, window_bounds = array<i64: 1, 64>}, {pipeline_mode = #tpu.pipeline_mode<synchronous>, transform_indices = @transform_3, window_bounds = array<i64: 1, 64>}, {pipeline_mode = #tpu.pipeline_mode<synchronous>, transform_indices = @transform_4, window_bounds = array<i64: 64, 32>}, {pipeline_mode = #tpu.pipeline_mode<synchronous>, transform_indices = @transform_5, window_bounds = array<i64: 1, 32>}, {transform_indices = @transform_6, window_bounds = array<i64: 1, 16, 64>}, {transform_indices = @transform_7, window_bounds = array<i64: 1, 16, 32>}]} {
    %c0 = arith.constant 0 : index
    %c0_0 = arith.constant 0 : index
    %c0_1 = arith.constant 0 : index
    %0 = vector.load %arg1[%c0, %c0_0, %c0_1] : memref<1x16x16xf32, #tpu.memory_space<vmem>>, vector<1x16x16xf32>
    %1 = vector.shape_cast %0 : vector<1x16x16xf32> to vector<16x16xf32>
    %c0_2 = arith.constant 0 : index
    %c0_3 = arith.constant 0 : index
    %2 = vector.load %arg2[%c0_2, %c0_3] : memref<16x64xf32, #tpu.memory_space<vmem>>, vector<16x64xf32>
    %cst = arith.constant dense<0.000000e+00> : vector<16x64xf32>
    %3 = tpu.matmul %1, %2, %cst {dimension_numbers = #tpu.dot_dimension_numbers<[1], [0], [0], [1], [0, 0, 1, 1], [], []>} : vector<16x16xf32>, vector<16x64xf32>, vector<16x64xf32> -> vector<16x64xf32>
    %c0_4 = arith.constant 0 : index
    %c0_5 = arith.constant 0 : index
    %c0_6 = arith.constant 0 : index
    %4 = vector.load %arg7[%c0_4, %c0_5, %c0_6] : memref<1x16x64xf32, #tpu.memory_space<vmem>>, vector<1x16x64xf32>
    %5 = vector.shape_cast %4 : vector<1x16x64xf32> to vector<16x64xf32>
    %6 = vector.shape_cast %3 : vector<16x64xf32> to vector<1x16x64xf32>
    tpu.vector_store %arg7[%c0_4, %c0_5, %c0_6], %6 {strides = array<i32>} : memref<1x16x64xf32, #tpu.memory_space<vmem>>, vector<1x16x64xf32>,
    %7 = vector.shape_cast %3 : vector<16x64xf32> to vector<1x16x64xf32>
    %cst_7 = arith.constant dense<0.000000e+00> : vector<1xf32>
    %8 = vector.multi_reduction <add>, %7, %cst_7 [1, 2] : vector<1x16x64xf32> to vector<1xf32>
    %9 = vector.shape_cast %8 : vector<1xf32> to vector<1x1x1xf32>
    %10 = vector.extract %9[0, 0, 0] : f32 from vector<1x1x1xf32>
    %cst_8 = arith.constant 1.024000e+03 : f32
    %11 = arith.divf %10, %cst_8 : f32
    %12 = vector.broadcast %11 : f32 to vector<16x64xf32>
    %13 = arith.subf %3, %12 : vector<16x64xf32>
    %14 = arith.mulf %13, %13 : vector<16x64xf32>
    %15 = vector.shape_cast %14 : vector<16x64xf32> to vector<1x16x64xf32>
    %cst_9 = arith.constant dense<0.000000e+00> : vector<1xf32>
    %16 = vector.multi_reduction <add>, %15, %cst_9 [1, 2] : vector<1x16x64xf32> to vector<1xf32>
    %17 = vector.shape_cast %16 : vector<1xf32> to vector<1x1x1xf32>
    %18 = vector.extract %17[0, 0, 0] : f32 from vector<1x1x1xf32>
    %cst_10 = arith.constant 1.024000e+03 : f32
    %19 = arith.divf %18, %cst_10 : f32
    %20 = vector.broadcast %11 : f32 to vector<16x64xf32>
    %21 = arith.subf %3, %20 : vector<16x64xf32>
    %cst_11 = arith.constant 9.99999993E-9 : f32
    %22 = arith.addf %19, %cst_11 : f32
    %23 = math.rsqrt %22 : f32
    %24 = vector.broadcast %23 : f32 to vector<16x64xf32>
    %25 = arith.mulf %21, %24 : vector<16x64xf32>
    %c0_12 = arith.constant 0 : index
    %c0_13 = arith.constant 0 : index
    %26 = vector.load %arg3[%c0_12, %c0_13] : memref<1x64xf32, #tpu.memory_space<vmem>>, vector<1x64xf32>
    %27 = vector.broadcast %26 : vector<1x64xf32> to vector<16x64xf32>
    %28 = arith.mulf %25, %27 : vector<16x64xf32>
    %c0_14 = arith.constant 0 : index
    %c0_15 = arith.constant 0 : index
    %29 = vector.load %arg4[%c0_14, %c0_15] : memref<1x64xf32, #tpu.memory_space<vmem>>, vector<1x64xf32>
    %30 = vector.broadcast %29 : vector<1x64xf32> to vector<16x64xf32>
    %31 = arith.addf %28, %30 : vector<16x64xf32>
    %c0_16 = arith.constant 0 : index
    %c0_17 = arith.constant 0 : index
    %32 = vector.load %arg5[%c0_16, %c0_17] : memref<64x32xf32, #tpu.memory_space<vmem>>, vector<64x32xf32>
    %cst_18 = arith.constant dense<0.000000e+00> : vector<16x32xf32>
    %33 = tpu.matmul %31, %32, %cst_18 {dimension_numbers = #tpu.dot_dimension_numbers<[1], [0], [0], [1], [0, 0, 1, 1], [], []>} : vector<16x64xf32>, vector<64x32xf32>, vector<16x32xf32> -> vector<16x32xf32>
    %c0_19 = arith.constant 0 : index
    %c0_20 = arith.constant 0 : index
    %34 = vector.load %arg6[%c0_19, %c0_20] : memref<1x32xf32, #tpu.memory_space<vmem>>, vector<1x32xf32>
    %35 = vector.broadcast %34 : vector<1x32xf32> to vector<16x32xf32>
    %36 = arith.addf %33, %35 : vector<16x32xf32>
    %c0_21 = arith.constant 0 : index
    %c0_22 = arith.constant 0 : index
    %c0_23 = arith.constant 0 : index
    %37 = vector.load %arg8[%c0_21, %c0_22, %c0_23] : memref<1x16x32xf32, #tpu.memory_space<vmem>>, vector<1x16x32xf32>
    %38 = vector.shape_cast %37 : vector<1x16x32xf32> to vector<16x32xf32>
    %39 = vector.shape_cast %36 : vector<16x32xf32> to vector<1x16x32xf32>
    tpu.vector_store %arg8[%c0_21, %c0_22, %c0_23], %39 {strides = array<i32>} : memref<1x16x32xf32, #tpu.memory_space<vmem>>, vector<1x16x32xf32>,
    return
  }
  func.func @transform_0(%arg0: i32) -> (i32, i32, i32) {
    %c0_i32 = arith.constant 0 : i32
    %c0_i32_0 = arith.constant 0 : i32
    %c0_i32_1 = arith.constant 0 : i32
    return %arg0, %c0_i32, %c0_i32_0 : i32, i32, i32
  }
  func.func @transform_1(%arg0: i32) -> (i32, i32) {
    %c0_i32 = arith.constant 0 : i32
    %c0_i32_0 = arith.constant 0 : i32
    %c0_i32_1 = arith.constant 0 : i32
    return %c0_i32, %c0_i32_0 : i32, i32
  }
  func.func @transform_2(%arg0: i32) -> (i32, i32) {
    %c0_i32 = arith.constant 0 : i32
    %c0_i32_0 = arith.constant 0 : i32
    %c0_i32_1 = arith.constant 0 : i32
    return %c0_i32, %c0_i32_0 : i32, i32
  }
  func.func @transform_3(%arg0: i32) -> (i32, i32) {
    %c0_i32 = arith.constant 0 : i32
    %c0_i32_0 = arith.constant 0 : i32
    %c0_i32_1 = arith.constant 0 : i32
    return %c0_i32, %c0_i32_0 : i32, i32
  }
  func.func @transform_4(%arg0: i32) -> (i32, i32) {
    %c0_i32 = arith.constant 0 : i32
    %c0_i32_0 = arith.constant 0 : i32
    %c0_i32_1 = arith.constant 0 : i32
    return %c0_i32, %c0_i32_0 : i32, i32
  }
  func.func @transform_5(%arg0: i32) -> (i32, i32) {
    %c0_i32 = arith.constant 0 : i32
    %c0_i32_0 = arith.constant 0 : i32
    %c0_i32_1 = arith.constant 0 : i32
    return %c0_i32, %c0_i32_0 : i32, i32
  }
  func.func @transform_6(%arg0: i32) -> (i32, i32, i32) {
    %c0_i32 = arith.constant 0 : i32
    %c0_i32_0 = arith.constant 0 : i32
    %c0_i32_1 = arith.constant 0 : i32
    return %arg0, %c0_i32, %c0_i32_0 : i32, i32, i32
  }
  func.func @transform_7(%arg0: i32) -> (i32, i32, i32) {
    %c0_i32 = arith.constant 0 : i32
    %c0_i32_0 = arith.constant 0 : i32
    %c0_i32_1 = arith.constant 0 : i32
    return %arg0, %c0_i32, %c0_i32_0 : i32, i32, i32
  }
}

module attributes {stable_mosaic.version = 11 : i64} {
  func.func @_conv_block_kernel(%arg0: i32, %arg1: memref<1x16x32xf32, #tpu.memory_space<vmem>>, %arg2: memref<1x16x32xf32, #tpu.memory_space<vmem>>, %arg3: memref<32x64xf32, #tpu.memory_space<vmem>>, %arg4: memref<1x64xf32, #tpu.memory_space<vmem>>, %arg5: memref<1x1xf32, #tpu.memory_space<vmem>>, %arg6: memref<1x64xf32, #tpu.memory_space<vmem>>, %arg7: memref<1x64xf32, #tpu.memory_space<vmem>>, %arg8: memref<3x64xf32, #tpu.memory_space<vmem>>, %arg9: memref<1x64xf32, #tpu.memory_space<vmem>>, %arg10: memref<1x1xf32, #tpu.memory_space<vmem>>, %arg11: memref<1x64xf32, #tpu.memory_space<vmem>>, %arg12: memref<1x64xf32, #tpu.memory_space<vmem>>, %arg13: memref<64x64xf32, #tpu.memory_space<vmem>>, %arg14: memref<1x64xf32, #tpu.memory_space<vmem>>, %arg15: memref<1x16x32xf32, #tpu.memory_space<vmem>>, %arg16: memref<1x16x32xf32, #tpu.memory_space<vmem>>, %arg17: memref<20x64xf32, #tpu.memory_space<vmem>>) attributes {dimension_semantics = [#tpu.dimension_semantics<parallel>], iteration_bounds = array<i64: 2>, scalar_prefetch = 0 : i64, scratch_operands = 1 : i64, tpu.core_type = #tpu.core_type<tc>, window_params = [{transform_indices = @transform_0, window_bounds = array<i64: 1, 16, 32>}, {transform_indices = @transform_1, window_bounds = array<i64: 1, 16, 32>}, {pipeline_mode = #tpu.pipeline_mode<synchronous>, transform_indices = @transform_2, window_bounds = array<i64: 32, 64>}, {pipeline_mode = #tpu.pipeline_mode<synchronous>, transform_indices = @transform_3, window_bounds = array<i64: 1, 64>}, {pipeline_mode = #tpu.pipeline_mode<synchronous>, transform_indices = @transform_4, window_bounds = array<i64: 1, 1>}, {pipeline_mode = #tpu.pipeline_mode<synchronous>, transform_indices = @transform_5, window_bounds = array<i64: 1, 64>}, {pipeline_mode = #tpu.pipeline_mode<synchronous>, transform_indices = @transform_6, window_bounds = array<i64: 1, 64>}, {pipeline_mode = #tpu.pipeline_mode<synchronous>, transform_indices = @transform_7, window_bounds = array<i64: 3, 64>}, {pipeline_mode = #tpu.pipeline_mode<synchronous>, transform_indices = @transform_8, window_bounds = array<i64: 1, 64>}, {pipeline_mode = #tpu.pipeline_mode<synchronous>, transform_indices = @transform_9, window_bounds = array<i64: 1, 1>}, {pipeline_mode = #tpu.pipeline_mode<synchronous>, transform_indices = @transform_10, window_bounds = array<i64: 1, 64>}, {pipeline_mode = #tpu.pipeline_mode<synchronous>, transform_indices = @transform_11, window_bounds = array<i64: 1, 64>}, {pipeline_mode = #tpu.pipeline_mode<synchronous>, transform_indices = @transform_12, window_bounds = array<i64: 64, 64>}, {pipeline_mode = #tpu.pipeline_mode<synchronous>, transform_indices = @transform_13, window_bounds = array<i64: 1, 64>}, {transform_indices = @transform_14, window_bounds = array<i64: 1, 16, 32>}, {transform_indices = @transform_15, window_bounds = array<i64: 1, 16, 32>}]} {
    %c0 = arith.constant 0 : index
    %c0_0 = arith.constant 0 : index
    %0 = vector.load %arg5[%c0, %c0_0] : memref<1x1xf32, #tpu.memory_space<vmem>>, vector<1x1xf32>
    %c0_1 = arith.constant 0 : index
    %c0_2 = arith.constant 0 : index
    %1 = vector.load %arg10[%c0_1, %c0_2] : memref<1x1xf32, #tpu.memory_space<vmem>>, vector<1x1xf32>
    %c0_3 = arith.constant 0 : index
    %c0_4 = arith.constant 0 : index
    %c0_5 = arith.constant 0 : index
    %2 = vector.load %arg1[%c0_3, %c0_4, %c0_5] : memref<1x16x32xf32, #tpu.memory_space<vmem>>, vector<1x16x32xf32>
    %3 = vector.shape_cast %2 : vector<1x16x32xf32> to vector<16x32xf32>
    %c0_6 = arith.constant 0 : index
    %c0_7 = arith.constant 0 : index
    %4 = vector.load %arg3[%c0_6, %c0_7] : memref<32x64xf32, #tpu.memory_space<vmem>>, vector<32x64xf32>
    %cst = arith.constant dense<0.000000e+00> : vector<16x64xf32>
    %5 = tpu.matmul %3, %4, %cst {dimension_numbers = #tpu.dot_dimension_numbers<[1], [0], [0], [1], [0, 0, 1, 1], [], []>} : vector<16x32xf32>, vector<32x64xf32>, vector<16x64xf32> -> vector<16x64xf32>
    %c0_8 = arith.constant 0 : index
    %c0_9 = arith.constant 0 : index
    %6 = vector.load %arg4[%c0_8, %c0_9] : memref<1x64xf32, #tpu.memory_space<vmem>>, vector<1x64xf32>
    %7 = vector.broadcast %6 : vector<1x64xf32> to vector<16x64xf32>
    %8 = arith.addf %5, %7 : vector<16x64xf32>
    %cst_10 = arith.constant 0.000000e+00 : f32
    %9 = vector.broadcast %cst_10 : f32 to vector<16x64xf32>
    %10 = arith.cmpf oge, %8, %9 : vector<16x64xf32>
    %11 = vector.broadcast %0 : vector<1x1xf32> to vector<16x64xf32>
    %12 = arith.mulf %11, %8 : vector<16x64xf32>
    %13 = arith.select %10, %8, %12 : vector<16x64xi1>, vector<16x64xf32>
    %c2 = arith.constant 2 : index
    %c0_11 = arith.constant 0 : index
    %14 = vector.load %arg17[%c2, %c0_11] : memref<20x64xf32, #tpu.memory_space<vmem>>, vector<16x64xf32>
    tpu.vector_store %arg17[%c2, %c0_11], %13 {strides = array<i32>} : memref<20x64xf32, #tpu.memory_space<vmem>>, vector<16x64xf32>,
    %c0_12 = arith.constant 0 : index
    %c0_13 = arith.constant 0 : index
    %15 = vector.load %arg4[%c0_12, %c0_13] : memref<1x64xf32, #tpu.memory_space<vmem>>, vector<1x64xf32>
    %cst_14 = arith.constant 0.000000e+00 : f32
    %16 = vector.broadcast %cst_14 : f32 to vector<1x64xf32>
    %17 = arith.cmpf oge, %15, %16 : vector<1x64xf32>
    %18 = vector.broadcast %0 : vector<1x1xf32> to vector<1x64xf32>
    %19 = arith.mulf %18, %15 : vector<1x64xf32>
    %20 = arith.select %17, %15, %19 : vector<1x64xi1>, vector<1x64xf32>
    %21 = vector.shape_cast %20 : vector<1x64xf32> to vector<1x64xf32>
    %22 = vector.broadcast %21 : vector<1x64xf32> to vector<2x64xf32>
    %c0_15 = arith.constant 0 : index
    %c0_16 = arith.constant 0 : index
    %23 = vector.load %arg17[%c0_15, %c0_16] : memref<20x64xf32, #tpu.memory_space<vmem>>, vector<2x64xf32>
    tpu.vector_store %arg17[%c0_15, %c0_16], %22 {strides = array<i32>} : memref<20x64xf32, #tpu.memory_space<vmem>>, vector<2x64xf32>,
    %24 = vector.shape_cast %20 : vector<1x64xf32> to vector<1x64xf32>
    %25 = vector.broadcast %24 : vector<1x64xf32> to vector<2x64xf32>
    %c18 = arith.constant 18 : index
    %c0_17 = arith.constant 0 : index
    %26 = vector.load %arg17[%c18, %c0_17] : memref<20x64xf32, #tpu.memory_space<vmem>>, vector<2x64xf32>
    tpu.vector_store %arg17[%c18, %c0_17], %25 {strides = array<i32>} : memref<20x64xf32, #tpu.memory_space<vmem>>, vector<2x64xf32>,
    %c0_18 = arith.constant 0 : index
    %c0_19 = arith.constant 0 : index
    %27 = vector.load %arg17[%c0_18, %c0_19] : memref<20x64xf32, #tpu.memory_space<vmem>>, vector<20x64xf32>
    %28 = vector.shape_cast %27 : vector<20x64xf32> to vector<1x20x64xf32>
    %cst_20 = arith.constant dense<0.000000e+00> : vector<1xf32>
    %29 = vector.multi_reduction <add>, %28, %cst_20 [1, 2] : vector<1x20x64xf32> to vector<1xf32>
    %30 = vector.shape_cast %29 : vector<1xf32> to vector<1x1x1xf32>
    %31 = vector.extract %30[0, 0, 0] : f32 from vector<1x1x1xf32>
    %cst_21 = arith.constant 1.280000e+03 : f32
    %32 = arith.divf %31, %cst_21 : f32
    %33 = vector.broadcast %32 : f32 to vector<20x64xf32>
    %34 = arith.subf %27, %33 : vector<20x64xf32>
    %35 = arith.mulf %34, %34 : vector<20x64xf32>
    %36 = vector.shape_cast %35 : vector<20x64xf32> to vector<1x20x64xf32>
    %cst_22 = arith.constant dense<0.000000e+00> : vector<1xf32>
    %37 = vector.multi_reduction <add>, %36, %cst_22 [1, 2] : vector<1x20x64xf32> to vector<1xf32>
    %38 = vector.shape_cast %37 : vector<1xf32> to vector<1x1x1xf32>
    %39 = vector.extract %38[0, 0, 0] : f32 from vector<1x1x1xf32>
    %cst_23 = arith.constant 1.280000e+03 : f32
    %40 = arith.divf %39, %cst_23 : f32
    %41 = vector.broadcast %32 : f32 to vector<20x64xf32>
    %42 = arith.subf %27, %41 : vector<20x64xf32>
    %cst_24 = arith.constant 9.99999993E-9 : f32
    %43 = arith.addf %40, %cst_24 : f32
    %44 = math.rsqrt %43 : f32
    %45 = vector.broadcast %44 : f32 to vector<20x64xf32>
    %46 = arith.mulf %42, %45 : vector<20x64xf32>
    %c0_25 = arith.constant 0 : index
    %c0_26 = arith.constant 0 : index
    %47 = vector.load %arg6[%c0_25, %c0_26] : memref<1x64xf32, #tpu.memory_space<vmem>>, vector<1x64xf32>
    %48 = vector.broadcast %47 : vector<1x64xf32> to vector<20x64xf32>
    %49 = arith.mulf %46, %48 : vector<20x64xf32>
    %c0_27 = arith.constant 0 : index
    %c0_28 = arith.constant 0 : index
    %50 = vector.load %arg7[%c0_27, %c0_28] : memref<1x64xf32, #tpu.memory_space<vmem>>, vector<1x64xf32>
    %51 = vector.broadcast %50 : vector<1x64xf32> to vector<20x64xf32>
    %52 = arith.addf %49, %51 : vector<20x64xf32>
    %c0_29 = arith.constant 0 : index
    %c0_30 = arith.constant 0 : index
    %53 = vector.load %arg17[%c0_29, %c0_30] : memref<20x64xf32, #tpu.memory_space<vmem>>, vector<20x64xf32>
    tpu.vector_store %arg17[%c0_29, %c0_30], %52 {strides = array<i32>} : memref<20x64xf32, #tpu.memory_space<vmem>>, vector<20x64xf32>,
    %cst_31 = arith.constant 0.000000e+00 : f32
    %54 = vector.broadcast %cst_31 : f32 to vector<16x64xf32>
    %c0_32 = arith.constant 0 : index
    %c0_33 = arith.constant 0 : index
    %55 = vector.load %arg17[%c0_32, %c0_33] : memref<20x64xf32, #tpu.memory_space<vmem>>, vector<16x64xf32>
    %c0_34 = arith.constant 0 : index
    %c0_35 = arith.constant 0 : index
    %56 = vector.load %arg8[%c0_34, %c0_35] : memref<3x64xf32, #tpu.memory_space<vmem>>, vector<1x64xf32>
    %57 = vector.broadcast %56 : vector<1x64xf32> to vector<16x64xf32>
    %58 = arith.mulf %55, %57 : vector<16x64xf32>
    %59 = arith.addf %54, %58 : vector<16x64xf32>
    %c2_36 = arith.constant 2 : index
    %c0_37 = arith.constant 0 : index
    %60 = vector.load %arg17[%c2_36, %c0_37] : memref<20x64xf32, #tpu.memory_space<vmem>>, vector<16x64xf32>
    %c1 = arith.constant 1 : index
    %c0_38 = arith.constant 0 : index
    %61 = vector.load %arg8[%c1, %c0_38] : memref<3x64xf32, #tpu.memory_space<vmem>>, vector<1x64xf32>
    %62 = vector.broadcast %61 : vector<1x64xf32> to vector<16x64xf32>
    %63 = arith.mulf %60, %62 : vector<16x64xf32>
    %64 = arith.addf %59, %63 : vector<16x64xf32>
    %c4 = arith.constant 4 : index
    %c0_39 = arith.constant 0 : index
    %65 = vector.load %arg17[%c4, %c0_39] : memref<20x64xf32, #tpu.memory_space<vmem>>, vector<16x64xf32>
    %c2_40 = arith.constant 2 : index
    %c0_41 = arith.constant 0 : index
    %66 = vector.load %arg8[%c2_40, %c0_41] : memref<3x64xf32, #tpu.memory_space<vmem>>, vector<1x64xf32>
    %67 = vector.broadcast %66 : vector<1x64xf32> to vector<16x64xf32>
    %68 = arith.mulf %65, %67 : vector<16x64xf32>
    %69 = arith.addf %64, %68 : vector<16x64xf32>
    %c0_42 = arith.constant 0 : index
    %c0_43 = arith.constant 0 : index
    %70 = vector.load %arg9[%c0_42, %c0_43] : memref<1x64xf32, #tpu.memory_space<vmem>>, vector<1x64xf32>
    %71 = vector.broadcast %70 : vector<1x64xf32> to vector<16x64xf32>
    %72 = arith.addf %69, %71 : vector<16x64xf32>
    %cst_44 = arith.constant 0.000000e+00 : f32
    %73 = vector.broadcast %cst_44 : f32 to vector<16x64xf32>
    %74 = arith.cmpf oge, %72, %73 : vector<16x64xf32>
    %75 = vector.broadcast %1 : vector<1x1xf32> to vector<16x64xf32>
    %76 = arith.mulf %75, %72 : vector<16x64xf32>
    %77 = arith.select %74, %72, %76 : vector<16x64xi1>, vector<16x64xf32>
    %78 = vector.shape_cast %77 : vector<16x64xf32> to vector<1x16x64xf32>
    %cst_45 = arith.constant dense<0.000000e+00> : vector<1xf32>
    %79 = vector.multi_reduction <add>, %78, %cst_45 [1, 2] : vector<1x16x64xf32> to vector<1xf32>
    %80 = vector.shape_cast %79 : vector<1xf32> to vector<1x1x1xf32>
    %81 = vector.extract %80[0, 0, 0] : f32 from vector<1x1x1xf32>
    %cst_46 = arith.constant 1.024000e+03 : f32
    %82 = arith.divf %81, %cst_46 : f32
    %83 = vector.broadcast %82 : f32 to vector<16x64xf32>
    %84 = arith.subf %77, %83 : vector<16x64xf32>
    %85 = arith.mulf %84, %84 : vector<16x64xf32>
    %86 = vector.shape_cast %85 : vector<16x64xf32> to vector<1x16x64xf32>
    %cst_47 = arith.constant dense<0.000000e+00> : vector<1xf32>
    %87 = vector.multi_reduction <add>, %86, %cst_47 [1, 2] : vector<1x16x64xf32> to vector<1xf32>
    %88 = vector.shape_cast %87 : vector<1xf32> to vector<1x1x1xf32>
    %89 = vector.extract %88[0, 0, 0] : f32 from vector<1x1x1xf32>
    %cst_48 = arith.constant 1.024000e+03 : f32
    %90 = arith.divf %89, %cst_48 : f32
    %91 = vector.broadcast %82 : f32 to vector<16x64xf32>
    %92 = arith.subf %77, %91 : vector<16x64xf32>
    %cst_49 = arith.constant 9.99999993E-9 : f32
    %93 = arith.addf %90, %cst_49 : f32
    %94 = math.rsqrt %93 : f32
    %95 = vector.broadcast %94 : f32 to vector<16x64xf32>
    %96 = arith.mulf %92, %95 : vector<16x64xf32>
    %c0_50 = arith.constant 0 : index
    %c0_51 = arith.constant 0 : index
    %97 = vector.load %arg11[%c0_50, %c0_51] : memref<1x64xf32, #tpu.memory_space<vmem>>, vector<1x64xf32>
    %98 = vector.broadcast %97 : vector<1x64xf32> to vector<16x64xf32>
    %99 = arith.mulf %96, %98 : vector<16x64xf32>
    %c0_52 = arith.constant 0 : index
    %c0_53 = arith.constant 0 : index
    %100 = vector.load %arg12[%c0_52, %c0_53] : memref<1x64xf32, #tpu.memory_space<vmem>>, vector<1x64xf32>
    %101 = vector.broadcast %100 : vector<1x64xf32> to vector<16x64xf32>
    %102 = arith.addf %99, %101 : vector<16x64xf32>
    %c0_54 = arith.constant 0 : index
    %c0_55 = arith.constant 0 : index
    %103 = vector.load %arg13[%c0_54, %c0_55] : memref<64x64xf32, #tpu.memory_space<vmem>>, vector<64x64xf32>
    %cst_56 = arith.constant dense<0.000000e+00> : vector<16x64xf32>
    %104 = tpu.matmul %102, %103, %cst_56 {dimension_numbers = #tpu.dot_dimension_numbers<[1], [0], [0], [1], [0, 0, 1, 1], [], []>} : vector<16x64xf32>, vector<64x64xf32>, vector<16x64xf32> -> vector<16x64xf32>
    %c0_57 = arith.constant 0 : index
    %c0_58 = arith.constant 0 : index
    %105 = vector.load %arg14[%c0_57, %c0_58] : memref<1x64xf32, #tpu.memory_space<vmem>>, vector<1x64xf32>
    %106 = vector.broadcast %105 : vector<1x64xf32> to vector<16x64xf32>
    %107 = arith.addf %104, %106 : vector<16x64xf32>
    %108 = vector.extract_strided_slice %107 {offsets = [0, 0], sizes = [16, 32], strides = [1, 1]} : vector<16x64xf32> to vector<16x32xf32>
    %109 = arith.addf %3, %108 : vector<16x32xf32>
    %c0_59 = arith.constant 0 : index
    %c0_60 = arith.constant 0 : index
    %c0_61 = arith.constant 0 : index
    %110 = vector.load %arg15[%c0_59, %c0_60, %c0_61] : memref<1x16x32xf32, #tpu.memory_space<vmem>>, vector<1x16x32xf32>
    %111 = vector.shape_cast %110 : vector<1x16x32xf32> to vector<16x32xf32>
    %112 = vector.shape_cast %109 : vector<16x32xf32> to vector<1x16x32xf32>
    tpu.vector_store %arg15[%c0_59, %c0_60, %c0_61], %112 {strides = array<i32>} : memref<1x16x32xf32, #tpu.memory_space<vmem>>, vector<1x16x32xf32>,
    %c0_62 = arith.constant 0 : index
    %c0_63 = arith.constant 0 : index
    %c0_64 = arith.constant 0 : index
    %113 = vector.load %arg2[%c0_62, %c0_63, %c0_64] : memref<1x16x32xf32, #tpu.memory_space<vmem>>, vector<1x16x32xf32>
    %114 = vector.shape_cast %113 : vector<1x16x32xf32> to vector<16x32xf32>
    %115 = vector.extract_strided_slice %107 {offsets = [0, 32], sizes = [16, 32], strides = [1, 1]} : vector<16x64xf32> to vector<16x32xf32>
    %116 = arith.addf %114, %115 : vector<16x32xf32>
    %c0_65 = arith.constant 0 : index
    %c0_66 = arith.constant 0 : index
    %c0_67 = arith.constant 0 : index
    %117 = vector.load %arg16[%c0_65, %c0_66, %c0_67] : memref<1x16x32xf32, #tpu.memory_space<vmem>>, vector<1x16x32xf32>
    %118 = vector.shape_cast %117 : vector<1x16x32xf32> to vector<16x32xf32>
    %119 = vector.shape_cast %116 : vector<16x32xf32> to vector<1x16x32xf32>
    tpu.vector_store %arg16[%c0_65, %c0_66, %c0_67], %119 {strides = array<i32>} : memref<1x16x32xf32, #tpu.memory_space<vmem>>, vector<1x16x32xf32>,
    return
  }
  func.func @transform_0(%arg0: i32) -> (i32, i32, i32) {
    %c0_i32 = arith.constant 0 : i32
    %c0_i32_0 = arith.constant 0 : i32
    %c0_i32_1 = arith.constant 0 : i32
    return %arg0, %c0_i32, %c0_i32_0 : i32, i32, i32
  }
  func.func @transform_1(%arg0: i32) -> (i32, i32, i32) {
    %c0_i32 = arith.constant 0 : i32
    %c0_i32_0 = arith.constant 0 : i32
    %c0_i32_1 = arith.constant 0 : i32
    return %arg0, %c0_i32, %c0_i32_0 : i32, i32, i32
  }
  func.func @transform_2(%arg0: i32) -> (i32, i32) {
    %c0_i32 = arith.constant 0 : i32
    %c0_i32_0 = arith.constant 0 : i32
    %c0_i32_1 = arith.constant 0 : i32
    return %c0_i32, %c0_i32_0 : i32, i32
  }
  func.func @transform_3(%arg0: i32) -> (i32, i32) {
    %c0_i32 = arith.constant 0 : i32
    %c0_i32_0 = arith.constant 0 : i32
    %c0_i32_1 = arith.constant 0 : i32
    return %c0_i32, %c0_i32_0 : i32, i32
  }
  func.func @transform_4(%arg0: i32) -> (i32, i32) {
    %c0_i32 = arith.constant 0 : i32
    %c0_i32_0 = arith.constant 0 : i32
    %c0_i32_1 = arith.constant 0 : i32
    return %c0_i32, %c0_i32_0 : i32, i32
  }
  func.func @transform_5(%arg0: i32) -> (i32, i32) {
    %c0_i32 = arith.constant 0 : i32
    %c0_i32_0 = arith.constant 0 : i32
    %c0_i32_1 = arith.constant 0 : i32
    return %c0_i32, %c0_i32_0 : i32, i32
  }
  func.func @transform_6(%arg0: i32) -> (i32, i32) {
    %c0_i32 = arith.constant 0 : i32
    %c0_i32_0 = arith.constant 0 : i32
    %c0_i32_1 = arith.constant 0 : i32
    return %c0_i32, %c0_i32_0 : i32, i32
  }
  func.func @transform_7(%arg0: i32) -> (i32, i32) {
    %c0_i32 = arith.constant 0 : i32
    %c0_i32_0 = arith.constant 0 : i32
    %c0_i32_1 = arith.constant 0 : i32
    return %c0_i32, %c0_i32_0 : i32, i32
  }
  func.func @transform_8(%arg0: i32) -> (i32, i32) {
    %c0_i32 = arith.constant 0 : i32
    %c0_i32_0 = arith.constant 0 : i32
    %c0_i32_1 = arith.constant 0 : i32
    return %c0_i32, %c0_i32_0 : i32, i32
  }
  func.func @transform_9(%arg0: i32) -> (i32, i32) {
    %c0_i32 = arith.constant 0 : i32
    %c0_i32_0 = arith.constant 0 : i32
    %c0_i32_1 = arith.constant 0 : i32
    return %c0_i32, %c0_i32_0 : i32, i32
  }
  func.func @transform_10(%arg0: i32) -> (i32, i32) {
    %c0_i32 = arith.constant 0 : i32
    %c0_i32_0 = arith.constant 0 : i32
    %c0_i32_1 = arith.constant 0 : i32
    return %c0_i32, %c0_i32_0 : i32, i32
  }
  func.func @transform_11(%arg0: i32) -> (i32, i32) {
    %c0_i32 = arith.constant 0 : i32
    %c0_i32_0 = arith.constant 0 : i32
    %c0_i32_1 = arith.constant 0 : i32
    return %c0_i32, %c0_i32_0 : i32, i32
  }
  func.func @transform_12(%arg0: i32) -> (i32, i32) {
    %c0_i32 = arith.constant 0 : i32
    %c0_i32_0 = arith.constant 0 : i32
    %c0_i32_1 = arith.constant 0 : i32
    return %c0_i32, %c0_i32_0 : i32, i32
  }
  func.func @transform_13(%arg0: i32) -> (i32, i32) {
    %c0_i32 = arith.constant 0 : i32
    %c0_i32_0 = arith.constant 0 : i32
    %c0_i32_1 = arith.constant 0 : i32
    return %c0_i32, %c0_i32_0 : i32, i32
  }
  func.func @transform_14(%arg0: i32) -> (i32, i32, i32) {
    %c0_i32 = arith.constant 0 : i32
    %c0_i32_0 = arith.constant 0 : i32
    %c0_i32_1 = arith.constant 0 : i32
    return %arg0, %c0_i32, %c0_i32_0 : i32, i32, i32
  }
  func.func @transform_15(%arg0: i32) -> (i32, i32, i32) {
    %c0_i32 = arith.constant 0 : i32
    %c0_i32_0 = arith.constant 0 : i32
    %c0_i32_1 = arith.constant 0 : i32
    return %arg0, %c0_i32, %c0_i32_0 : i32, i32, i32
  }
}

module attributes {stable_mosaic.version = 11 : i64} {
  func.func @_conv_block_kernel(%arg0: i32, %arg1: memref<1x16x32xf32, #tpu.memory_space<vmem>>, %arg2: memref<1x16x32xf32, #tpu.memory_space<vmem>>, %arg3: memref<32x64xf32, #tpu.memory_space<vmem>>, %arg4: memref<1x64xf32, #tpu.memory_space<vmem>>, %arg5: memref<1x1xf32, #tpu.memory_space<vmem>>, %arg6: memref<1x64xf32, #tpu.memory_space<vmem>>, %arg7: memref<1x64xf32, #tpu.memory_space<vmem>>, %arg8: memref<3x64xf32, #tpu.memory_space<vmem>>, %arg9: memref<1x64xf32, #tpu.memory_space<vmem>>, %arg10: memref<1x1xf32, #tpu.memory_space<vmem>>, %arg11: memref<1x64xf32, #tpu.memory_space<vmem>>, %arg12: memref<1x64xf32, #tpu.memory_space<vmem>>, %arg13: memref<64x32xf32, #tpu.memory_space<vmem>>, %arg14: memref<1x32xf32, #tpu.memory_space<vmem>>, %arg15: memref<1x16x32xf32, #tpu.memory_space<vmem>>, %arg16: memref<1x16x32xf32, #tpu.memory_space<vmem>>, %arg17: memref<20x64xf32, #tpu.memory_space<vmem>>) attributes {dimension_semantics = [#tpu.dimension_semantics<parallel>], iteration_bounds = array<i64: 2>, scalar_prefetch = 0 : i64, scratch_operands = 1 : i64, tpu.core_type = #tpu.core_type<tc>, window_params = [{transform_indices = @transform_0, window_bounds = array<i64: 1, 16, 32>}, {transform_indices = @transform_1, window_bounds = array<i64: 1, 16, 32>}, {pipeline_mode = #tpu.pipeline_mode<synchronous>, transform_indices = @transform_2, window_bounds = array<i64: 32, 64>}, {pipeline_mode = #tpu.pipeline_mode<synchronous>, transform_indices = @transform_3, window_bounds = array<i64: 1, 64>}, {pipeline_mode = #tpu.pipeline_mode<synchronous>, transform_indices = @transform_4, window_bounds = array<i64: 1, 1>}, {pipeline_mode = #tpu.pipeline_mode<synchronous>, transform_indices = @transform_5, window_bounds = array<i64: 1, 64>}, {pipeline_mode = #tpu.pipeline_mode<synchronous>, transform_indices = @transform_6, window_bounds = array<i64: 1, 64>}, {pipeline_mode = #tpu.pipeline_mode<synchronous>, transform_indices = @transform_7, window_bounds = array<i64: 3, 64>}, {pipeline_mode = #tpu.pipeline_mode<synchronous>, transform_indices = @transform_8, window_bounds = array<i64: 1, 64>}, {pipeline_mode = #tpu.pipeline_mode<synchronous>, transform_indices = @transform_9, window_bounds = array<i64: 1, 1>}, {pipeline_mode = #tpu.pipeline_mode<synchronous>, transform_indices = @transform_10, window_bounds = array<i64: 1, 64>}, {pipeline_mode = #tpu.pipeline_mode<synchronous>, transform_indices = @transform_11, window_bounds = array<i64: 1, 64>}, {pipeline_mode = #tpu.pipeline_mode<synchronous>, transform_indices = @transform_12, window_bounds = array<i64: 64, 32>}, {pipeline_mode = #tpu.pipeline_mode<synchronous>, transform_indices = @transform_13, window_bounds = array<i64: 1, 32>}, {transform_indices = @transform_14, window_bounds = array<i64: 1, 16, 32>}, {transform_indices = @transform_15, window_bounds = array<i64: 1, 16, 32>}]} {
    %c0 = arith.constant 0 : index
    %c0_0 = arith.constant 0 : index
    %0 = vector.load %arg5[%c0, %c0_0] : memref<1x1xf32, #tpu.memory_space<vmem>>, vector<1x1xf32>
    %c0_1 = arith.constant 0 : index
    %c0_2 = arith.constant 0 : index
    %1 = vector.load %arg10[%c0_1, %c0_2] : memref<1x1xf32, #tpu.memory_space<vmem>>, vector<1x1xf32>
    %c0_3 = arith.constant 0 : index
    %c0_4 = arith.constant 0 : index
    %c0_5 = arith.constant 0 : index
    %2 = vector.load %arg1[%c0_3, %c0_4, %c0_5] : memref<1x16x32xf32, #tpu.memory_space<vmem>>, vector<1x16x32xf32>
    %3 = vector.shape_cast %2 : vector<1x16x32xf32> to vector<16x32xf32>
    %c0_6 = arith.constant 0 : index
    %c0_7 = arith.constant 0 : index
    %4 = vector.load %arg3[%c0_6, %c0_7] : memref<32x64xf32, #tpu.memory_space<vmem>>, vector<32x64xf32>
    %cst = arith.constant dense<0.000000e+00> : vector<16x64xf32>
    %5 = tpu.matmul %3, %4, %cst {dimension_numbers = #tpu.dot_dimension_numbers<[1], [0], [0], [1], [0, 0, 1, 1], [], []>} : vector<16x32xf32>, vector<32x64xf32>, vector<16x64xf32> -> vector<16x64xf32>
    %c0_8 = arith.constant 0 : index
    %c0_9 = arith.constant 0 : index
    %6 = vector.load %arg4[%c0_8, %c0_9] : memref<1x64xf32, #tpu.memory_space<vmem>>, vector<1x64xf32>
    %7 = vector.broadcast %6 : vector<1x64xf32> to vector<16x64xf32>
    %8 = arith.addf %5, %7 : vector<16x64xf32>
    %cst_10 = arith.constant 0.000000e+00 : f32
    %9 = vector.broadcast %cst_10 : f32 to vector<16x64xf32>
    %10 = arith.cmpf oge, %8, %9 : vector<16x64xf32>
    %11 = vector.broadcast %0 : vector<1x1xf32> to vector<16x64xf32>
    %12 = arith.mulf %11, %8 : vector<16x64xf32>
    %13 = arith.select %10, %8, %12 : vector<16x64xi1>, vector<16x64xf32>
    %c2 = arith.constant 2 : index
    %c0_11 = arith.constant 0 : index
    %14 = vector.load %arg17[%c2, %c0_11] : memref<20x64xf32, #tpu.memory_space<vmem>>, vector<16x64xf32>
    tpu.vector_store %arg17[%c2, %c0_11], %13 {strides = array<i32>} : memref<20x64xf32, #tpu.memory_space<vmem>>, vector<16x64xf32>,
    %c0_12 = arith.constant 0 : index
    %c0_13 = arith.constant 0 : index
    %15 = vector.load %arg4[%c0_12, %c0_13] : memref<1x64xf32, #tpu.memory_space<vmem>>, vector<1x64xf32>
    %cst_14 = arith.constant 0.000000e+00 : f32
    %16 = vector.broadcast %cst_14 : f32 to vector<1x64xf32>
    %17 = arith.cmpf oge, %15, %16 : vector<1x64xf32>
    %18 = vector.broadcast %0 : vector<1x1xf32> to vector<1x64xf32>
    %19 = arith.mulf %18, %15 : vector<1x64xf32>
    %20 = arith.select %17, %15, %19 : vector<1x64xi1>, vector<1x64xf32>
    %21 = vector.shape_cast %20 : vector<1x64xf32> to vector<1x64xf32>
    %22 = vector.broadcast %21 : vector<1x64xf32> to vector<2x64xf32>
    %c0_15 = arith.constant 0 : index
    %c0_16 = arith.constant 0 : index
    %23 = vector.load %arg17[%c0_15, %c0_16] : memref<20x64xf32, #tpu.memory_space<vmem>>, vector<2x64xf32>
    tpu.vector_store %arg17[%c0_15, %c0_16], %22 {strides = array<i32>} : memref<20x64xf32, #tpu.memory_space<vmem>>, vector<2x64xf32>,
    %24 = vector.shape_cast %20 : vector<1x64xf32> to vector<1x64xf32>
    %25 = vector.broadcast %24 : vector<1x64xf32> to vector<2x64xf32>
    %c18 = arith.constant 18 : index
    %c0_17 = arith.constant 0 : index
    %26 = vector.load %arg17[%c18, %c0_17] : memref<20x64xf32, #tpu.memory_space<vmem>>, vector<2x64xf32>
    tpu.vector_store %arg17[%c18, %c0_17], %25 {strides = array<i32>} : memref<20x64xf32, #tpu.memory_space<vmem>>, vector<2x64xf32>,
    %c0_18 = arith.constant 0 : index
    %c0_19 = arith.constant 0 : index
    %27 = vector.load %arg17[%c0_18, %c0_19] : memref<20x64xf32, #tpu.memory_space<vmem>>, vector<20x64xf32>
    %28 = vector.shape_cast %27 : vector<20x64xf32> to vector<1x20x64xf32>
    %cst_20 = arith.constant dense<0.000000e+00> : vector<1xf32>
    %29 = vector.multi_reduction <add>, %28, %cst_20 [1, 2] : vector<1x20x64xf32> to vector<1xf32>
    %30 = vector.shape_cast %29 : vector<1xf32> to vector<1x1x1xf32>
    %31 = vector.extract %30[0, 0, 0] : f32 from vector<1x1x1xf32>
    %cst_21 = arith.constant 1.280000e+03 : f32
    %32 = arith.divf %31, %cst_21 : f32
    %33 = vector.broadcast %32 : f32 to vector<20x64xf32>
    %34 = arith.subf %27, %33 : vector<20x64xf32>
    %35 = arith.mulf %34, %34 : vector<20x64xf32>
    %36 = vector.shape_cast %35 : vector<20x64xf32> to vector<1x20x64xf32>
    %cst_22 = arith.constant dense<0.000000e+00> : vector<1xf32>
    %37 = vector.multi_reduction <add>, %36, %cst_22 [1, 2] : vector<1x20x64xf32> to vector<1xf32>
    %38 = vector.shape_cast %37 : vector<1xf32> to vector<1x1x1xf32>
    %39 = vector.extract %38[0, 0, 0] : f32 from vector<1x1x1xf32>
    %cst_23 = arith.constant 1.280000e+03 : f32
    %40 = arith.divf %39, %cst_23 : f32
    %41 = vector.broadcast %32 : f32 to vector<20x64xf32>
    %42 = arith.subf %27, %41 : vector<20x64xf32>
    %cst_24 = arith.constant 9.99999993E-9 : f32
    %43 = arith.addf %40, %cst_24 : f32
    %44 = math.rsqrt %43 : f32
    %45 = vector.broadcast %44 : f32 to vector<20x64xf32>
    %46 = arith.mulf %42, %45 : vector<20x64xf32>
    %c0_25 = arith.constant 0 : index
    %c0_26 = arith.constant 0 : index
    %47 = vector.load %arg6[%c0_25, %c0_26] : memref<1x64xf32, #tpu.memory_space<vmem>>, vector<1x64xf32>
    %48 = vector.broadcast %47 : vector<1x64xf32> to vector<20x64xf32>
    %49 = arith.mulf %46, %48 : vector<20x64xf32>
    %c0_27 = arith.constant 0 : index
    %c0_28 = arith.constant 0 : index
    %50 = vector.load %arg7[%c0_27, %c0_28] : memref<1x64xf32, #tpu.memory_space<vmem>>, vector<1x64xf32>
    %51 = vector.broadcast %50 : vector<1x64xf32> to vector<20x64xf32>
    %52 = arith.addf %49, %51 : vector<20x64xf32>
    %c0_29 = arith.constant 0 : index
    %c0_30 = arith.constant 0 : index
    %53 = vector.load %arg17[%c0_29, %c0_30] : memref<20x64xf32, #tpu.memory_space<vmem>>, vector<20x64xf32>
    tpu.vector_store %arg17[%c0_29, %c0_30], %52 {strides = array<i32>} : memref<20x64xf32, #tpu.memory_space<vmem>>, vector<20x64xf32>,
    %cst_31 = arith.constant 0.000000e+00 : f32
    %54 = vector.broadcast %cst_31 : f32 to vector<16x64xf32>
    %c0_32 = arith.constant 0 : index
    %c0_33 = arith.constant 0 : index
    %55 = vector.load %arg17[%c0_32, %c0_33] : memref<20x64xf32, #tpu.memory_space<vmem>>, vector<16x64xf32>
    %c0_34 = arith.constant 0 : index
    %c0_35 = arith.constant 0 : index
    %56 = vector.load %arg8[%c0_34, %c0_35] : memref<3x64xf32, #tpu.memory_space<vmem>>, vector<1x64xf32>
    %57 = vector.broadcast %56 : vector<1x64xf32> to vector<16x64xf32>
    %58 = arith.mulf %55, %57 : vector<16x64xf32>
    %59 = arith.addf %54, %58 : vector<16x64xf32>
    %c2_36 = arith.constant 2 : index
    %c0_37 = arith.constant 0 : index
    %60 = vector.load %arg17[%c2_36, %c0_37] : memref<20x64xf32, #tpu.memory_space<vmem>>, vector<16x64xf32>
    %c1 = arith.constant 1 : index
    %c0_38 = arith.constant 0 : index
    %61 = vector.load %arg8[%c1, %c0_38] : memref<3x64xf32, #tpu.memory_space<vmem>>, vector<1x64xf32>
    %62 = vector.broadcast %61 : vector<1x64xf32> to vector<16x64xf32>
    %63 = arith.mulf %60, %62 : vector<16x64xf32>
    %64 = arith.addf %59, %63 : vector<16x64xf32>
    %c4 = arith.constant 4 : index
    %c0_39 = arith.constant 0 : index
    %65 = vector.load %arg17[%c4, %c0_39] : memref<20x64xf32, #tpu.memory_space<vmem>>, vector<16x64xf32>
    %c2_40 = arith.constant 2 : index
    %c0_41 = arith.constant 0 : index
    %66 = vector.load %arg8[%c2_40, %c0_41] : memref<3x64xf32, #tpu.memory_space<vmem>>, vector<1x64xf32>
    %67 = vector.broadcast %66 : vector<1x64xf32> to vector<16x64xf32>
    %68 = arith.mulf %65, %67 : vector<16x64xf32>
    %69 = arith.addf %64, %68 : vector<16x64xf32>
    %c0_42 = arith.constant 0 : index
    %c0_43 = arith.constant 0 : index
    %70 = vector.load %arg9[%c0_42, %c0_43] : memref<1x64xf32, #tpu.memory_space<vmem>>, vector<1x64xf32>
    %71 = vector.broadcast %70 : vector<1x64xf32> to vector<16x64xf32>
    %72 = arith.addf %69, %71 : vector<16x64xf32>
    %cst_44 = arith.constant 0.000000e+00 : f32
    %73 = vector.broadcast %cst_44 : f32 to vector<16x64xf32>
    %74 = arith.cmpf oge, %72, %73 : vector<16x64xf32>
    %75 = vector.broadcast %1 : vector<1x1xf32> to vector<16x64xf32>
    %76 = arith.mulf %75, %72 : vector<16x64xf32>
    %77 = arith.select %74, %72, %76 : vector<16x64xi1>, vector<16x64xf32>
    %78 = vector.shape_cast %77 : vector<16x64xf32> to vector<1x16x64xf32>
    %cst_45 = arith.constant dense<0.000000e+00> : vector<1xf32>
    %79 = vector.multi_reduction <add>, %78, %cst_45 [1, 2] : vector<1x16x64xf32> to vector<1xf32>
    %80 = vector.shape_cast %79 : vector<1xf32> to vector<1x1x1xf32>
    %81 = vector.extract %80[0, 0, 0] : f32 from vector<1x1x1xf32>
    %cst_46 = arith.constant 1.024000e+03 : f32
    %82 = arith.divf %81, %cst_46 : f32
    %83 = vector.broadcast %82 : f32 to vector<16x64xf32>
    %84 = arith.subf %77, %83 : vector<16x64xf32>
    %85 = arith.mulf %84, %84 : vector<16x64xf32>
    %86 = vector.shape_cast %85 : vector<16x64xf32> to vector<1x16x64xf32>
    %cst_47 = arith.constant dense<0.000000e+00> : vector<1xf32>
    %87 = vector.multi_reduction <add>, %86, %cst_47 [1, 2] : vector<1x16x64xf32> to vector<1xf32>
    %88 = vector.shape_cast %87 : vector<1xf32> to vector<1x1x1xf32>
    %89 = vector.extract %88[0, 0, 0] : f32 from vector<1x1x1xf32>
    %cst_48 = arith.constant 1.024000e+03 : f32
    %90 = arith.divf %89, %cst_48 : f32
    %91 = vector.broadcast %82 : f32 to vector<16x64xf32>
    %92 = arith.subf %77, %91 : vector<16x64xf32>
    %cst_49 = arith.constant 9.99999993E-9 : f32
    %93 = arith.addf %90, %cst_49 : f32
    %94 = math.rsqrt %93 : f32
    %95 = vector.broadcast %94 : f32 to vector<16x64xf32>
    %96 = arith.mulf %92, %95 : vector<16x64xf32>
    %c0_50 = arith.constant 0 : index
    %c0_51 = arith.constant 0 : index
    %97 = vector.load %arg11[%c0_50, %c0_51] : memref<1x64xf32, #tpu.memory_space<vmem>>, vector<1x64xf32>
    %98 = vector.broadcast %97 : vector<1x64xf32> to vector<16x64xf32>
    %99 = arith.mulf %96, %98 : vector<16x64xf32>
    %c0_52 = arith.constant 0 : index
    %c0_53 = arith.constant 0 : index
    %100 = vector.load %arg12[%c0_52, %c0_53] : memref<1x64xf32, #tpu.memory_space<vmem>>, vector<1x64xf32>
    %101 = vector.broadcast %100 : vector<1x64xf32> to vector<16x64xf32>
    %102 = arith.addf %99, %101 : vector<16x64xf32>
    %c0_54 = arith.constant 0 : index
    %c0_55 = arith.constant 0 : index
    %103 = vector.load %arg13[%c0_54, %c0_55] : memref<64x32xf32, #tpu.memory_space<vmem>>, vector<64x32xf32>
    %cst_56 = arith.constant dense<0.000000e+00> : vector<16x32xf32>
    %104 = tpu.matmul %102, %103, %cst_56 {dimension_numbers = #tpu.dot_dimension_numbers<[1], [0], [0], [1], [0, 0, 1, 1], [], []>} : vector<16x64xf32>, vector<64x32xf32>, vector<16x32xf32> -> vector<16x32xf32>
    %c0_57 = arith.constant 0 : index
    %c0_58 = arith.constant 0 : index
    %105 = vector.load %arg14[%c0_57, %c0_58] : memref<1x32xf32, #tpu.memory_space<vmem>>, vector<1x32xf32>
    %106 = vector.broadcast %105 : vector<1x32xf32> to vector<16x32xf32>
    %107 = arith.addf %104, %106 : vector<16x32xf32>
    %c0_59 = arith.constant 0 : index
    %c0_60 = arith.constant 0 : index
    %c0_61 = arith.constant 0 : index
    %108 = vector.load %arg15[%c0_59, %c0_60, %c0_61] : memref<1x16x32xf32, #tpu.memory_space<vmem>>, vector<1x16x32xf32>
    %109 = vector.shape_cast %108 : vector<1x16x32xf32> to vector<16x32xf32>
    %110 = vector.shape_cast %3 : vector<16x32xf32> to vector<1x16x32xf32>
    tpu.vector_store %arg15[%c0_59, %c0_60, %c0_61], %110 {strides = array<i32>} : memref<1x16x32xf32, #tpu.memory_space<vmem>>, vector<1x16x32xf32>,
    %c0_62 = arith.constant 0 : index
    %c0_63 = arith.constant 0 : index
    %c0_64 = arith.constant 0 : index
    %111 = vector.load %arg2[%c0_62, %c0_63, %c0_64] : memref<1x16x32xf32, #tpu.memory_space<vmem>>, vector<1x16x32xf32>
    %112 = vector.shape_cast %111 : vector<1x16x32xf32> to vector<16x32xf32>
    %113 = arith.addf %112, %107 : vector<16x32xf32>
    %c0_65 = arith.constant 0 : index
    %c0_66 = arith.constant 0 : index
    %c0_67 = arith.constant 0 : index
    %114 = vector.load %arg16[%c0_65, %c0_66, %c0_67] : memref<1x16x32xf32, #tpu.memory_space<vmem>>, vector<1x16x32xf32>
    %115 = vector.shape_cast %114 : vector<1x16x32xf32> to vector<16x32xf32>
    %116 = vector.shape_cast %113 : vector<16x32xf32> to vector<1x16x32xf32>
    tpu.vector_store %arg16[%c0_65, %c0_66, %c0_67], %116 {strides = array<i32>} : memref<1x16x32xf32, #tpu.memory_space<vmem>>, vector<1x16x32xf32>,
    return
  }
  func.func @transform_0(%arg0: i32) -> (i32, i32, i32) {
    %c0_i32 = arith.constant 0 : i32
    %c0_i32_0 = arith.constant 0 : i32
    %c0_i32_1 = arith.constant 0 : i32
    return %arg0, %c0_i32, %c0_i32_0 : i32, i32, i32
  }
  func.func @transform_1(%arg0: i32) -> (i32, i32, i32) {
    %c0_i32 = arith.constant 0 : i32
    %c0_i32_0 = arith.constant 0 : i32
    %c0_i32_1 = arith.constant 0 : i32
    return %arg0, %c0_i32, %c0_i32_0 : i32, i32, i32
  }
  func.func @transform_2(%arg0: i32) -> (i32, i32) {
    %c0_i32 = arith.constant 0 : i32
    %c0_i32_0 = arith.constant 0 : i32
    %c0_i32_1 = arith.constant 0 : i32
    return %c0_i32, %c0_i32_0 : i32, i32
  }
  func.func @transform_3(%arg0: i32) -> (i32, i32) {
    %c0_i32 = arith.constant 0 : i32
    %c0_i32_0 = arith.constant 0 : i32
    %c0_i32_1 = arith.constant 0 : i32
    return %c0_i32, %c0_i32_0 : i32, i32
  }
  func.func @transform_4(%arg0: i32) -> (i32, i32) {
    %c0_i32 = arith.constant 0 : i32
    %c0_i32_0 = arith.constant 0 : i32
    %c0_i32_1 = arith.constant 0 : i32
    return %c0_i32, %c0_i32_0 : i32, i32
  }
  func.func @transform_5(%arg0: i32) -> (i32, i32) {
    %c0_i32 = arith.constant 0 : i32
    %c0_i32_0 = arith.constant 0 : i32
    %c0_i32_1 = arith.constant 0 : i32
    return %c0_i32, %c0_i32_0 : i32, i32
  }
  func.func @transform_6(%arg0: i32) -> (i32, i32) {
    %c0_i32 = arith.constant 0 : i32
    %c0_i32_0 = arith.constant 0 : i32
    %c0_i32_1 = arith.constant 0 : i32
    return %c0_i32, %c0_i32_0 : i32, i32
  }
  func.func @transform_7(%arg0: i32) -> (i32, i32) {
    %c0_i32 = arith.constant 0 : i32
    %c0_i32_0 = arith.constant 0 : i32
    %c0_i32_1 = arith.constant 0 : i32
    return %c0_i32, %c0_i32_0 : i32, i32
  }
  func.func @transform_8(%arg0: i32) -> (i32, i32) {
    %c0_i32 = arith.constant 0 : i32
    %c0_i32_0 = arith.constant 0 : i32
    %c0_i32_1 = arith.constant 0 : i32
    return %c0_i32, %c0_i32_0 : i32, i32
  }
  func.func @transform_9(%arg0: i32) -> (i32, i32) {
    %c0_i32 = arith.constant 0 : i32
    %c0_i32_0 = arith.constant 0 : i32
    %c0_i32_1 = arith.constant 0 : i32
    return %c0_i32, %c0_i32_0 : i32, i32
  }
  func.func @transform_10(%arg0: i32) -> (i32, i32) {
    %c0_i32 = arith.constant 0 : i32
    %c0_i32_0 = arith.constant 0 : i32
    %c0_i32_1 = arith.constant 0 : i32
    return %c0_i32, %c0_i32_0 : i32, i32
  }
  func.func @transform_11(%arg0: i32) -> (i32, i32) {
    %c0_i32 = arith.constant 0 : i32
    %c0_i32_0 = arith.constant 0 : i32
    %c0_i32_1 = arith.constant 0 : i32
    return %c0_i32, %c0_i32_0 : i32, i32
  }
  func.func @transform_12(%arg0: i32) -> (i32, i32) {
    %c0_i32 = arith.constant 0 : i32
    %c0_i32_0 = arith.constant 0 : i32
    %c0_i32_1 = arith.constant 0 : i32
    return %c0_i32, %c0_i32_0 : i32, i32
  }
  func.func @transform_13(%arg0: i32) -> (i32, i32) {
    %c0_i32 = arith.constant 0 : i32
    %c0_i32_0 = arith.constant 0 : i32
    %c0_i32_1 = arith.constant 0 : i32
    return %c0_i32, %c0_i32_0 : i32, i32
  }
  func.func @transform_14(%arg0: i32) -> (i32, i32, i32) {
    %c0_i32 = arith.constant 0 : i32
    %c0_i32_0 = arith.constant 0 : i32
    %c0_i32_1 = arith.constant 0 : i32
    return %arg0, %c0_i32, %c0_i32_0 : i32, i32, i32
  }
  func.func @transform_15(%arg0: i32) -> (i32, i32, i32) {
    %c0_i32 = arith.constant 0 : i32
    %c0_i32_0 = arith.constant 0 : i32
    %c0_i32_1 = arith.constant 0 : i32
    return %arg0, %c0_i32, %c0_i32_0 : i32, i32, i32
  }
}

module attributes {stable_mosaic.version = 11 : i64} {
  func.func @_mask_decode_kernel(%arg0: i32, %arg1: memref<32x32xf32, #tpu.memory_space<vmem>>, %arg2: memref<32x64xf32, #tpu.memory_space<vmem>>, %arg3: memref<1x1xf32, #tpu.memory_space<vmem>>, %arg4: memref<32x32xf32, #tpu.memory_space<vmem>>, %arg5: memref<1x32xf32, #tpu.memory_space<vmem>>, %arg6: memref<32x64xf32, #tpu.memory_space<vmem>>, %arg7: memref<64x16xf32, #tpu.memory_space<vmem>>, %arg8: memref<32x16xf32, #tpu.memory_space<vmem>>) attributes {dimension_semantics = [#tpu.dimension_semantics<parallel>], iteration_bounds = array<i64: 1>, scalar_prefetch = 0 : i64, scratch_operands = 0 : i64, tpu.core_type = #tpu.core_type<tc>, window_params = [{transform_indices = @transform_0, window_bounds = array<i64: 32, 32>}, {transform_indices = @transform_1, window_bounds = array<i64: 32, 64>}, {pipeline_mode = #tpu.pipeline_mode<synchronous>, transform_indices = @transform_2, window_bounds = array<i64: 1, 1>}, {pipeline_mode = #tpu.pipeline_mode<synchronous>, transform_indices = @transform_3, window_bounds = array<i64: 32, 32>}, {pipeline_mode = #tpu.pipeline_mode<synchronous>, transform_indices = @transform_4, window_bounds = array<i64: 1, 32>}, {pipeline_mode = #tpu.pipeline_mode<synchronous>, transform_indices = @transform_5, window_bounds = array<i64: 32, 64>}, {pipeline_mode = #tpu.pipeline_mode<synchronous>, transform_indices = @transform_6, window_bounds = array<i64: 64, 16>}, {transform_indices = @transform_7, window_bounds = array<i64: 32, 16>}]} {
    %c0 = arith.constant 0 : index
    %c0_0 = arith.constant 0 : index
    %0 = vector.load %arg1[%c0, %c0_0] : memref<32x32xf32, #tpu.memory_space<vmem>>, vector<32x32xf32>
    %c0_1 = arith.constant 0 : index
    %c0_2 = arith.constant 0 : index
    %1 = vector.load %arg3[%c0_1, %c0_2] : memref<1x1xf32, #tpu.memory_space<vmem>>, vector<1x1xf32>
    %cst = arith.constant 0.000000e+00 : f32
    %2 = vector.broadcast %cst : f32 to vector<32x32xf32>
    %3 = arith.cmpf oge, %0, %2 : vector<32x32xf32>
    %4 = vector.broadcast %1 : vector<1x1xf32> to vector<32x32xf32>
    %5 = arith.mulf %4, %0 : vector<32x32xf32>
    %6 = arith.select %3, %0, %5 : vector<32x32xi1>, vector<32x32xf32>
    %c0_3 = arith.constant 0 : index
    %c0_4 = arith.constant 0 : index
    %7 = vector.load %arg6[%c0_3, %c0_4] : memref<32x64xf32, #tpu.memory_space<vmem>>, vector<32x64xf32>
    %cst_5 = arith.constant dense<0.000000e+00> : vector<32x64xf32>
    %8 = tpu.matmul %6, %7, %cst_5 {dimension_numbers = #tpu.dot_dimension_numbers<[1], [0], [0], [1], [0, 0, 1, 1], [], []>} : vector<32x32xf32>, vector<32x64xf32>, vector<32x64xf32> -> vector<32x64xf32>
    %9 = arith.negf %8 : vector<32x64xf32>
    %10 = math.exp %9 : vector<32x64xf32>
    %cst_6 = arith.constant 1.000000e+00 : f32
    %11 = vector.broadcast %cst_6 : f32 to vector<32x64xf32>
    %12 = arith.addf %11, %10 : vector<32x64xf32>
    %13 = arith.divf %11, %12 : vector<32x64xf32>
    %c0_7 = arith.constant 0 : index
    %c0_8 = arith.constant 0 : index
    %14 = vector.load %arg2[%c0_7, %c0_8] : memref<32x64xf32, #tpu.memory_space<vmem>>, vector<32x64xf32>
    %15 = arith.mulf %13, %14 : vector<32x64xf32>
    %c0_9 = arith.constant 0 : index
    %c0_10 = arith.constant 0 : index
    %16 = vector.load %arg7[%c0_9, %c0_10] : memref<64x16xf32, #tpu.memory_space<vmem>>, vector<64x16xf32>
    %cst_11 = arith.constant dense<0.000000e+00> : vector<32x16xf32>
    %17 = tpu.matmul %15, %16, %cst_11 {dimension_numbers = #tpu.dot_dimension_numbers<[1], [0], [0], [1], [0, 0, 1, 1], [], []>} : vector<32x64xf32>, vector<64x16xf32>, vector<32x16xf32> -> vector<32x16xf32>
    %c0_12 = arith.constant 0 : index
    %c0_13 = arith.constant 0 : index
    %18 = vector.load %arg8[%c0_12, %c0_13] : memref<32x16xf32, #tpu.memory_space<vmem>>, vector<32x16xf32>
    tpu.vector_store %arg8[%c0_12, %c0_13], %17 {strides = array<i32>} : memref<32x16xf32, #tpu.memory_space<vmem>>, vector<32x16xf32>,
    return
  }
  func.func @transform_0(%arg0: i32) -> (i32, i32) {
    %c0_i32 = arith.constant 0 : i32
    %c0_i32_0 = arith.constant 0 : i32
    return %arg0, %c0_i32 : i32, i32
  }
  func.func @transform_1(%arg0: i32) -> (i32, i32) {
    %c0_i32 = arith.constant 0 : i32
    %c0_i32_0 = arith.constant 0 : i32
    return %arg0, %c0_i32 : i32, i32
  }
  func.func @transform_2(%arg0: i32) -> (i32, i32) {
    %c0_i32 = arith.constant 0 : i32
    %c0_i32_0 = arith.constant 0 : i32
    %c0_i32_1 = arith.constant 0 : i32
    return %c0_i32, %c0_i32_0 : i32, i32
  }
  func.func @transform_3(%arg0: i32) -> (i32, i32) {
    %c0_i32 = arith.constant 0 : i32
    %c0_i32_0 = arith.constant 0 : i32
    %c0_i32_1 = arith.constant 0 : i32
    return %c0_i32, %c0_i32_0 : i32, i32
  }
  func.func @transform_4(%arg0: i32) -> (i32, i32) {
    %c0_i32 = arith.constant 0 : i32
    %c0_i32_0 = arith.constant 0 : i32
    %c0_i32_1 = arith.constant 0 : i32
    return %c0_i32, %c0_i32_0 : i32, i32
  }
  func.func @transform_5(%arg0: i32) -> (i32, i32) {
    %c0_i32 = arith.constant 0 : i32
    %c0_i32_0 = arith.constant 0 : i32
    %c0_i32_1 = arith.constant 0 : i32
    return %c0_i32, %c0_i32_0 : i32, i32
  }
  func.func @transform_6(%arg0: i32) -> (i32, i32) {
    %c0_i32 = arith.constant 0 : i32
    %c0_i32_0 = arith.constant 0 : i32
    %c0_i32_1 = arith.constant 0 : i32
    return %c0_i32, %c0_i32_0 : i32, i32
  }
  func.func @transform_7(%arg0: i32) -> (i32, i32) {
    %c0_i32 = arith.constant 0 : i32
    %c0_i32_0 = arith.constant 0 : i32
    return %arg0, %c0_i32 : i32, i32
  }
}

</mosaic_0001>

<llo_original>
// kernel: _lambda_.7
$region0: #{_lambda_.7}
  #allocation0 [shape = 'u32[]', space=smem, size = 0x4, offset = 0x4, fixed_abs, tag = 'smem constant byte address 0x4 - core index']
  #allocation1 [shape = 'u32[144,128]{1,0:T(1,128)}', space=vmem, size = 0x12000, scoped, tag = 'internal scratch']
  #allocation2 [shape = 'f32[18,64]{1,0:T(8,128)}', space=vmem, size = 0x3000, scoped, tag = 'scratch operand']
  #allocation3 [shape = 'f32[1,1]{1,0:T(1,128)S(1)}', space=vmem, size = 0x200, scoped, tag = 'scoped memory for _lambda_.7']
  #allocation4 [shape = 'f32[1,1]{1,0:T(1,128)S(1)}', space=vmem, size = 0x200, scoped, tag = 'scoped memory for _lambda_.7']
  %s0 = inlined_call_operand.vmem [shape: f32[2,16,32], index: 0, kind: input, shape index: {}]
  %s1 = inlined_call_operand.vmem [shape: f32[2,16,32], index: 1, kind: input, shape index: {}]
  %s2 = inlined_call_operand.vmem [shape: f32[32,64], index: 2, kind: input, shape index: {}]
  %s3 = inlined_call_operand.vmem [shape: f32[1,64], index: 3, kind: input, shape index: {}]
  %s4 = inlined_call_operand.<no memory space> [shape: f32[1,1], index: 4, kind: input, shape index: {}]
  %s5 = inlined_call_operand.vmem [shape: f32[1,64], index: 5, kind: input, shape index: {}]
  %s6 = inlined_call_operand.vmem [shape: f32[1,64], index: 6, kind: input, shape index: {}]
  %s7 = inlined_call_operand.vmem [shape: f32[3,64], index: 7, kind: input, shape index: {}]
  %s8 = inlined_call_operand.vmem [shape: f32[1,64], index: 8, kind: input, shape index: {}]
  %s9 = inlined_call_operand.<no memory space> [shape: f32[1,1], index: 9, kind: input, shape index: {}]
  %s10 = inlined_call_operand.vmem [shape: f32[1,64], index: 10, kind: input, shape index: {}]
  %s11 = inlined_call_operand.vmem [shape: f32[1,64], index: 11, kind: input, shape index: {}]
  %s12 = inlined_call_operand.vmem [shape: f32[64,64], index: 12, kind: input, shape index: {}]
  %s13 = inlined_call_operand.vmem [shape: f32[1,64], index: 13, kind: input, shape index: {}]
  %s14 = inlined_call_operand.vmem [shape: f32[2,16,32], index: 14, kind: output, shape index: {0}]
  %s15 = inlined_call_operand.vmem [shape: f32[2,16,32], index: 15, kind: output, shape index: {1}]
  %16 = xla_tuple %s14, %s15
  %s17 = sld [smem:[#allocation0]]
  $region97: #{_lambda_.7} parent=0
    _
  %s19 = ssub.s32 1, %s17
  %s20 = scalar_select 0, %s19, %s17
  %v21 = vstv %s4
  %22 = vst [vmem:[#allocation3] sm:$0x1] %v21
  %v23 = vstv %s9
  %24 = vst [vmem:[#allocation4] sm:$0x1] %v23
  loop: start=0, step=1, limit=4
  $region2: #{_lambda_.7} parent=0 // loop_pre_header
    _
  $region3: #{_lambda_.7} parent=0 // loop_header
    %s26 = sphi 0, %s30
    %p27 = scmp.ge.s32.totalorder %s26, 4
    %s36 = sphi 0, %s38
    %s39 = sphi 0, %s36
    %s40 = sphi 0, %s39
    %s56 = sphi 0, %s40
    %s62 = sphi 0, %s64
    %s65 = sphi 0, %s62
    %s66 = sphi 0, %s65
    %s82 = sphi 0, %s66
    %s86 = sphi 0, %s86
    %s88 = sphi 0, %s86
    %s89 = sphi 0, %s88
    %s103 = sphi 0, %s89
    %s107 = sphi 0, %s107
    %s109 = sphi 0, %s107
    %s110 = sphi 0, %s109
    %s124 = sphi 0, %s110
    %s128 = sphi 0, %s128
    %s130 = sphi 0, %s128
    %s131 = sphi 0, %s130
    %s145 = sphi 0, %s131
    %s149 = sphi 0, %s149
    %s151 = sphi 0, %s149
    %s152 = sphi 0, %s151
    %s166 = sphi 0, %s152
    %s170 = sphi 0, %s170
    %s172 = sphi 0, %s170
    %s173 = sphi 0, %s172
    %s187 = sphi 0, %s173
    %s191 = sphi 0, %s191
    %s193 = sphi 0, %s191
    %s194 = sphi 0, %s193
    %s208 = sphi 0, %s194
    %s212 = sphi 0, %s212
    %s214 = sphi 0, %s212
    %s215 = sphi 0, %s214
    %s229 = sphi 0, %s215
    %s233 = sphi 0, %s233
    %s235 = sphi 0, %s233
    %s236 = sphi 0, %s235
    %s250 = sphi 0, %s236
    %s254 = sphi 0, %s254
    %s256 = sphi 0, %s254
    %s257 = sphi 0, %s256
    %s271 = sphi 0, %s257
    %s275 = sphi 0, %s275
    %s277 = sphi 0, %s275
    %s278 = sphi 0, %s277
    %s292 = sphi 0, %s278
    %s296 = sphi 0, %s296
    %s298 = sphi 0, %s296
    %s299 = sphi 0, %s298
    %s313 = sphi 0, %s299
    %s317 = sphi 0, %s317
    %s319 = sphi 0, %s317
    %s320 = sphi 0, %s319
    %s334 = sphi 0, %s320
    %s340 = sphi 0, %s342
    %s343 = sphi 0, %s340
    %s344 = sphi 0, %s343
    %s360 = sphi 0, %s344
    %s366 = sphi 0, %s368
    %s369 = sphi 0, %s366
    %s370 = sphi 0, %s369
    %s386 = sphi 0, %s370
  $region4: #{_lambda_.7} parent=0 // loop_header_branch
    %29 = sbr.rel (%p27) target = $region8
  $region5: #{_lambda_.7} parent=0 // loop_body
    %s31 = ssub.s32 %s26, 1
    %s32 = ssub.s32 %s26, 2
    %s33 = sadd.s32 %s26, 1
    %s34 = ssub.s32 %s26, %s33
    %p35 = scmp.eq.s32.totalorder %s34, 0
    %s37 = sadd.s32 %s36, 1
    %s38 = scalar_select %p35, %s36, %s37
    %p41 = pneg %p35
    %p42 = scmp.eq.s32.totalorder %s26, 1
    %p43 = por %p41, %p42
    %p44 = scmp.ne.s32.totalorder %s36, %s39
    %p45 = scmp.eq.s32.totalorder %s26, 0
    %p46 = por %p44, %p45
    %p47 = scmp.ne.s32.totalorder %s36, %s39
    %p48 = scmp.eq.s32.totalorder %s31, 1
    %p49 = por %p47, %p48
    %p50 = scmp.ne.s32.totalorder %s39, %s40
    %p51 = scmp.eq.s32.totalorder %s31, 0
    %p52 = por %p50, %p51
    %p53 = scmp.ne.s32.totalorder %s39, %s40
    %p54 = scmp.eq.s32.totalorder %s32, 1
    %p55 = por %p53, %p54
    %p57 = scmp.ne.s32.totalorder %s40, %s56
    %p58 = scmp.eq.s32.totalorder %s32, 0
    %p59 = por %p57, %p58
    %s60 = ssub.s32 %s26, %s33
    %p61 = scmp.eq.s32.totalorder %s60, 0
    %s63 = sadd.s32 %s62, 1
    %s64 = scalar_select %p61, %s62, %s63
    %p67 = pneg %p61
    %p68 = scmp.eq.s32.totalorder %s26, 1
    %p69 = por %p67, %p68
    %p70 = scmp.ne.s32.totalorder %s62, %s65
    %p71 = scmp.eq.s32.totalorder %s26, 0
    %p72 = por %p70, %p71
    %p73 = scmp.ne.s32.totalorder %s62, %s65
    %p74 = scmp.eq.s32.totalorder %s31, 1
    %p75 = por %p73, %p74
    %p76 = scmp.ne.s32.totalorder %s65, %s66
    %p77 = scmp.eq.s32.totalorder %s31, 0
    %p78 = por %p76, %p77
    %p79 = scmp.ne.s32.totalorder %s65, %s66
    %p80 = scmp.eq.s32.totalorder %s32, 1
    %p81 = por %p79, %p80
    %p83 = scmp.ne.s32.totalorder %s66, %s82
    %p84 = scmp.eq.s32.totalorder %s32, 0
    %p85 = por %p83, %p84
    %s87 = sadd.s32 %s86, 1
    %p90 = scmp.eq.s32.totalorder %s26, 1
    %p91 = scmp.ne.s32.totalorder %s86, %s88
    %p92 = scmp.eq.s32.totalorder %s26, 0
    %p93 = por %p91, %p92
    %p94 = scmp.ne.s32.totalorder %s86, %s88
    %p95 = scmp.eq.s32.totalorder %s31, 1
    %p96 = por %p94, %p95
    %p97 = scmp.ne.s32.totalorder %s88, %s89
    %p98 = scmp.eq.s32.totalorder %s31, 0
    %p99 = por %p97, %p98
    %p100 = scmp.ne.s32.totalorder %s88, %s89
    %p101 = scmp.eq.s32.totalorder %s32, 1
    %p102 = por %p100, %p101
    %p104 = scmp.ne.s32.totalorder %s89, %s103
    %p105 = scmp.eq.s32.totalorder %s32, 0
    %p106 = por %p104, %p105
    %s108 = sadd.s32 %s107, 1
    %p111 = scmp.eq.s32.totalorder %s26, 1
    %p112 = scmp.ne.s32.totalorder %s107, %s109
    %p113 = scmp.eq.s32.totalorder %s26, 0
    %p114 = por %p112, %p113
    %p115 = scmp.ne.s32.totalorder %s107, %s109
    %p116 = scmp.eq.s32.totalorder %s31, 1
    %p117 = por %p115, %p116
    %p118 = scmp.ne.s32.totalorder %s109, %s110
    %p119 = scmp.eq.s32.totalorder %s31, 0
    %p120 = por %p118, %p119
    %p121 = scmp.ne.s32.totalorder %s109, %s110
    %p122 = scmp.eq.s32.totalorder %s32, 1
    %p123 = por %p121, %p122
    %p125 = scmp.ne.s32.totalorder %s110, %s124
    %p126 = scmp.eq.s32.totalorder %s32, 0
    %p127 = por %p125, %p126
    %s129 = sadd.s32 %s128, 1
    %p132 = scmp.eq.s32.totalorder %s26, 1
    %p133 = scmp.ne.s32.totalorder %s128, %s130
    %p134 = scmp.eq.s32.totalorder %s26, 0
    %p135 = por %p133, %p134
    %p136 = scmp.ne.s32.totalorder %s128, %s130
    %p137 = scmp.eq.s32.totalorder %s31, 1
    %p138 = por %p136, %p137
    %p139 = scmp.ne.s32.totalorder %s130, %s131
    %p140 = scmp.eq.s32.totalorder %s31, 0
    %p141 = por %p139, %p140
    %p142 = scmp.ne.s32.totalorder %s130, %s131
    %p143 = scmp.eq.s32.totalorder %s32, 1
    %p144 = por %p142, %p143
    %p146 = scmp.ne.s32.totalorder %s131, %s145
    %p147 = scmp.eq.s32.totalorder %s32, 0
    %p148 = por %p146, %p147
    %s150 = sadd.s32 %s149, 1
    %p153 = scmp.eq.s32.totalorder %s26, 1
    %p154 = scmp.ne.s32.totalorder %s149, %s151
    %p155 = scmp.eq.s32.totalorder %s26, 0
    %p156 = por %p154, %p155
    %p157 = scmp.ne.s32.totalorder %s149, %s151
    %p158 = scmp.eq.s32.totalorder %s31, 1
    %p159 = por %p157, %p158
    %p160 = scmp.ne.s32.totalorder %s151, %s152
    %p161 = scmp.eq.s32.totalorder %s31, 0
    %p162 = por %p160, %p161
    %p163 = scmp.ne.s32.totalorder %s151, %s152
    %p164 = scmp.eq.s32.totalorder %s32, 1
    %p165 = por %p163, %p164
    %p167 = scmp.ne.s32.totalorder %s152, %s166
    %p168 = scmp.eq.s32.totalorder %s32, 0
    %p169 = por %p167, %p168
    %s171 = sadd.s32 %s170, 1
    %p174 = scmp.eq.s32.totalorder %s26, 1
    %p175 = scmp.ne.s32.totalorder %s170, %s172
    %p176 = scmp.eq.s32.totalorder %s26, 0
    %p177 = por %p175, %p176
    %p178 = scmp.ne.s32.totalorder %s170, %s172
    %p179 = scmp.eq.s32.totalorder %s31, 1
    %p180 = por %p178, %p179
    %p181 = scmp.ne.s32.totalorder %s172, %s173
    %p182 = scmp.eq.s32.totalorder %s31, 0
    %p183 = por %p181, %p182
    %p184 = scmp.ne.s32.totalorder %s172, %s173
    %p185 = scmp.eq.s32.totalorder %s32, 1
    %p186 = por %p184, %p185
    %p188 = scmp.ne.s32.totalorder %s173, %s187
    %p189 = scmp.eq.s32.totalorder %s32, 0
    %p190 = por %p188, %p189
    %s192 = sadd.s32 %s191, 1
    %p195 = scmp.eq.s32.totalorder %s26, 1
    %p196 = scmp.ne.s32.totalorder %s191, %s193
    %p197 = scmp.eq.s32.totalorder %s26, 0
    %p198 = por %p196, %p197
    %p199 = scmp.ne.s32.totalorder %s191, %s193
    %p200 = scmp.eq.s32.totalorder %s31, 1
    %p201 = por %p199, %p200
    %p202 = scmp.ne.s32.totalorder %s193, %s194
    %p203 = scmp.eq.s32.totalorder %s31, 0
    %p204 = por %p202, %p203
    %p205 = scmp.ne.s32.totalorder %s193, %s194
    %p206 = scmp.eq.s32.totalorder %s32, 1
    %p207 = por %p205, %p206
    %p209 = scmp.ne.s32.totalorder %s194, %s208
    %p210 = scmp.eq.s32.totalorder %s32, 0
    %p211 = por %p209, %p210
    %s213 = sadd.s32 %s212, 1
    %p216 = scmp.eq.s32.totalorder %s26, 1
    %p217 = scmp.ne.s32.totalorder %s212, %s214
    %p218 = scmp.eq.s32.totalorder %s26, 0
    %p219 = por %p217, %p218
    %p220 = scmp.ne.s32.totalorder %s212, %s214
    %p221 = scmp.eq.s32.totalorder %s31, 1
    %p222 = por %p220, %p221
    %p223 = scmp.ne.s32.totalorder %s214, %s215
    %p224 = scmp.eq.s32.totalorder %s31, 0
    %p225 = por %p223, %p224
    %p226 = scmp.ne.s32.totalorder %s214, %s215
    %p227 = scmp.eq.s32.totalorder %s32, 1
    %p228 = por %p226, %p227
    %p230 = scmp.ne.s32.totalorder %s215, %s229
    %p231 = scmp.eq.s32.totalorder %s32, 0
    %p232 = por %p230, %p231
    %s234 = sadd.s32 %s233, 1
    %p237 = scmp.eq.s32.totalorder %s26, 1
    %p238 = scmp.ne.s32.totalorder %s233, %s235
    %p239 = scmp.eq.s32.totalorder %s26, 0
    %p240 = por %p238, %p239
    %p241 = scmp.ne.s32.totalorder %s233, %s235
    %p242 = scmp.eq.s32.totalorder %s31, 1
    %p243 = por %p241, %p242
    %p244 = scmp.ne.s32.totalorder %s235, %s236
    %p245 = scmp.eq.s32.totalorder %s31, 0
    %p246 = por %p244, %p245
    %p247 = scmp.ne.s32.totalorder %s235, %s236
    %p248 = scmp.eq.s32.totalorder %s32, 1
    %p249 = por %p247, %p248
    %p251 = scmp.ne.s32.totalorder %s236, %s250
    %p252 = scmp.eq.s32.totalorder %s32, 0
    %p253 = por %p251, %p252
    %s255 = sadd.s32 %s254, 1
    %p258 = scmp.eq.s32.totalorder %s26, 1
    %p259 = scmp.ne.s32.totalorder %s254, %s256
    %p260 = scmp.eq.s32.totalorder %s26, 0
    %p261 = por %p259, %p260
    %p262 = scmp.ne.s32.totalorder %s254, %s256
    %p263 = scmp.eq.s32.totalorder %s31, 1
    %p264 = por %p262, %p263
    %p265 = scmp.ne.s32.totalorder %s256, %s257
    %p266 = scmp.eq.s32.totalorder %s31, 0
    %p267 = por %p265, %p266
    %p268 = scmp.ne.s32.totalorder %s256, %s257
    %p269 = scmp.eq.s32.totalorder %s32, 1
    %p270 = por %p268, %p269
    %p272 = scmp.ne.s32.totalorder %s257, %s271
    %p273 = scmp.eq.s32.totalorder %s32, 0
    %p274 = por %p272, %p273
    %s276 = sadd.s32 %s275, 1
    %p279 = scmp.eq.s32.totalorder %s26, 1
    %p280 = scmp.ne.s32.totalorder %s275, %s277
    %p281 = scmp.eq.s32.totalorder %s26, 0
    %p282 = por %p280, %p281
    %p283 = scmp.ne.s32.totalorder %s275, %s277
    %p284 = scmp.eq.s32.totalorder %s31, 1
    %p285 = por %p283, %p284
    %p286 = scmp.ne.s32.totalorder %s277, %s278
    %p287 = scmp.eq.s32.totalorder %s31, 0
    %p288 = por %p286, %p287
    %p289 = scmp.ne.s32.totalorder %s277, %s278
    %p290 = scmp.eq.s32.totalorder %s32, 1
    %p291 = por %p289, %p290
    %p293 = scmp.ne.s32.totalorder %s278, %s292
    %p294 = scmp.eq.s32.totalorder %s32, 0
    %p295 = por %p293, %p294
    %s297 = sadd.s32 %s296, 1
    %p300 = scmp.eq.s32.totalorder %s26, 1
    %p301 = scmp.ne.s32.totalorder %s296, %s298
    %p302 = scmp.eq.s32.totalorder %s26, 0
    %p303 = por %p301, %p302
    %p304 = scmp.ne.s32.totalorder %s296, %s298
    %p305 = scmp.eq.s32.totalorder %s31, 1
    %p306 = por %p304, %p305
    %p307 = scmp.ne.s32.totalorder %s298, %s299
    %p308 = scmp.eq.s32.totalorder %s31, 0
    %p309 = por %p307, %p308
    %p310 = scmp.ne.s32.totalorder %s298, %s299
    %p311 = scmp.eq.s32.totalorder %s32, 1
    %p312 = por %p310, %p311
    %p314 = scmp.ne.s32.totalorder %s299, %s313
    %p315 = scmp.eq.s32.totalorder %s32, 0
    %p316 = por %p314, %p315
    %s318 = sadd.s32 %s317, 1
    %p321 = scmp.eq.s32.totalorder %s26, 1
    %p322 = scmp.ne.s32.totalorder %s317, %s319
    %p323 = scmp.eq.s32.totalorder %s26, 0
    %p324 = por %p322, %p323
    %p325 = scmp.ne.s32.totalorder %s317, %s319
    %p326 = scmp.eq.s32.totalorder %s31, 1
    %p327 = por %p325, %p326
    %p328 = scmp.ne.s32.totalorder %s319, %s320
    %p329 = scmp.eq.s32.totalorder %s31, 0
    %p330 = por %p328, %p329
    %p331 = scmp.ne.s32.totalorder %s319, %s320
    %p332 = scmp.eq.s32.totalorder %s32, 1
    %p333 = por %p331, %p332
    %p335 = scmp.ne.s32.totalorder %s320, %s334
    %p336 = scmp.eq.s32.totalorder %s32, 0
    %p337 = por %p335, %p336
    %s338 = ssub.s32 %s26, %s33
    %p339 = scmp.eq.s32.totalorder %s338, 0
    %s341 = sadd.s32 %s340, 1
    %s342 = scalar_select %p339, %s340, %s341
    %p345 = pneg %p339
    %p346 = scmp.eq.s32.totalorder %s26, 1
    %p347 = por %p345, %p346
    %p348 = scmp.ne.s32.totalorder %s340, %s343
    %p349 = scmp.eq.s32.totalorder %s26, 0
    %p350 = por %p348, %p349
    %p351 = scmp.ne.s32.totalorder %s340, %s343
    %p352 = scmp.eq.s32.totalorder %s31, 1
    %p353 = por %p351, %p352
    %p354 = scmp.ne.s32.totalorder %s343, %s344
    %p355 = scmp.eq.s32.totalorder %s31, 0
    %p356 = por %p354, %p355
    %p357 = scmp.ne.s32.totalorder %s343, %s344
    %p358 = scmp.eq.s32.totalorder %s32, 1
    %p359 = por %p357, %p358
    %p361 = scmp.ne.s32.totalorder %s344, %s360
    %p362 = scmp.eq.s32.totalorder %s32, 0
    %p363 = por %p361, %p362
    %s364 = ssub.s32 %s26, %s33
    %p365 = scmp.eq.s32.totalorder %s364, 0
    %s367 = sadd.s32 %s366, 1
    %s368 = scalar_select %p365, %s366, %s367
    %p371 = pneg %p365
    %p372 = scmp.eq.s32.totalorder %s26, 1
    %p373 = por %p371, %p372
    %p374 = scmp.ne.s32.totalorder %s366, %s369
    %p375 = scmp.eq.s32.totalorder %s26, 0
    %p376 = por %p374, %p375
    %p377 = scmp.ne.s32.totalorder %s366, %s369
    %p378 = scmp.eq.s32.totalorder %s31, 1
    %p379 = por %p377, %p378
    %p380 = scmp.ne.s32.totalorder %s369, %s370
    %p381 = scmp.eq.s32.totalorder %s31, 0
    %p382 = por %p380, %p381
    %p383 = scmp.ne.s32.totalorder %s369, %s370
    %p384 = scmp.eq.s32.totalorder %s32, 1
    %p385 = por %p383, %p384
    %p387 = scmp.ne.s32.totalorder %s370, %s386
    %p388 = scmp.eq.s32.totalorder %s32, 0
    %p389 = por %p387, %p388
    %p390 = scmp.le.s32.totalorder 1, %s26
    %p391 = scmp.lt.s32.totalorder %s26, 3
    %p392 = pnand %p390, %p391
    %p393 = pneg %p392
    // Predicated region
    $region9: #{_lambda_.7} parent=5 // pred_check
      _
    $region10: #{_lambda_.7} parent=5 // pred_check_branch
      %395 = sbr.rel (%p392) target = $region12
    $region11: #{_lambda_.7} parent=5 // pred_region
      %s396 = ssub.s32 %s26, 1
      // Predicated region
      $region13: #{_lambda_.7} parent=11 // pred_check
        %p397 = pneg %p99
      $region14: #{_lambda_.7} parent=11 // pred_check_branch
        %399 = sbr.rel (%p397) target = $region16
      $region15: #{_lambda_.7} parent=11 // pred_region
        _
      $region16: #{_lambda_.7} parent=11 // pred_fallthru
        _
      // Predicated region
      $region17: #{_lambda_.7} parent=11 // pred_check
        %p400 = pneg %p120
      $region18: #{_lambda_.7} parent=11 // pred_check_branch
        %402 = sbr.rel (%p400) target = $region20
      $region19: #{_lambda_.7} parent=11 // pred_region
        _
      $region20: #{_lambda_.7} parent=11 // pred_fallthru
        _
      // Predicated region
      $region21: #{_lambda_.7} parent=11 // pred_check
        %p403 = pneg %p141
      $region22: #{_lambda_.7} parent=11 // pred_check_branch
        %405 = sbr.rel (%p403) target = $region24
      $region23: #{_lambda_.7} parent=11 // pred_region
        _
      $region24: #{_lambda_.7} parent=11 // pred_fallthru
        _
      // Predicated region
      $region25: #{_lambda_.7} parent=11 // pred_check
        %p406 = pneg %p162
      $region26: #{_lambda_.7} parent=11 // pred_check_branch
        %408 = sbr.rel (%p406) target = $region28
      $region27: #{_lambda_.7} parent=11 // pred_region
        _
      $region28: #{_lambda_.7} parent=11 // pred_fallthru
        _
      // Predicated region
      $region29: #{_lambda_.7} parent=11 // pred_check
        %p409 = pneg %p183
      $region30: #{_lambda_.7} parent=11 // pred_check_branch
        %411 = sbr.rel (%p409) target = $region32
      $region31: #{_lambda_.7} parent=11 // pred_region
        _
      $region32: #{_lambda_.7} parent=11 // pred_fallthru
        _
      // Predicated region
      $region33: #{_lambda_.7} parent=11 // pred_check
        %p412 = pneg %p204
      $region34: #{_lambda_.7} parent=11 // pred_check_branch
        %414 = sbr.rel (%p412) target = $region36
      $region35: #{_lambda_.7} parent=11 // pred_region
        _
      $region36: #{_lambda_.7} parent=11 // pred_fallthru
        _
      // Predicated region
      $region37: #{_lambda_.7} parent=11 // pred_check
        %p415 = pneg %p225
      $region38: #{_lambda_.7} parent=11 // pred_check_branch
        %417 = sbr.rel (%p415) target = $region40
      $region39: #{_lambda_.7} parent=11 // pred_region
        _
      $region40: #{_lambda_.7} parent=11 // pred_fallthru
        _
      // Predicated region
      $region41: #{_lambda_.7} parent=11 // pred_check
        %p418 = pneg %p246
      $region42: #{_lambda_.7} parent=11 // pred_check_branch
        %420 = sbr.rel (%p418) target = $region44
      $region43: #{_lambda_.7} parent=11 // pred_region
        _
      $region44: #{_lambda_.7} parent=11 // pred_fallthru
        _
      // Predicated region
      $region45: #{_lambda_.7} parent=11 // pred_check
        %p421 = pneg %p267
      $region46: #{_lambda_.7} parent=11 // pred_check_branch
        %423 = sbr.rel (%p421) target = $region48
      $region47: #{_lambda_.7} parent=11 // pred_region
        _
      $region48: #{_lambda_.7} parent=11 // pred_fallthru
        _
      // Predicated region
      $region49: #{_lambda_.7} parent=11 // pred_check
        %p424 = pneg %p288
      $region50: #{_lambda_.7} parent=11 // pred_check_branch
        %426 = sbr.rel (%p424) target = $region52
      $region51: #{_lambda_.7} parent=11 // pred_region
        _
      $region52: #{_lambda_.7} parent=11 // pred_fallthru
        _
      // Predicated region
      $region53: #{_lambda_.7} parent=11 // pred_check
        %p427 = pneg %p309
      $region54: #{_lambda_.7} parent=11 // pred_check_branch
        %429 = sbr.rel (%p427) target = $region56
      $region55: #{_lambda_.7} parent=11 // pred_region
        _
      $region56: #{_lambda_.7} parent=11 // pred_fallthru
        _
      // Predicated region
      $region57: #{_lambda_.7} parent=11 // pred_check
        %p430 = pneg %p330
      $region58: #{_lambda_.7} parent=11 // pred_check_branch
        %432 = sbr.rel (%p430) target = $region60
      $region59: #{_lambda_.7} parent=11 // pred_region
        _
      $region60: #{_lambda_.7} parent=11 // pred_fallthru
        _
    $region12: #{_lambda_.7} parent=5 // pred_fallthru
      _
    %p433 = scmp.lt.s32.totalorder %s26, 2
    // Predicated region
    $region61: #{_lambda_.7} parent=5 // pred_check
      %p434 = pneg %p433
    $region62: #{_lambda_.7} parent=5 // pred_check_branch
      %436 = sbr.rel (%p434) target = $region64
    $region63: #{_lambda_.7} parent=5 // pred_region
      // Predicated region
      $region65: #{_lambda_.7} parent=63 // pred_check
        %p437 = pneg %p46
      $region66: #{_lambda_.7} parent=63 // pred_check_branch
        %439 = sbr.rel (%p437) target = $region68
      $region67: #{_lambda_.7} parent=63 // pred_region
        %p440 = scmp.lt.s32.totalorder %s26, 1
        %s441 = scalar_select %p440, %s26, 1
        %s442 = smul.addr %s441, 2
        %s443 = smul.addr %s442, 8
        %s444 = scalar_lea.vmem %s0, %s443
      $region68: #{_lambda_.7} parent=63 // pred_fallthru
        _
      // Predicated region
      $region69: #{_lambda_.7} parent=63 // pred_check
        %p445 = pneg %p72
      $region70: #{_lambda_.7} parent=63 // pred_check_branch
        %447 = sbr.rel (%p445) target = $region72
      $region71: #{_lambda_.7} parent=63 // pred_region
        %p448 = scmp.lt.s32.totalorder %s26, 1
        %s449 = scalar_select %p448, %s26, 1
        %s450 = smul.addr %s449, 2
        %s451 = smul.addr %s450, 8
        %s452 = scalar_lea.vmem %s1, %s451
      $region72: #{_lambda_.7} parent=63 // pred_fallthru
        _
    $region64: #{_lambda_.7} parent=5 // pred_fallthru
      _
    %p453 = scmp.le.s32.totalorder 1, %s26
    %p454 = scmp.lt.s32.totalorder %s26, 3
    %p455 = pnand %p453, %p454
    %p456 = pneg %p455
    // Predicated region
    $region73: #{_lambda_.7} parent=5 // pred_check
      _
    $region74: #{_lambda_.7} parent=5 // pred_check_branch
      %458 = sbr.rel (%p455) target = $region76
    $region75: #{_lambda_.7} parent=5 // pred_region
      %s459 = ssub.s32 %s26, 1
      %p460 = scmp.lt.s32.totalorder %s31, 1
      %s461 = scalar_select %p460, %s31, 1
      %s462 = smul.addr %s461, 2
      %s463 = smul.addr %s462, 8
      %s464 = scalar_lea.vmem %s0, %s463
      %p465 = pneg %p52
      %p466 = pneg %p49
      %p467 = scmp.lt.s32.totalorder %s31, 1
      %s468 = scalar_select %p467, %s31, 1
      %s469 = smul.addr %s468, 2
      %s470 = smul.addr %s469, 8
      %s471 = scalar_lea.vmem %s1, %s470
      %p472 = pneg %p78
      %p473 = pneg %p75
      %p474 = pneg %p99
      %p475 = pneg %p96
      %p476 = pneg %p120
      %p477 = pneg %p117
      %p478 = pneg %p141
      %p479 = pneg %p138
      %p480 = pneg %p162
      %p481 = pneg %p159
      %p482 = pneg %p183
      %p483 = pneg %p180
      %p484 = pneg %p204
      %p485 = pneg %p201
      %p486 = pneg %p225
      %p487 = pneg %p222
      %p488 = pneg %p246
      %p489 = pneg %p243
      %p490 = pneg %p267
      %p491 = pneg %p264
      %p492 = pneg %p288
      %p493 = pneg %p285
      %p494 = pneg %p309
      %p495 = pneg %p306
      %p496 = pneg %p330
      %p497 = pneg %p327
      %p498 = pneg %p356
      %p499 = pneg %p353
      %p500 = scmp.lt.s32.totalorder %s31, 1
      %s501 = scalar_select %p500, %s31, 1
      %s502 = smul.addr %s501, 2
      %s503 = smul.addr %s502, 8
      %s504 = scalar_lea.vmem %s14, %s503
      %p505 = pneg %p382
      %p506 = pneg %p379
      %p507 = scmp.lt.s32.totalorder %s31, 1
      %s508 = scalar_select %p507, %s31, 1
      %s509 = smul.addr %s508, 2
      %s510 = smul.addr %s509, 8
      %s511 = scalar_lea.vmem %s15, %s510
      %p512 = scmp.lt.s32.totalorder %s31, 1
      %s513 = scalar_select %p512, %s31, 1
      %s514 = smul.addr %s513, 2
      %s515 = smul.addr %s514, 8
      %s516 = scalar_lea.vmem %s0, %s515
      %p517 = scmp.lt.s32.totalorder %s31, 1
      %s518 = scalar_select %p517, %s31, 1
      %s519 = smul.addr %s518, 2
      %s520 = smul.addr %s519, 8
      %s521 = scalar_lea.vmem %s1, %s520
      %p522 = scmp.lt.s32.totalorder %s31, 1
      %s523 = scalar_select %p522, %s31, 1
      %s524 = smul.addr %s523, 2
      %s525 = smul.addr %s524, 8
      %s526 = scalar_lea.vmem %s14, %s525
      %p527 = scmp.lt.s32.totalorder %s31, 1
      %s528 = scalar_select %p527, %s31, 1
      %s529 = smul.addr %s528, 2
      %s530 = smul.addr %s529, 8
      %s531 = scalar_lea.vmem %s15, %s530
      %v532 = vld [vmem:[#allocation3] sm:$0x1]
      %v533 = vld [vmem:[#allocation4] sm:$0x1]
      %v534 = vld [vmem:[%s516] sm:$0xff]
      %v535 = vld [vmem:[%s516 + $0x8] sm:$0xff]
      %v536 = vld [vmem:[%s2] sm:$0xff]
      %v537 = vld [vmem:[%s2 + $0x8] sm:$0xff]
      %v538 = vld [vmem:[%s2 + $0x10] sm:$0xff]
      %v539 = vld [vmem:[%s2 + $0x18] sm:$0xff]
      %v540 = vld [vmem:[%s3] sm:$0x1]
      %v542 = vlaneseq
      %v543 = vshrl.u32 %v542, 7
      %v544 = vsub.s32 0, %v543
      %v545 = vrot.slane %v540, %v544
      %vm547 = vcmask 261120
      %v549 = vsel %vm547, %v534, 0
      %v552 = vsel %vm547, %v535, 0
      %554 = vmatprep.subr.mxu0 0.0
      %555 = vmatpush1.msra.mxu0 0.0
      %556 = vmatprep.subr.mxu0 0.0
      %557 = vmatpush1.msra.mxu0 0.0
      %558 = vmatprep.subr.mxu0 0.0
      %559 = vmatpush1.msra.mxu0 0.0
      %560 = vmatprep.subr.mxu0 0.0
      %561 = vmatpush1.msra.mxu0 0.0
      %562 = vmatprep.subr.mxu0 0.0
      %563 = vmatpush1.msra.mxu0 0.0
      %564 = vmatprep.subr.mxu0 0.0
      %565 = vmatpush1.msra.mxu0 0.0
      %566 = vmatprep.subr.mxu0 0.0
      %567 = vmatpush1.msra.mxu0 0.0
      %568 = vmatprep.subr.mxu0 0.0
      %569 = vmatpush1.msra.mxu0 0.0
      %570 = vmatprep.subr.mxu0 0.0
      %571 = vmatpush1.msra.mxu0 0.0
      %572 = vmatprep.subr.mxu0 0.0
      %573 = vmatpush1.msra.mxu0 0.0
      %574 = vmatprep.subr.mxu0 0.0
      %575 = vmatpush1.msra.mxu0 0.0
      %576 = vmatprep.subr.mxu0 0.0
      %577 = vmatpush1.msra.mxu0 0.0
      %578 = vmatprep.subr.mxu0 0.0
      %579 = vmatpush1.msra.mxu0 %v539
      %580 = vmatprep.subr.mxu0 0.0
      %581 = vmatpush1.msra.mxu0 %v538
      %582 = vmatprep.subr.mxu0 0.0
      %583 = vmatpush1.msra.mxu0 %v537
      %584 = vmatprep.subr.mxu0 0.0
      %585 = vmatpush1.msra.mxu0 %v536
      %586 = vmatprep.subr.mxu0 0.0
      %587 = vmatpush2.msra.mxu0 0.0
      %588 = vmatprep.subr.mxu0 0.0
      %589 = vmatpush2.msra.mxu0 0.0
      %590 = vmatprep.subr.mxu0 0.0
      %591 = vmatpush2.msra.mxu0 0.0
      %592 = vmatprep.subr.mxu0 0.0
      %593 = vmatpush2.msra.mxu0 0.0
      %594 = vmatprep.subr.mxu0 0.0
      %595 = vmatpush2.msra.mxu0 0.0
      %596 = vmatprep.subr.mxu0 0.0
      %597 = vmatpush2.msra.mxu0 0.0
      %598 = vmatprep.subr.mxu0 0.0
      %599 = vmatpush2.msra.mxu0 0.0
      %600 = vmatprep.subr.mxu0 0.0
      %601 = vmatpush2.msra.mxu0 0.0
      %602 = vmatprep.subr.mxu0 0.0
      %603 = vmatpush2.msra.mxu0 0.0
      %604 = vmatprep.subr.mxu0 0.0
      %605 = vmatpush2.msra.mxu0 0.0
      %606 = vmatprep.subr.mxu0 0.0
      %607 = vmatpush2.msra.mxu0 0.0
      %608 = vmatprep.subr.mxu0 0.0
      %609 = vmatpush2.msra.mxu0 0.0
      %610 = vmatprep.subr.mxu0 0.0
      %611 = vmatpush2.msra.mxu0 0.0
      %612 = vmatprep.subr.mxu0 0.0
      %613 = vmatpush2.msra.mxu0 0.0
      %614 = vmatprep.subr.mxu0 0.0
      %615 = vmatpush2.msra.mxu0 0.0
      %616 = vmatprep.subr.mxu0 0.0
      %617 = vmatpush2.msra.mxu0 0.0
      %618 = vmatprep.mubr.f32.mxu0 0.0
      %619 = vmatmul.mubr.f32.gmra.mxu0 %v549
      %v620 = vpop.f32.mrf.mxu0
      %v621 = vadd.f32 %v545, %v620
      %v622 = vpop.f32.mrf.mxu0
      %623 = vmatprep.mubr.f32.mxu0 0.0
      %624 = vmatmul.mubr.f32.gmra.mxu0 %v552
      %v625 = vpop.f32.mrf.mxu0
      %v626 = vadd.f32 %v545, %v625
      %v627 = vpop.f32.mrf.mxu0
      %628 = vdwg.mxu0
      %vm629 = vcmp.ge.f32.partialorder %v621, 0.0
      %vm630 = vcmp.ge.f32.partialorder %v626, 0.0
      %v632 = vlaneseq
      %v633 = vshrl.u32 %v632, 7
      %v634 = vsub.s32 0, %v633
      %v635 = vrot.slane %v532, %v634
      %636 = vset.pattern.permute.xlu0 0
      %637 = vperm.xlu0 %636, %v635
      %v638 = vpop.permute.xlu0 %637
      %v640 = vmul.f32 %v638, %v621
      %v641 = vmul.f32 %v638, %v626
      %v642 = vsel %vm629, %v621, %v640
      %v643 = vsel %vm630, %v626, %v641
      %vm644 = vcmask 523264
      %645 = vst.msk [vmem:[#allocation2 + $0x1] sm:$0xff] %vm644, %v642
      %646 = vst.msk [vmem:[#allocation2 + $0x9] sm:$0xff] %vm644, %v643
      %v647 = vld [vmem:[%s3] sm:$0x1]
      %vm648 = vcmp.ge.f32.partialorder %v647, 0.0
      %649 = vset.pattern.permute.xlu0 0
      %650 = vperm.xlu0 %649, %v532
      %v651 = vpop.permute.xlu0 %650
      %v653 = vlaneseq
      %v654 = vshrl.u32 %v653, 7
      %v655 = vsub.s32 0, %v654
      %v656 = vrot.slane %v651, %v655
      %v657 = vmul.f32 %v656, %v647
      %v658 = vsel %vm648, %v647, %v657
      %vm659 = vcmask 516096
      %660 = vst.msk [vmem:[#allocation2] sm:$0x1] %vm659, %v658
      %661 = vst.msk [vmem:[#allocation2 + $0x11] sm:$0x1] %vm659, %v658
      %v662 = vld [vmem:[#allocation2] sm:$0xff]
      %v663 = vld [vmem:[#allocation2 + $0x8] sm:$0xff]
      %v664 = vld [vmem:[#allocation2 + $0x10] sm:$0x3]
      %v665 = vsel %vm644, %v662, 0.0
      %v666 = vsel %vm644, %v663, 0.0
      %v667 = vadd.f32 %v665, %v666
      %vm668 = vcmask 517120
      %v669 = vsel %vm668, %v664, 0.0
      %v670 = vadd.f32 %v667, %v669
      %671 = vadd.xlane.f32.xlu0 %v670
      %v672 = vpop.xlane.xlu0 %671
      %v673 = vrot.slane %v672, 4
      %v674 = vadd.f32 %v672, %v673
      %v675 = vrot.slane %v674, 2
      %v676 = vadd.f32 %v674, %v675
      %v677 = vrot.slane %v676, 1
      %v678 = vadd.f32 %v676, %v677
      %s679 = vtos %v678
      %v680 = vrcp.pop 1152.0
      %s681 = vtos %v680
      %s682 = smul.f32 %s679, %s681
      %v683 = vstv %s682
      %v684 = vsub.f32 %v662, %v683
      %v685 = vsub.f32 %v663, %v683
      %v686 = vsub.f32 %v664, %v683
      %v687 = vmul.f32 %v684, %v684
      %v688 = vmul.f32 %v685, %v685
      %v689 = vmul.f32 %v686, %v686
      %v690 = vsel %vm644, %v687, 0.0
      %v691 = vsel %vm644, %v688, 0.0
      %v692 = vadd.f32 %v690, %v691
      %v693 = vsel %vm668, %v689, 0.0
      %v694 = vadd.f32 %v692, %v693
      %695 = vadd.xlane.f32.xlu0 %v694
      %v696 = vpop.xlane.xlu0 %695
      %v697 = vrot.slane %v696, 4
      %v698 = vadd.f32 %v696, %v697
      %v699 = vrot.slane %v698, 2
      %v700 = vadd.f32 %v698, %v699
      %v701 = vrot.slane %v700, 1
      %v702 = vadd.f32 %v700, %v701
      %s703 = vtos %v702
      %v704 = vrcp.pop 1152.0
      %s705 = vtos %v704
      %s706 = smul.f32 %s703, %s705
      %s707 = sadd.f32 %s706, 1e-08
      %v708 = vstv %s707
      %v709 = vrsqrt.pop %v708
      %s710 = vtos %v709
      %v711 = vstv %s710
      %v712 = vmul.f32 %v684, %v711
      %v713 = vmul.f32 %v685, %v711
      %v714 = vmul.f32 %v686, %v711
      %v715 = vld [vmem:[%s5] sm:$0x1]
      %v717 = vlaneseq
      %v718 = vshrl.u32 %v717, 7
      %v719 = vsub.s32 0, %v718
      %v720 = vrot.slane %v715, %v719
      %v722 = vmul.f32 %v712, %v720
      %v723 = vmul.f32 %v713, %v720
      %v724 = vmul.f32 %v714, %v720
      %v725 = vld [vmem:[%s6] sm:$0x1]
      %v727 = vlaneseq
      %v728 = vshrl.u32 %v727, 7
      %v729 = vsub.s32 0, %v728
      %v730 = vrot.slane %v725, %v729
      %v732 = vadd.f32 %v722, %v730
      %v733 = vadd.f32 %v723, %v730
      %v734 = vadd.f32 %v724, %v730
      %735 = vst.msk [vmem:[#allocation2] sm:$0xff] %vm644, %v732
      %736 = vst.msk [vmem:[#allocation2 + $0x8] sm:$0xff] %vm644, %v733
      %737 = vst.msk [vmem:[#allocation2 + $0x10] sm:$0x3] %vm668, %v734
      %v738 = vld [vmem:[#allocation2] sm:$0xff]
      %v739 = vld [vmem:[#allocation2 + $0x8] sm:$0xff]
      %v740 = vld [vmem:[%s7] sm:$0x1]
      %v741 = vlaneseq
      %v742 = vshrl.u32 %v741, 7
      %v743 = vsub.s32 0, %v742
      %v744 = vrot.slane %v740, %v743
      %v745 = vmul.f32 %v738, %v744
      %v746 = vmul.f32 %v739, %v744
      %v747 = vadd.f32 %v745, 0.0
      %v748 = vadd.f32 %v746, 0.0
      %v749 = vld [vmem:[#allocation2 + $0x1] sm:$0xff]
      %v750 = vld [vmem:[#allocation2 + $0x9] sm:$0xff]
      %v751 = vld [vmem:[%s7 + $0x1] sm:$0x1]
      %v752 = vlaneseq
      %v753 = vshrl.u32 %v752, 7
      %v754 = vsub.s32 0, %v753
      %v755 = vrot.slane %v751, %v754
      %v756 = vmul.f32 %v749, %v755
      %v757 = vmul.f32 %v750, %v755
      %v758 = vadd.f32 %v747, %v756
      %v759 = vadd.f32 %v748, %v757
      %v760 = vld [vmem:[#allocation2 + $0x2] sm:$0xff]
      %v761 = vld [vmem:[#allocation2 + $0xa] sm:$0xff]
      %v762 = vld [vmem:[%s7 + $0x2] sm:$0x1]
      %v763 = vlaneseq
      %v764 = vshrl.u32 %v763, 7
      %v765 = vsub.s32 0, %v764
      %v766 = vrot.slane %v762, %v765
      %v767 = vmul.f32 %v760, %v766
      %v768 = vmul.f32 %v761, %v766
      %v769 = vadd.f32 %v758, %v767
      %v770 = vadd.f32 %v759, %v768
      %v771 = vld [vmem:[%s8] sm:$0x1]
      %v773 = vlaneseq
      %v774 = vshrl.u32 %v773, 7
      %v775 = vsub.s32 0, %v774
      %v776 = vrot.slane %v771, %v775
      %v778 = vadd.f32 %v769, %v776
      %v779 = vadd.f32 %v770, %v776
      %vm780 = vcmp.ge.f32.partialorder %v778, 0.0
      %vm781 = vcmp.ge.f32.partialorder %v779, 0.0
      %v783 = vlaneseq
      %v784 = vshrl.u32 %v783, 7
      %v785 = vsub.s32 0, %v784
      %v786 = vrot.slane %v533, %v785
      %787 = vset.pattern.permute.xlu0 0
      %788 = vperm.xlu0 %787, %v786
      %v789 = vpop.permute.xlu0 %788
      %v791 = vmul.f32 %v789, %v778
      %v792 = vmul.f32 %v789, %v779
      %v793 = vsel %vm780, %v778, %v791
      %v794 = vsel %vm781, %v779, %v792
      %v795 = vsel %vm644, %v793, 0.0
      %v796 = vsel %vm644, %v794, 0.0
      %v797 = vadd.f32 %v795, %v796
      %798 = vadd.xlane.f32.xlu0 %v797
      %v799 = vpop.xlane.xlu0 %798
      %v800 = vrot.slane %v799, 4
      %v801 = vadd.f32 %v799, %v800
      %v802 = vrot.slane %v801, 2
      %v803 = vadd.f32 %v801, %v802
      %v804 = vrot.slane %v803, 1
      %v805 = vadd.f32 %v803, %v804
      %s806 = vtos %v805
      %v807 = vrcp.pop 1024.0
      %s808 = vtos %v807
      %s809 = smul.f32 %s806, %s808
      %v810 = vstv %s809
      %v811 = vsub.f32 %v793, %v810
      %v812 = vsub.f32 %v794, %v810
      %v813 = vmul.f32 %v811, %v811
      %v814 = vmul.f32 %v812, %v812
      %v815 = vsel %vm644, %v813, 0.0
      %v816 = vsel %vm644, %v814, 0.0
      %v817 = vadd.f32 %v815, %v816
      %818 = vadd.xlane.f32.xlu0 %v817
      %v819 = vpop.xlane.xlu0 %818
      %v820 = vrot.slane %v819, 4
      %v821 = vadd.f32 %v819, %v820
      %v822 = vrot.slane %v821, 2
      %v823 = vadd.f32 %v821, %v822
      %v824 = vrot.slane %v823, 1
      %v825 = vadd.f32 %v823, %v824
      %s826 = vtos %v825
      %v827 = vrcp.pop 1024.0
      %s828 = vtos %v827
      %s829 = smul.f32 %s826, %s828
      %s830 = sadd.f32 %s829, 1e-08
      %v831 = vstv %s830
      %v832 = vrsqrt.pop %v831
      %s833 = vtos %v832
      %v834 = vstv %s833
      %v835 = vmul.f32 %v811, %v834
      %v836 = vmul.f32 %v812, %v834
      %v837 = vld [vmem:[%s10] sm:$0x1]
      %v839 = vlaneseq
      %v840 = vshrl.u32 %v839, 7
      %v841 = vsub.s32 0, %v840
      %v842 = vrot.slane %v837, %v841
      %v844 = vmul.f32 %v835, %v842
      %v845 = vmul.f32 %v836, %v842
      %v846 = vld [vmem:[%s11] sm:$0x1]
      %v848 = vlaneseq
      %v849 = vshrl.u32 %v848, 7
      %v850 = vsub.s32 0, %v849
      %v851 = vrot.slane %v846, %v850
      %v853 = vadd.f32 %v844, %v851
      %v854 = vadd.f32 %v845, %v851
      %v855 = vld [vmem:[%s12] sm:$0xff]
      %v856 = vld [vmem:[%s12 + $0x8] sm:$0xff]
      %v857 = vld [vmem:[%s12 + $0x10] sm:$0xff]
      %v858 = vld [vmem:[%s12 + $0x18] sm:$0xff]
      %v859 = vld [vmem:[%s12 + $0x20] sm:$0xff]
      %v860 = vld [vmem:[%s12 + $0x28] sm:$0xff]
      %v861 = vld [vmem:[%s12 + $0x30] sm:$0xff]
      %v862 = vld [vmem:[%s12 + $0x38] sm:$0xff]
      %v863 = vld [vmem:[%s13] sm:$0x1]
      %v865 = vlaneseq
      %v866 = vshrl.u32 %v865, 7
      %v867 = vsub.s32 0, %v866
      %v868 = vrot.slane %v863, %v867
      %v871 = vsel %vm644, %v853, 0
      %v874 = vsel %vm644, %v854, 0
      %876 = vmatprep.subr.mxu0 0.0
      %877 = vmatpush1.msra.mxu0 0.0
      %878 = vmatprep.subr.mxu0 0.0
      %879 = vmatpush1.msra.mxu0 0.0
      %880 = vmatprep.subr.mxu0 0.0
      %881 = vmatpush1.msra.mxu0 0.0
      %882 = vmatprep.subr.mxu0 0.0
      %883 = vmatpush1.msra.mxu0 0.0
      %884 = vmatprep.subr.mxu0 0.0
      %885 = vmatpush1.msra.mxu0 0.0
      %886 = vmatprep.subr.mxu0 0.0
      %887 = vmatpush1.msra.mxu0 0.0
      %888 = vmatprep.subr.mxu0 0.0
      %889 = vmatpush1.msra.mxu0 0.0
      %890 = vmatprep.subr.mxu0 0.0
      %891 = vmatpush1.msra.mxu0 0.0
      %892 = vmatprep.subr.mxu0 0.0
      %893 = vmatpush1.msra.mxu0 %v862
      %894 = vmatprep.subr.mxu0 0.0
      %895 = vmatpush1.msra.mxu0 %v861
      %896 = vmatprep.subr.mxu0 0.0
      %897 = vmatpush1.msra.mxu0 %v860
      %898 = vmatprep.subr.mxu0 0.0
      %899 = vmatpush1.msra.mxu0 %v859
      %900 = vmatprep.subr.mxu0 0.0
      %901 = vmatpush1.msra.mxu0 %v858
      %902 = vmatprep.subr.mxu0 0.0
      %903 = vmatpush1.msra.mxu0 %v857
      %904 = vmatprep.subr.mxu0 0.0
      %905 = vmatpush1.msra.mxu0 %v856
      %906 = vmatprep.subr.mxu0 0.0
      %907 = vmatpush1.msra.mxu0 %v855
      %908 = vmatprep.subr.mxu0 0.0
      %909 = vmatpush2.msra.mxu0 0.0
      %910 = vmatprep.subr.mxu0 0.0
      %911 = vmatpush2.msra.mxu0 0.0
      %912 = vmatprep.subr.mxu0 0.0
      %913 = vmatpush2.msra.mxu0 0.0
      %914 = vmatprep.subr.mxu0 0.0
      %915 = vmatpush2.msra.mxu0 0.0
      %916 = vmatprep.subr.mxu0 0.0
      %917 = vmatpush2.msra.mxu0 0.0
      %918 = vmatprep.subr.mxu0 0.0
      %919 = vmatpush2.msra.mxu0 0.0
      %920 = vmatprep.subr.mxu0 0.0
      %921 = vmatpush2.msra.mxu0 0.0
      %922 = vmatprep.subr.mxu0 0.0
      %923 = vmatpush2.msra.mxu0 0.0
      %924 = vmatprep.subr.mxu0 0.0
      %925 = vmatpush2.msra.mxu0 0.0
      %926 = vmatprep.subr.mxu0 0.0
      %927 = vmatpush2.msra.mxu0 0.0
      %928 = vmatprep.subr.mxu0 0.0
      %929 = vmatpush2.msra.mxu0 0.0
      %930 = vmatprep.subr.mxu0 0.0
      %931 = vmatpush2.msra.mxu0 0.0
      %932 = vmatprep.subr.mxu0 0.0
      %933 = vmatpush2.msra.mxu0 0.0
      %934 = vmatprep.subr.mxu0 0.0
      %935 = vmatpush2.msra.mxu0 0.0
      %936 = vmatprep.subr.mxu0 0.0
      %937 = vmatpush2.msra.mxu0 0.0
      %938 = vmatprep.subr.mxu0 0.0
      %939 = vmatpush2.msra.mxu0 0.0
      %940 = vmatprep.mubr.f32.mxu0 0.0
      %941 = vmatmul.mubr.f32.gmra.mxu0 %v871
      %v942 = vpop.f32.mrf.mxu0
      %v943 = vadd.f32 %v868, %v942
      %v944 = vpop.f32.mrf.mxu0
      %945 = vmatprep.mubr.f32.mxu0 0.0
      %946 = vmatmul.mubr.f32.gmra.mxu0 %v874
      %v947 = vpop.f32.mrf.mxu0
      %v948 = vadd.f32 %v868, %v947
      %v949 = vpop.f32.mrf.mxu0
      %950 = vdwg.mxu0
      %v951 = vadd.f32 %v534, %v943
      %v952 = vadd.f32 %v535, %v948
      %953 = vst.msk [vmem:[%s526] sm:$0xff] %vm547, %v951
      %954 = vst.msk [vmem:[%s526 + $0x8] sm:$0xff] %vm547, %v952
      %v955 = vld [vmem:[%s521] sm:$0xff]
      %v956 = vld [vmem:[%s521 + $0x8] sm:$0xff]
      %959 = vrot.lane.b32.xlu0 %v943, 96
      %v960 = vpop.permute.xlu0 %959
      %961 = vrot.lane.b32.xlu0 %v948, 96
      %v962 = vpop.permute.xlu0 %961
      %v965 = vadd.f32 %v955, %v960
      %v966 = vadd.f32 %v956, %v962
      %967 = vst.msk [vmem:[%s531] sm:$0xff] %vm547, %v965
      %968 = vst.msk [vmem:[%s531 + $0x8] sm:$0xff] %vm547, %v966
      %p969 = scmp.lt.s32.totalorder %s31, 1
      %s970 = scalar_select %p969, %s31, 1
      %s971 = smul.addr %s970, 2
      %s972 = smul.addr %s971, 8
      %s973 = scalar_lea.vmem %s14, %s972
      %p974 = scmp.lt.s32.totalorder %s31, 1
      %s975 = scalar_select %p974, %s31, 1
      %s976 = smul.addr %s975, 2
      %s977 = smul.addr %s976, 8
      %s978 = scalar_lea.vmem %s15, %s977
      // Predicated region
      $region77: #{_lambda_.7} parent=75 // pred_check
        %p979 = pneg %p353
      $region78: #{_lambda_.7} parent=75 // pred_check_branch
        %981 = sbr.rel (%p979) target = $region80
      $region79: #{_lambda_.7} parent=75 // pred_region
        _
      $region80: #{_lambda_.7} parent=75 // pred_fallthru
        _
      // Predicated region
      $region81: #{_lambda_.7} parent=75 // pred_check
        %p982 = pneg %p379
      $region82: #{_lambda_.7} parent=75 // pred_check_branch
        %984 = sbr.rel (%p982) target = $region84
      $region83: #{_lambda_.7} parent=75 // pred_region
        _
      $region84: #{_lambda_.7} parent=75 // pred_fallthru
        _
    $region76: #{_lambda_.7} parent=5 // pred_fallthru
      _
    %p985 = scmp.le.s32.totalorder 2, %s26
    // Predicated region
    $region85: #{_lambda_.7} parent=5 // pred_check
      %p986 = pneg %p985
    $region86: #{_lambda_.7} parent=5 // pred_check_branch
      %988 = sbr.rel (%p986) target = $region88
    $region87: #{_lambda_.7} parent=5 // pred_region
      %s989 = ssub.s32 %s26, 2
      // Predicated region
      $region89: #{_lambda_.7} parent=87 // pred_check
        %p990 = pneg %p359
      $region90: #{_lambda_.7} parent=87 // pred_check_branch
        %992 = sbr.rel (%p990) target = $region92
      $region91: #{_lambda_.7} parent=87 // pred_region
        %p993 = scmp.lt.s32.totalorder %s32, 1
        %s994 = scalar_select %p993, %s32, 1
        %s995 = smul.addr %s994, 2
        %s996 = smul.addr %s995, 8
        %s997 = scalar_lea.vmem %s14, %s996
      $region92: #{_lambda_.7} parent=87 // pred_fallthru
        _
      // Predicated region
      $region93: #{_lambda_.7} parent=87 // pred_check
        %p998 = pneg %p385
      $region94: #{_lambda_.7} parent=87 // pred_check_branch
        %1000 = sbr.rel (%p998) target = $region96
      $region95: #{_lambda_.7} parent=87 // pred_region
        %p1001 = scmp.lt.s32.totalorder %s32, 1
        %s1002 = scalar_select %p1001, %s32, 1
        %s1003 = smul.addr %s1002, 2
        %s1004 = smul.addr %s1003, 8
        %s1005 = scalar_lea.vmem %s15, %s1004
      $region96: #{_lambda_.7} parent=87 // pred_fallthru
        _
    $region88: #{_lambda_.7} parent=5 // pred_fallthru
      _
  $region6: #{_lambda_.7} parent=0 // loop_footer
    %s30 = sadd.s32 1, %s26
  $region7: #{_lambda_.7} parent=0 // loop_footer_branch
    %25 = sbr.rel target = $region3
  $region8: #{_lambda_.7} parent=0 // loop_exit
    _

// kernel: _lambda_.6
$region0: #{_lambda_.6}
  #allocation0 [shape = 'u32[]', space=smem, size = 0x4, offset = 0x4, fixed_abs, tag = 'smem constant byte address 0x4 - core index']
  #allocation1 [shape = 'u32[144,128]{1,0:T(1,128)}', space=vmem, size = 0x12000, scoped, tag = 'internal scratch']
  %s0 = inlined_call_operand.vmem [shape: f32[2,16,16], index: 0, kind: input, shape index: {}]
  %s1 = inlined_call_operand.vmem [shape: f32[16,64], index: 1, kind: input, shape index: {}]
  %s2 = inlined_call_operand.vmem [shape: f32[1,64], index: 2, kind: input, shape index: {}]
  %s3 = inlined_call_operand.vmem [shape: f32[1,64], index: 3, kind: input, shape index: {}]
  %s4 = inlined_call_operand.vmem [shape: f32[64,32], index: 4, kind: input, shape index: {}]
  %s5 = inlined_call_operand.vmem [shape: f32[1,32], index: 5, kind: input, shape index: {}]
  %s6 = inlined_call_operand.vmem [shape: f32[2,16,64], index: 6, kind: output, shape index: {0}]
  %s7 = inlined_call_operand.vmem [shape: f32[2,16,32], index: 7, kind: output, shape index: {1}]
  %8 = xla_tuple %s6, %s7
  %s9 = sld [smem:[#allocation0]]
  $region65: #{_lambda_.6} parent=0
    _
  %s11 = ssub.s32 1, %s9
  %s12 = scalar_select 0, %s11, %s9
  loop: start=0, step=1, limit=4
  $region2: #{_lambda_.6} parent=0 // loop_pre_header
    _
  $region3: #{_lambda_.6} parent=0 // loop_header
    %s14 = sphi 0, %s18
    %p15 = scmp.ge.s32.totalorder %s14, 4
    %s24 = sphi 0, %s26
    %s27 = sphi 0, %s24
    %s28 = sphi 0, %s27
    %s44 = sphi 0, %s28
    %s48 = sphi 0, %s48
    %s50 = sphi 0, %s48
    %s51 = sphi 0, %s50
    %s65 = sphi 0, %s51
    %s69 = sphi 0, %s69
    %s71 = sphi 0, %s69
    %s72 = sphi 0, %s71
    %s86 = sphi 0, %s72
    %s90 = sphi 0, %s90
    %s92 = sphi 0, %s90
    %s93 = sphi 0, %s92
    %s107 = sphi 0, %s93
    %s111 = sphi 0, %s111
    %s113 = sphi 0, %s111
    %s114 = sphi 0, %s113
    %s128 = sphi 0, %s114
    %s132 = sphi 0, %s132
    %s134 = sphi 0, %s132
    %s135 = sphi 0, %s134
    %s149 = sphi 0, %s135
    %s155 = sphi 0, %s157
    %s158 = sphi 0, %s155
    %s159 = sphi 0, %s158
    %s175 = sphi 0, %s159
    %s181 = sphi 0, %s183
    %s184 = sphi 0, %s181
    %s185 = sphi 0, %s184
    %s201 = sphi 0, %s185
  $region4: #{_lambda_.6} parent=0 // loop_header_branch
    %17 = sbr.rel (%p15) target = $region8
  $region5: #{_lambda_.6} parent=0 // loop_body
    %s19 = ssub.s32 %s14, 1
    %s20 = ssub.s32 %s14, 2
    %s21 = sadd.s32 %s14, 1
    %s22 = ssub.s32 %s14, %s21
    %p23 = scmp.eq.s32.totalorder %s22, 0
    %s25 = sadd.s32 %s24, 1
    %s26 = scalar_select %p23, %s24, %s25
    %p29 = pneg %p23
    %p30 = scmp.eq.s32.totalorder %s14, 1
    %p31 = por %p29, %p30
    %p32 = scmp.ne.s32.totalorder %s24, %s27
    %p33 = scmp.eq.s32.totalorder %s14, 0
    %p34 = por %p32, %p33
    %p35 = scmp.ne.s32.totalorder %s24, %s27
    %p36 = scmp.eq.s32.totalorder %s19, 1
    %p37 = por %p35, %p36
    %p38 = scmp.ne.s32.totalorder %s27, %s28
    %p39 = scmp.eq.s32.totalorder %s19, 0
    %p40 = por %p38, %p39
    %p41 = scmp.ne.s32.totalorder %s27, %s28
    %p42 = scmp.eq.s32.totalorder %s20, 1
    %p43 = por %p41, %p42
    %p45 = scmp.ne.s32.totalorder %s28, %s44
    %p46 = scmp.eq.s32.totalorder %s20, 0
    %p47 = por %p45, %p46
    %s49 = sadd.s32 %s48, 1
    %p52 = scmp.eq.s32.totalorder %s14, 1
    %p53 = scmp.ne.s32.totalorder %s48, %s50
    %p54 = scmp.eq.s32.totalorder %s14, 0
    %p55 = por %p53, %p54
    %p56 = scmp.ne.s32.totalorder %s48, %s50
    %p57 = scmp.eq.s32.totalorder %s19, 1
    %p58 = por %p56, %p57
    %p59 = scmp.ne.s32.totalorder %s50, %s51
    %p60 = scmp.eq.s32.totalorder %s19, 0
    %p61 = por %p59, %p60
    %p62 = scmp.ne.s32.totalorder %s50, %s51
    %p63 = scmp.eq.s32.totalorder %s20, 1
    %p64 = por %p62, %p63
    %p66 = scmp.ne.s32.totalorder %s51, %s65
    %p67 = scmp.eq.s32.totalorder %s20, 0
    %p68 = por %p66, %p67
    %s70 = sadd.s32 %s69, 1
    %p73 = scmp.eq.s32.totalorder %s14, 1
    %p74 = scmp.ne.s32.totalorder %s69, %s71
    %p75 = scmp.eq.s32.totalorder %s14, 0
    %p76 = por %p74, %p75
    %p77 = scmp.ne.s32.totalorder %s69, %s71
    %p78 = scmp.eq.s32.totalorder %s19, 1
    %p79 = por %p77, %p78
    %p80 = scmp.ne.s32.totalorder %s71, %s72
    %p81 = scmp.eq.s32.totalorder %s19, 0
    %p82 = por %p80, %p81
    %p83 = scmp.ne.s32.totalorder %s71, %s72
    %p84 = scmp.eq.s32.totalorder %s20, 1
    %p85 = por %p83, %p84
    %p87 = scmp.ne.s32.totalorder %s72, %s86
    %p88 = scmp.eq.s32.totalorder %s20, 0
    %p89 = por %p87, %p88
    %s91 = sadd.s32 %s90, 1
    %p94 = scmp.eq.s32.totalorder %s14, 1
    %p95 = scmp.ne.s32.totalorder %s90, %s92
    %p96 = scmp.eq.s32.totalorder %s14, 0
    %p97 = por %p95, %p96
    %p98 = scmp.ne.s32.totalorder %s90, %s92
    %p99 = scmp.eq.s32.totalorder %s19, 1
    %p100 = por %p98, %p99
    %p101 = scmp.ne.s32.totalorder %s92, %s93
    %p102 = scmp.eq.s32.totalorder %s19, 0
    %p103 = por %p101, %p102
    %p104 = scmp.ne.s32.totalorder %s92, %s93
    %p105 = scmp.eq.s32.totalorder %s20, 1
    %p106 = por %p104, %p105
    %p108 = scmp.ne.s32.totalorder %s93, %s107
    %p109 = scmp.eq.s32.totalorder %s20, 0
    %p110 = por %p108, %p109
    %s112 = sadd.s32 %s111, 1
    %p115 = scmp.eq.s32.totalorder %s14, 1
    %p116 = scmp.ne.s32.totalorder %s111, %s113
    %p117 = scmp.eq.s32.totalorder %s14, 0
    %p118 = por %p116, %p117
    %p119 = scmp.ne.s32.totalorder %s111, %s113
    %p120 = scmp.eq.s32.totalorder %s19, 1
    %p121 = por %p119, %p120
    %p122 = scmp.ne.s32.totalorder %s113, %s114
    %p123 = scmp.eq.s32.totalorder %s19, 0
    %p124 = por %p122, %p123
    %p125 = scmp.ne.s32.totalorder %s113, %s114
    %p126 = scmp.eq.s32.totalorder %s20, 1
    %p127 = por %p125, %p126
    %p129 = scmp.ne.s32.totalorder %s114, %s128
    %p130 = scmp.eq.s32.totalorder %s20, 0
    %p131 = por %p129, %p130
    %s133 = sadd.s32 %s132, 1
    %p136 = scmp.eq.s32.totalorder %s14, 1
    %p137 = scmp.ne.s32.totalorder %s132, %s134
    %p138 = scmp.eq.s32.totalorder %s14, 0
    %p139 = por %p137, %p138
    %p140 = scmp.ne.s32.totalorder %s132, %s134
    %p141 = scmp.eq.s32.totalorder %s19, 1
    %p142 = por %p140, %p141
    %p143 = scmp.ne.s32.totalorder %s134, %s135
    %p144 = scmp.eq.s32.totalorder %s19, 0
    %p145 = por %p143, %p144
    %p146 = scmp.ne.s32.totalorder %s134, %s135
    %p147 = scmp.eq.s32.totalorder %s20, 1
    %p148 = por %p146, %p147
    %p150 = scmp.ne.s32.totalorder %s135, %s149
    %p151 = scmp.eq.s32.totalorder %s20, 0
    %p152 = por %p150, %p151
    %s153 = ssub.s32 %s14, %s21
    %p154 = scmp.eq.s32.totalorder %s153, 0
    %s156 = sadd.s32 %s155, 1
    %s157 = scalar_select %p154, %s155, %s156
    %p160 = pneg %p154
    %p161 = scmp.eq.s32.totalorder %s14, 1
    %p162 = por %p160, %p161
    %p163 = scmp.ne.s32.totalorder %s155, %s158
    %p164 = scmp.eq.s32.totalorder %s14, 0
    %p165 = por %p163, %p164
    %p166 = scmp.ne.s32.totalorder %s155, %s158
    %p167 = scmp.eq.s32.totalorder %s19, 1
    %p168 = por %p166, %p167
    %p169 = scmp.ne.s32.totalorder %s158, %s159
    %p170 = scmp.eq.s32.totalorder %s19, 0
    %p171 = por %p169, %p170
    %p172 = scmp.ne.s32.totalorder %s158, %s159
    %p173 = scmp.eq.s32.totalorder %s20, 1
    %p174 = por %p172, %p173
    %p176 = scmp.ne.s32.totalorder %s159, %s175
    %p177 = scmp.eq.s32.totalorder %s20, 0
    %p178 = por %p176, %p177
    %s179 = ssub.s32 %s14, %s21
    %p180 = scmp.eq.s32.totalorder %s179, 0
    %s182 = sadd.s32 %s181, 1
    %s183 = scalar_select %p180, %s181, %s182
    %p186 = pneg %p180
    %p187 = scmp.eq.s32.totalorder %s14, 1
    %p188 = por %p186, %p187
    %p189 = scmp.ne.s32.totalorder %s181, %s184
    %p190 = scmp.eq.s32.totalorder %s14, 0
    %p191 = por %p189, %p190
    %p192 = scmp.ne.s32.totalorder %s181, %s184
    %p193 = scmp.eq.s32.totalorder %s19, 1
    %p194 = por %p192, %p193
    %p195 = scmp.ne.s32.totalorder %s184, %s185
    %p196 = scmp.eq.s32.totalorder %s19, 0
    %p197 = por %p195, %p196
    %p198 = scmp.ne.s32.totalorder %s184, %s185
    %p199 = scmp.eq.s32.totalorder %s20, 1
    %p200 = por %p198, %p199
    %p202 = scmp.ne.s32.totalorder %s185, %s201
    %p203 = scmp.eq.s32.totalorder %s20, 0
    %p204 = por %p202, %p203
    %p205 = scmp.le.s32.totalorder 1, %s14
    %p206 = scmp.lt.s32.totalorder %s14, 3
    %p207 = pnand %p205, %p206
    %p208 = pneg %p207
    // Predicated region
    $region9: #{_lambda_.6} parent=5 // pred_check
      _
    $region10: #{_lambda_.6} parent=5 // pred_check_branch
      %210 = sbr.rel (%p207) target = $region12
    $region11: #{_lambda_.6} parent=5 // pred_region
      %s211 = ssub.s32 %s14, 1
      // Predicated region
      $region13: #{_lambda_.6} parent=11 // pred_check
        %p212 = pneg %p61
      $region14: #{_lambda_.6} parent=11 // pred_check_branch
        %214 = sbr.rel (%p212) target = $region16
      $region15: #{_lambda_.6} parent=11 // pred_region
        _
      $region16: #{_lambda_.6} parent=11 // pred_fallthru
        _
      // Predicated region
      $region17: #{_lambda_.6} parent=11 // pred_check
        %p215 = pneg %p82
      $region18: #{_lambda_.6} parent=11 // pred_check_branch
        %217 = sbr.rel (%p215) target = $region20
      $region19: #{_lambda_.6} parent=11 // pred_region
        _
      $region20: #{_lambda_.6} parent=11 // pred_fallthru
        _
      // Predicated region
      $region21: #{_lambda_.6} parent=11 // pred_check
        %p218 = pneg %p103
      $region22: #{_lambda_.6} parent=11 // pred_check_branch
        %220 = sbr.rel (%p218) target = $region24
      $region23: #{_lambda_.6} parent=11 // pred_region
        _
      $region24: #{_lambda_.6} parent=11 // pred_fallthru
        _
      // Predicated region
      $region25: #{_lambda_.6} parent=11 // pred_check
        %p221 = pneg %p124
      $region26: #{_lambda_.6} parent=11 // pred_check_branch
        %223 = sbr.rel (%p221) target = $region28
      $region27: #{_lambda_.6} parent=11 // pred_region
        _
      $region28: #{_lambda_.6} parent=11 // pred_fallthru
        _
      // Predicated region
      $region29: #{_lambda_.6} parent=11 // pred_check
        %p224 = pneg %p145
      $region30: #{_lambda_.6} parent=11 // pred_check_branch
        %226 = sbr.rel (%p224) target = $region32
      $region31: #{_lambda_.6} parent=11 // pred_region
        _
      $region32: #{_lambda_.6} parent=11 // pred_fallthru
        _
    $region12: #{_lambda_.6} parent=5 // pred_fallthru
      _
    %p227 = scmp.lt.s32.totalorder %s14, 2
    // Predicated region
    $region33: #{_lambda_.6} parent=5 // pred_check
      %p228 = pneg %p227
    $region34: #{_lambda_.6} parent=5 // pred_check_branch
      %230 = sbr.rel (%p228) target = $region36
    $region35: #{_lambda_.6} parent=5 // pred_region
      // Predicated region
      $region37: #{_lambda_.6} parent=35 // pred_check
        %p231 = pneg %p34
      $region38: #{_lambda_.6} parent=35 // pred_check_branch
        %233 = sbr.rel (%p231) target = $region40
      $region39: #{_lambda_.6} parent=35 // pred_region
        %p234 = scmp.lt.s32.totalorder %s14, 1
        %s235 = scalar_select %p234, %s14, 1
        %s236 = smul.addr %s235, 2
        %s237 = smul.addr %s236, 8
        %s238 = scalar_lea.vmem %s0, %s237
      $region40: #{_lambda_.6} parent=35 // pred_fallthru
        _
    $region36: #{_lambda_.6} parent=5 // pred_fallthru
      _
    %p239 = scmp.le.s32.totalorder 1, %s14
    %p240 = scmp.lt.s32.totalorder %s14, 3
    %p241 = pnand %p239, %p240
    %p242 = pneg %p241
    // Predicated region
    $region41: #{_lambda_.6} parent=5 // pred_check
      _
    $region42: #{_lambda_.6} parent=5 // pred_check_branch
      %244 = sbr.rel (%p241) target = $region44
    $region43: #{_lambda_.6} parent=5 // pred_region
      %s245 = ssub.s32 %s14, 1
      %p246 = scmp.lt.s32.totalorder %s19, 1
      %s247 = scalar_select %p246, %s19, 1
      %s248 = smul.addr %s247, 2
      %s249 = smul.addr %s248, 8
      %s250 = scalar_lea.vmem %s0, %s249
      %p251 = pneg %p40
      %p252 = pneg %p37
      %p253 = pneg %p61
      %p254 = pneg %p58
      %p255 = pneg %p82
      %p256 = pneg %p79
      %p257 = pneg %p103
      %p258 = pneg %p100
      %p259 = pneg %p124
      %p260 = pneg %p121
      %p261 = pneg %p145
      %p262 = pneg %p142
      %p263 = pneg %p171
      %p264 = pneg %p168
      %p265 = scmp.lt.s32.totalorder %s19, 1
      %s266 = scalar_select %p265, %s19, 1
      %s267 = smul.addr %s266, 2
      %s268 = smul.addr %s267, 8
      %s269 = scalar_lea.vmem %s6, %s268
      %p270 = pneg %p197
      %p271 = pneg %p194
      %p272 = scmp.lt.s32.totalorder %s19, 1
      %s273 = scalar_select %p272, %s19, 1
      %s274 = smul.addr %s273, 2
      %s275 = smul.addr %s274, 8
      %s276 = scalar_lea.vmem %s7, %s275
      %p277 = scmp.lt.s32.totalorder %s19, 1
      %s278 = scalar_select %p277, %s19, 1
      %s279 = smul.addr %s278, 2
      %s280 = smul.addr %s279, 8
      %s281 = scalar_lea.vmem %s0, %s280
      %p282 = scmp.lt.s32.totalorder %s19, 1
      %s283 = scalar_select %p282, %s19, 1
      %s284 = smul.addr %s283, 2
      %s285 = smul.addr %s284, 8
      %s286 = scalar_lea.vmem %s6, %s285
      %p287 = scmp.lt.s32.totalorder %s19, 1
      %s288 = scalar_select %p287, %s19, 1
      %s289 = smul.addr %s288, 2
      %s290 = smul.addr %s289, 8
      %s291 = scalar_lea.vmem %s7, %s290
      %v292 = vld [vmem:[%s281] sm:$0xff]
      %v293 = vld [vmem:[%s281 + $0x8] sm:$0xff]
      %v294 = vld [vmem:[%s1] sm:$0xff]
      %v295 = vld [vmem:[%s1 + $0x8] sm:$0xff]
      %vm296 = vcmask 130048
      %v298 = vsel %vm296, %v292, 0
      %v301 = vsel %vm296, %v293, 0
      %303 = vmatprep.subr.mxu0 0.0
      %304 = vmatpush1.msra.mxu0 0.0
      %305 = vmatprep.subr.mxu0 0.0
      %306 = vmatpush1.msra.mxu0 0.0
      %307 = vmatprep.subr.mxu0 0.0
      %308 = vmatpush1.msra.mxu0 0.0
      %309 = vmatprep.subr.mxu0 0.0
      %310 = vmatpush1.msra.mxu0 0.0
      %311 = vmatprep.subr.mxu0 0.0
      %312 = vmatpush1.msra.mxu0 0.0
      %313 = vmatprep.subr.mxu0 0.0
      %314 = vmatpush1.msra.mxu0 0.0
      %315 = vmatprep.subr.mxu0 0.0
      %316 = vmatpush1.msra.mxu0 0.0
      %317 = vmatprep.subr.mxu0 0.0
      %318 = vmatpush1.msra.mxu0 0.0
      %319 = vmatprep.subr.mxu0 0.0
      %320 = vmatpush1.msra.mxu0 0.0
      %321 = vmatprep.subr.mxu0 0.0
      %322 = vmatpush1.msra.mxu0 0.0
      %323 = vmatprep.subr.mxu0 0.0
      %324 = vmatpush1.msra.mxu0 0.0
      %325 = vmatprep.subr.mxu0 0.0
      %326 = vmatpush1.msra.mxu0 0.0
      %327 = vmatprep.subr.mxu0 0.0
      %328 = vmatpush1.msra.mxu0 0.0
      %329 = vmatprep.subr.mxu0 0.0
      %330 = vmatpush1.msra.mxu0 0.0
      %331 = vmatprep.subr.mxu0 0.0
      %332 = vmatpush1.msra.mxu0 %v295
      %333 = vmatprep.subr.mxu0 0.0
      %334 = vmatpush1.msra.mxu0 %v294
      %335 = vmatprep.subr.mxu0 0.0
      %336 = vmatpush2.msra.mxu0 0.0
      %337 = vmatprep.subr.mxu0 0.0
      %338 = vmatpush2.msra.mxu0 0.0
      %339 = vmatprep.subr.mxu0 0.0
      %340 = vmatpush2.msra.mxu0 0.0
      %341 = vmatprep.subr.mxu0 0.0
      %342 = vmatpush2.msra.mxu0 0.0
      %343 = vmatprep.subr.mxu0 0.0
      %344 = vmatpush2.msra.mxu0 0.0
      %345 = vmatprep.subr.mxu0 0.0
      %346 = vmatpush2.msra.mxu0 0.0
      %347 = vmatprep.subr.mxu0 0.0
      %348 = vmatpush2.msra.mxu0 0.0
      %349 = vmatprep.subr.mxu0 0.0
      %350 = vmatpush2.msra.mxu0 0.0
      %351 = vmatprep.subr.mxu0 0.0
      %352 = vmatpush2.msra.mxu0 0.0
      %353 = vmatprep.subr.mxu0 0.0
      %354 = vmatpush2.msra.mxu0 0.0
      %355 = vmatprep.subr.mxu0 0.0
      %356 = vmatpush2.msra.mxu0 0.0
      %357 = vmatprep.subr.mxu0 0.0
      %358 = vmatpush2.msra.mxu0 0.0
      %359 = vmatprep.subr.mxu0 0.0
      %360 = vmatpush2.msra.mxu0 0.0
      %361 = vmatprep.subr.mxu0 0.0
      %362 = vmatpush2.msra.mxu0 0.0
      %363 = vmatprep.subr.mxu0 0.0
      %364 = vmatpush2.msra.mxu0 0.0
      %365 = vmatprep.subr.mxu0 0.0
      %366 = vmatpush2.msra.mxu0 0.0
      %367 = vmatprep.mubr.f32.mxu0 0.0
      %368 = vmatmul.mubr.f32.gmra.mxu0 %v298
      %v369 = vpop.f32.mrf.mxu0
      %v370 = vadd.f32 0.0, %v369
      %v371 = vpop.f32.mrf.mxu0
      %372 = vmatprep.mubr.f32.mxu0 0.0
      %373 = vmatmul.mubr.f32.gmra.mxu0 %v301
      %v374 = vpop.f32.mrf.mxu0
      %v375 = vadd.f32 0.0, %v374
      %v376 = vpop.f32.mrf.mxu0
      %377 = vdwg.mxu0
      %vm378 = vcmask 523264
      %379 = vst.msk [vmem:[%s286] sm:$0xff] %vm378, %v370
      %380 = vst.msk [vmem:[%s286 + $0x8] sm:$0xff] %vm378, %v375
      %v381 = vsel %vm378, %v370, 0.0
      %v382 = vsel %vm378, %v375, 0.0
      %v383 = vadd.f32 %v381, %v382
      %384 = vadd.xlane.f32.xlu0 %v383
      %v385 = vpop.xlane.xlu0 %384
      %v386 = vrot.slane %v385, 4
      %v387 = vadd.f32 %v385, %v386
      %v388 = vrot.slane %v387, 2
      %v389 = vadd.f32 %v387, %v388
      %v390 = vrot.slane %v389, 1
      %v391 = vadd.f32 %v389, %v390
      %s392 = vtos %v391
      %v393 = vrcp.pop 1024.0
      %s394 = vtos %v393
      %s395 = smul.f32 %s392, %s394
      %v396 = vstv %s395
      %v397 = vsub.f32 %v370, %v396
      %v398 = vsub.f32 %v375, %v396
      %v399 = vmul.f32 %v397, %v397
      %v400 = vmul.f32 %v398, %v398
      %v401 = vsel %vm378, %v399, 0.0
      %v402 = vsel %vm378, %v400, 0.0
      %v403 = vadd.f32 %v401, %v402
      %404 = vadd.xlane.f32.xlu0 %v403
      %v405 = vpop.xlane.xlu0 %404
      %v406 = vrot.slane %v405, 4
      %v407 = vadd.f32 %v405, %v406
      %v408 = vrot.slane %v407, 2
      %v409 = vadd.f32 %v407, %v408
      %v410 = vrot.slane %v409, 1
      %v411 = vadd.f32 %v409, %v410
      %s412 = vtos %v411
      %v413 = vrcp.pop 1024.0
      %s414 = vtos %v413
      %s415 = smul.f32 %s412, %s414
      %s416 = sadd.f32 %s415, 1e-08
      %v417 = vstv %s416
      %v418 = vrsqrt.pop %v417
      %s419 = vtos %v418
      %v420 = vstv %s419
      %v421 = vmul.f32 %v397, %v420
      %v422 = vmul.f32 %v398, %v420
      %v423 = vld [vmem:[%s2] sm:$0x1]
      %v425 = vlaneseq
      %v426 = vshrl.u32 %v425, 7
      %v427 = vsub.s32 0, %v426
      %v428 = vrot.slane %v423, %v427
      %v430 = vmul.f32 %v421, %v428
      %v431 = vmul.f32 %v422, %v428
      %v432 = vld [vmem:[%s3] sm:$0x1]
      %v434 = vlaneseq
      %v435 = vshrl.u32 %v434, 7
      %v436 = vsub.s32 0, %v435
      %v437 = vrot.slane %v432, %v436
      %v439 = vadd.f32 %v430, %v437
      %v440 = vadd.f32 %v431, %v437
      %v441 = vld [vmem:[%s4] sm:$0xff]
      %v442 = vld [vmem:[%s4 + $0x8] sm:$0xff]
      %v443 = vld [vmem:[%s4 + $0x10] sm:$0xff]
      %v444 = vld [vmem:[%s4 + $0x18] sm:$0xff]
      %v445 = vld [vmem:[%s4 + $0x20] sm:$0xff]
      %v446 = vld [vmem:[%s4 + $0x28] sm:$0xff]
      %v447 = vld [vmem:[%s4 + $0x30] sm:$0xff]
      %v448 = vld [vmem:[%s4 + $0x38] sm:$0xff]
      %v449 = vld [vmem:[%s5] sm:$0x1]
      %v451 = vlaneseq
      %v452 = vshrl.u32 %v451, 7
      %v453 = vsub.s32 0, %v452
      %v454 = vrot.slane %v449, %v453
      %v457 = vsel %vm378, %v439, 0
      %v460 = vsel %vm378, %v440, 0
      %462 = vmatprep.subr.mxu0 0.0
      %463 = vmatpush1.msra.mxu0 0.0
      %464 = vmatprep.subr.mxu0 0.0
      %465 = vmatpush1.msra.mxu0 0.0
      %466 = vmatprep.subr.mxu0 0.0
      %467 = vmatpush1.msra.mxu0 0.0
      %468 = vmatprep.subr.mxu0 0.0
      %469 = vmatpush1.msra.mxu0 0.0
      %470 = vmatprep.subr.mxu0 0.0
      %471 = vmatpush1.msra.mxu0 0.0
      %472 = vmatprep.subr.mxu0 0.0
      %473 = vmatpush1.msra.mxu0 0.0
      %474 = vmatprep.subr.mxu0 0.0
      %475 = vmatpush1.msra.mxu0 0.0
      %476 = vmatprep.subr.mxu0 0.0
      %477 = vmatpush1.msra.mxu0 0.0
      %478 = vmatprep.subr.mxu0 0.0
      %479 = vmatpush1.msra.mxu0 %v448
      %480 = vmatprep.subr.mxu0 0.0
      %481 = vmatpush1.msra.mxu0 %v447
      %482 = vmatprep.subr.mxu0 0.0
      %483 = vmatpush1.msra.mxu0 %v446
      %484 = vmatprep.subr.mxu0 0.0
      %485 = vmatpush1.msra.mxu0 %v445
      %486 = vmatprep.subr.mxu0 0.0
      %487 = vmatpush1.msra.mxu0 %v444
      %488 = vmatprep.subr.mxu0 0.0
      %489 = vmatpush1.msra.mxu0 %v443
      %490 = vmatprep.subr.mxu0 0.0
      %491 = vmatpush1.msra.mxu0 %v442
      %492 = vmatprep.subr.mxu0 0.0
      %493 = vmatpush1.msra.mxu0 %v441
      %494 = vmatprep.subr.mxu0 0.0
      %495 = vmatpush2.msra.mxu0 0.0
      %496 = vmatprep.subr.mxu0 0.0
      %497 = vmatpush2.msra.mxu0 0.0
      %498 = vmatprep.subr.mxu0 0.0
      %499 = vmatpush2.msra.mxu0 0.0
      %500 = vmatprep.subr.mxu0 0.0
      %501 = vmatpush2.msra.mxu0 0.0
      %502 = vmatprep.subr.mxu0 0.0
      %503 = vmatpush2.msra.mxu0 0.0
      %504 = vmatprep.subr.mxu0 0.0
      %505 = vmatpush2.msra.mxu0 0.0
      %506 = vmatprep.subr.mxu0 0.0
      %507 = vmatpush2.msra.mxu0 0.0
      %508 = vmatprep.subr.mxu0 0.0
      %509 = vmatpush2.msra.mxu0 0.0
      %510 = vmatprep.subr.mxu0 0.0
      %511 = vmatpush2.msra.mxu0 0.0
      %512 = vmatprep.subr.mxu0 0.0
      %513 = vmatpush2.msra.mxu0 0.0
      %514 = vmatprep.subr.mxu0 0.0
      %515 = vmatpush2.msra.mxu0 0.0
      %516 = vmatprep.subr.mxu0 0.0
      %517 = vmatpush2.msra.mxu0 0.0
      %518 = vmatprep.subr.mxu0 0.0
      %519 = vmatpush2.msra.mxu0 0.0
      %520 = vmatprep.subr.mxu0 0.0
      %521 = vmatpush2.msra.mxu0 0.0
      %522 = vmatprep.subr.mxu0 0.0
      %523 = vmatpush2.msra.mxu0 0.0
      %524 = vmatprep.subr.mxu0 0.0
      %525 = vmatpush2.msra.mxu0 0.0
      %526 = vmatprep.mubr.f32.mxu0 0.0
      %527 = vmatmul.mubr.f32.gmra.mxu0 %v457
      %v528 = vpop.f32.mrf.mxu0
      %v529 = vadd.f32 %v454, %v528
      %v530 = vpop.f32.mrf.mxu0
      %531 = vmatprep.mubr.f32.mxu0 0.0
      %532 = vmatmul.mubr.f32.gmra.mxu0 %v460
      %v533 = vpop.f32.mrf.mxu0
      %v534 = vadd.f32 %v454, %v533
      %v535 = vpop.f32.mrf.mxu0
      %536 = vdwg.mxu0
      %vm537 = vcmask 261120
      %538 = vst.msk [vmem:[%s291] sm:$0xff] %vm537, %v529
      %539 = vst.msk [vmem:[%s291 + $0x8] sm:$0xff] %vm537, %v534
      %p540 = scmp.lt.s32.totalorder %s19, 1
      %s541 = scalar_select %p540, %s19, 1
      %s542 = smul.addr %s541, 2
      %s543 = smul.addr %s542, 8
      %s544 = scalar_lea.vmem %s6, %s543
      %p545 = scmp.lt.s32.totalorder %s19, 1
      %s546 = scalar_select %p545, %s19, 1
      %s547 = smul.addr %s546, 2
      %s548 = smul.addr %s547, 8
      %s549 = scalar_lea.vmem %s7, %s548
      // Predicated region
      $region45: #{_lambda_.6} parent=43 // pred_check
        %p550 = pneg %p168
      $region46: #{_lambda_.6} parent=43 // pred_check_branch
        %552 = sbr.rel (%p550) target = $region48
      $region47: #{_lambda_.6} parent=43 // pred_region
        _
      $region48: #{_lambda_.6} parent=43 // pred_fallthru
        _
      // Predicated region
      $region49: #{_lambda_.6} parent=43 // pred_check
        %p553 = pneg %p194
      $region50: #{_lambda_.6} parent=43 // pred_check_branch
        %555 = sbr.rel (%p553) target = $region52
      $region51: #{_lambda_.6} parent=43 // pred_region
        _
      $region52: #{_lambda_.6} parent=43 // pred_fallthru
        _
    $region44: #{_lambda_.6} parent=5 // pred_fallthru
      _
    %p556 = scmp.le.s32.totalorder 2, %s14
    // Predicated region
    $region53: #{_lambda_.6} parent=5 // pred_check
      %p557 = pneg %p556
    $region54: #{_lambda_.6} parent=5 // pred_check_branch
      %559 = sbr.rel (%p557) target = $region56
    $region55: #{_lambda_.6} parent=5 // pred_region
      %s560 = ssub.s32 %s14, 2
      // Predicated region
      $region57: #{_lambda_.6} parent=55 // pred_check
        %p561 = pneg %p174
      $region58: #{_lambda_.6} parent=55 // pred_check_branch
        %563 = sbr.rel (%p561) target = $region60
      $region59: #{_lambda_.6} parent=55 // pred_region
        %p564 = scmp.lt.s32.totalorder %s20, 1
        %s565 = scalar_select %p564, %s20, 1
        %s566 = smul.addr %s565, 2
        %s567 = smul.addr %s566, 8
        %s568 = scalar_lea.vmem %s6, %s567
      $region60: #{_lambda_.6} parent=55 // pred_fallthru
        _
      // Predicated region
      $region61: #{_lambda_.6} parent=55 // pred_check
        %p569 = pneg %p200
      $region62: #{_lambda_.6} parent=55 // pred_check_branch
        %571 = sbr.rel (%p569) target = $region64
      $region63: #{_lambda_.6} parent=55 // pred_region
        %p572 = scmp.lt.s32.totalorder %s20, 1
        %s573 = scalar_select %p572, %s20, 1
        %s574 = smul.addr %s573, 2
        %s575 = smul.addr %s574, 8
        %s576 = scalar_lea.vmem %s7, %s575
      $region64: #{_lambda_.6} parent=55 // pred_fallthru
        _
    $region56: #{_lambda_.6} parent=5 // pred_fallthru
      _
  $region6: #{_lambda_.6} parent=0 // loop_footer
    %s18 = sadd.s32 1, %s14
  $region7: #{_lambda_.6} parent=0 // loop_footer_branch
    %13 = sbr.rel target = $region3
  $region8: #{_lambda_.6} parent=0 // loop_exit
    _

// kernel: _lambda_.8
$region0: #{_lambda_.8}
  #allocation0 [shape = 'u32[]', space=smem, size = 0x4, offset = 0x4, fixed_abs, tag = 'smem constant byte address 0x4 - core index']
  #allocation1 [shape = 'u32[144,128]{1,0:T(1,128)}', space=vmem, size = 0x12000, scoped, tag = 'internal scratch']
  #allocation2 [shape = 'f32[20,64]{1,0:T(8,128)}', space=vmem, size = 0x3000, scoped, tag = 'scratch operand']
  #allocation3 [shape = 'f32[1,1]{1,0:T(1,128)S(1)}', space=vmem, size = 0x200, scoped, tag = 'scoped memory for _lambda_.8']
  #allocation4 [shape = 'f32[1,1]{1,0:T(1,128)S(1)}', space=vmem, size = 0x200, scoped, tag = 'scoped memory for _lambda_.8']
  %s0 = inlined_call_operand.vmem [shape: f32[2,16,32], index: 0, kind: input, shape index: {}]
  %s1 = inlined_call_operand.vmem [shape: f32[2,16,32], index: 1, kind: input, shape index: {}]
  %s2 = inlined_call_operand.vmem [shape: f32[32,64], index: 2, kind: input, shape index: {}]
  %s3 = inlined_call_operand.vmem [shape: f32[1,64], index: 3, kind: input, shape index: {}]
  %s4 = inlined_call_operand.<no memory space> [shape: f32[1,1], index: 4, kind: input, shape index: {}]
  %s5 = inlined_call_operand.vmem [shape: f32[1,64], index: 5, kind: input, shape index: {}]
  %s6 = inlined_call_operand.vmem [shape: f32[1,64], index: 6, kind: input, shape index: {}]
  %s7 = inlined_call_operand.vmem [shape: f32[3,64], index: 7, kind: input, shape index: {}]
  %s8 = inlined_call_operand.vmem [shape: f32[1,64], index: 8, kind: input, shape index: {}]
  %s9 = inlined_call_operand.<no memory space> [shape: f32[1,1], index: 9, kind: input, shape index: {}]
  %s10 = inlined_call_operand.vmem [shape: f32[1,64], index: 10, kind: input, shape index: {}]
  %s11 = inlined_call_operand.vmem [shape: f32[1,64], index: 11, kind: input, shape index: {}]
  %s12 = inlined_call_operand.vmem [shape: f32[64,64], index: 12, kind: input, shape index: {}]
  %s13 = inlined_call_operand.vmem [shape: f32[1,64], index: 13, kind: input, shape index: {}]
  %s14 = inlined_call_operand.vmem [shape: f32[2,16,32], index: 14, kind: output, shape index: {0}]
  %s15 = inlined_call_operand.vmem [shape: f32[2,16,32], index: 15, kind: output, shape index: {1}]
  %16 = xla_tuple %s14, %s15
  %s17 = sld [smem:[#allocation0]]
  $region97: #{_lambda_.8} parent=0
    _
  %s19 = ssub.s32 1, %s17
  %s20 = scalar_select 0, %s19, %s17
  %v21 = vstv %s4
  %22 = vst [vmem:[#allocation3] sm:$0x1] %v21
  %v23 = vstv %s9
  %24 = vst [vmem:[#allocation4] sm:$0x1] %v23
  loop: start=0, step=1, limit=4
  $region2: #{_lambda_.8} parent=0 // loop_pre_header
    _
  $region3: #{_lambda_.8} parent=0 // loop_header
    %s26 = sphi 0, %s30
    %p27 = scmp.ge.s32.totalorder %s26, 4
    %s36 = sphi 0, %s38
    %s39 = sphi 0, %s36
    %s40 = sphi 0, %s39
    %s56 = sphi 0, %s40
    %s62 = sphi 0, %s64
    %s65 = sphi 0, %s62
    %s66 = sphi 0, %s65
    %s82 = sphi 0, %s66
    %s86 = sphi 0, %s86
    %s88 = sphi 0, %s86
    %s89 = sphi 0, %s88
    %s103 = sphi 0, %s89
    %s107 = sphi 0, %s107
    %s109 = sphi 0, %s107
    %s110 = sphi 0, %s109
    %s124 = sphi 0, %s110
    %s128 = sphi 0, %s128
    %s130 = sphi 0, %s128
    %s131 = sphi 0, %s130
    %s145 = sphi 0, %s131
    %s149 = sphi 0, %s149
    %s151 = sphi 0, %s149
    %s152 = sphi 0, %s151
    %s166 = sphi 0, %s152
    %s170 = sphi 0, %s170
    %s172 = sphi 0, %s170
    %s173 = sphi 0, %s172
    %s187 = sphi 0, %s173
    %s191 = sphi 0, %s191
    %s193 = sphi 0, %s191
    %s194 = sphi 0, %s193
    %s208 = sphi 0, %s194
    %s212 = sphi 0, %s212
    %s214 = sphi 0, %s212
    %s215 = sphi 0, %s214
    %s229 = sphi 0, %s215
    %s233 = sphi 0, %s233
    %s235 = sphi 0, %s233
    %s236 = sphi 0, %s235
    %s250 = sphi 0, %s236
    %s254 = sphi 0, %s254
    %s256 = sphi 0, %s254
    %s257 = sphi 0, %s256
    %s271 = sphi 0, %s257
    %s275 = sphi 0, %s275
    %s277 = sphi 0, %s275
    %s278 = sphi 0, %s277
    %s292 = sphi 0, %s278
    %s296 = sphi 0, %s296
    %s298 = sphi 0, %s296
    %s299 = sphi 0, %s298
    %s313 = sphi 0, %s299
    %s317 = sphi 0, %s317
    %s319 = sphi 0, %s317
    %s320 = sphi 0, %s319
    %s334 = sphi 0, %s320
    %s340 = sphi 0, %s342
    %s343 = sphi 0, %s340
    %s344 = sphi 0, %s343
    %s360 = sphi 0, %s344
    %s366 = sphi 0, %s368
    %s369 = sphi 0, %s366
    %s370 = sphi 0, %s369
    %s386 = sphi 0, %s370
  $region4: #{_lambda_.8} parent=0 // loop_header_branch
    %29 = sbr.rel (%p27) target = $region8
  $region5: #{_lambda_.8} parent=0 // loop_body
    %s31 = ssub.s32 %s26, 1
    %s32 = ssub.s32 %s26, 2
    %s33 = sadd.s32 %s26, 1
    %s34 = ssub.s32 %s26, %s33
    %p35 = scmp.eq.s32.totalorder %s34, 0
    %s37 = sadd.s32 %s36, 1
    %s38 = scalar_select %p35, %s36, %s37
    %p41 = pneg %p35
    %p42 = scmp.eq.s32.totalorder %s26, 1
    %p43 = por %p41, %p42
    %p44 = scmp.ne.s32.totalorder %s36, %s39
    %p45 = scmp.eq.s32.totalorder %s26, 0
    %p46 = por %p44, %p45
    %p47 = scmp.ne.s32.totalorder %s36, %s39
    %p48 = scmp.eq.s32.totalorder %s31, 1
    %p49 = por %p47, %p48
    %p50 = scmp.ne.s32.totalorder %s39, %s40
    %p51 = scmp.eq.s32.totalorder %s31, 0
    %p52 = por %p50, %p51
    %p53 = scmp.ne.s32.totalorder %s39, %s40
    %p54 = scmp.eq.s32.totalorder %s32, 1
    %p55 = por %p53, %p54
    %p57 = scmp.ne.s32.totalorder %s40, %s56
    %p58 = scmp.eq.s32.totalorder %s32, 0
    %p59 = por %p57, %p58
    %s60 = ssub.s32 %s26, %s33
    %p61 = scmp.eq.s32.totalorder %s60, 0
    %s63 = sadd.s32 %s62, 1
    %s64 = scalar_select %p61, %s62, %s63
    %p67 = pneg %p61
    %p68 = scmp.eq.s32.totalorder %s26, 1
    %p69 = por %p67, %p68
    %p70 = scmp.ne.s32.totalorder %s62, %s65
    %p71 = scmp.eq.s32.totalorder %s26, 0
    %p72 = por %p70, %p71
    %p73 = scmp.ne.s32.totalorder %s62, %s65
    %p74 = scmp.eq.s32.totalorder %s31, 1
    %p75 = por %p73, %p74
    %p76 = scmp.ne.s32.totalorder %s65, %s66
    %p77 = scmp.eq.s32.totalorder %s31, 0
    %p78 = por %p76, %p77
    %p79 = scmp.ne.s32.totalorder %s65, %s66
    %p80 = scmp.eq.s32.totalorder %s32, 1
    %p81 = por %p79, %p80
    %p83 = scmp.ne.s32.totalorder %s66, %s82
    %p84 = scmp.eq.s32.totalorder %s32, 0
    %p85 = por %p83, %p84
    %s87 = sadd.s32 %s86, 1
    %p90 = scmp.eq.s32.totalorder %s26, 1
    %p91 = scmp.ne.s32.totalorder %s86, %s88
    %p92 = scmp.eq.s32.totalorder %s26, 0
    %p93 = por %p91, %p92
    %p94 = scmp.ne.s32.totalorder %s86, %s88
    %p95 = scmp.eq.s32.totalorder %s31, 1
    %p96 = por %p94, %p95
    %p97 = scmp.ne.s32.totalorder %s88, %s89
    %p98 = scmp.eq.s32.totalorder %s31, 0
    %p99 = por %p97, %p98
    %p100 = scmp.ne.s32.totalorder %s88, %s89
    %p101 = scmp.eq.s32.totalorder %s32, 1
    %p102 = por %p100, %p101
    %p104 = scmp.ne.s32.totalorder %s89, %s103
    %p105 = scmp.eq.s32.totalorder %s32, 0
    %p106 = por %p104, %p105
    %s108 = sadd.s32 %s107, 1
    %p111 = scmp.eq.s32.totalorder %s26, 1
    %p112 = scmp.ne.s32.totalorder %s107, %s109
    %p113 = scmp.eq.s32.totalorder %s26, 0
    %p114 = por %p112, %p113
    %p115 = scmp.ne.s32.totalorder %s107, %s109
    %p116 = scmp.eq.s32.totalorder %s31, 1
    %p117 = por %p115, %p116
    %p118 = scmp.ne.s32.totalorder %s109, %s110
    %p119 = scmp.eq.s32.totalorder %s31, 0
    %p120 = por %p118, %p119
    %p121 = scmp.ne.s32.totalorder %s109, %s110
    %p122 = scmp.eq.s32.totalorder %s32, 1
    %p123 = por %p121, %p122
    %p125 = scmp.ne.s32.totalorder %s110, %s124
    %p126 = scmp.eq.s32.totalorder %s32, 0
    %p127 = por %p125, %p126
    %s129 = sadd.s32 %s128, 1
    %p132 = scmp.eq.s32.totalorder %s26, 1
    %p133 = scmp.ne.s32.totalorder %s128, %s130
    %p134 = scmp.eq.s32.totalorder %s26, 0
    %p135 = por %p133, %p134
    %p136 = scmp.ne.s32.totalorder %s128, %s130
    %p137 = scmp.eq.s32.totalorder %s31, 1
    %p138 = por %p136, %p137
    %p139 = scmp.ne.s32.totalorder %s130, %s131
    %p140 = scmp.eq.s32.totalorder %s31, 0
    %p141 = por %p139, %p140
    %p142 = scmp.ne.s32.totalorder %s130, %s131
    %p143 = scmp.eq.s32.totalorder %s32, 1
    %p144 = por %p142, %p143
    %p146 = scmp.ne.s32.totalorder %s131, %s145
    %p147 = scmp.eq.s32.totalorder %s32, 0
    %p148 = por %p146, %p147
    %s150 = sadd.s32 %s149, 1
    %p153 = scmp.eq.s32.totalorder %s26, 1
    %p154 = scmp.ne.s32.totalorder %s149, %s151
    %p155 = scmp.eq.s32.totalorder %s26, 0
    %p156 = por %p154, %p155
    %p157 = scmp.ne.s32.totalorder %s149, %s151
    %p158 = scmp.eq.s32.totalorder %s31, 1
    %p159 = por %p157, %p158
    %p160 = scmp.ne.s32.totalorder %s151, %s152
    %p161 = scmp.eq.s32.totalorder %s31, 0
    %p162 = por %p160, %p161
    %p163 = scmp.ne.s32.totalorder %s151, %s152
    %p164 = scmp.eq.s32.totalorder %s32, 1
    %p165 = por %p163, %p164
    %p167 = scmp.ne.s32.totalorder %s152, %s166
    %p168 = scmp.eq.s32.totalorder %s32, 0
    %p169 = por %p167, %p168
    %s171 = sadd.s32 %s170, 1
    %p174 = scmp.eq.s32.totalorder %s26, 1
    %p175 = scmp.ne.s32.totalorder %s170, %s172
    %p176 = scmp.eq.s32.totalorder %s26, 0
    %p177 = por %p175, %p176
    %p178 = scmp.ne.s32.totalorder %s170, %s172
    %p179 = scmp.eq.s32.totalorder %s31, 1
    %p180 = por %p178, %p179
    %p181 = scmp.ne.s32.totalorder %s172, %s173
    %p182 = scmp.eq.s32.totalorder %s31, 0
    %p183 = por %p181, %p182
    %p184 = scmp.ne.s32.totalorder %s172, %s173
    %p185 = scmp.eq.s32.totalorder %s32, 1
    %p186 = por %p184, %p185
    %p188 = scmp.ne.s32.totalorder %s173, %s187
    %p189 = scmp.eq.s32.totalorder %s32, 0
    %p190 = por %p188, %p189
    %s192 = sadd.s32 %s191, 1
    %p195 = scmp.eq.s32.totalorder %s26, 1
    %p196 = scmp.ne.s32.totalorder %s191, %s193
    %p197 = scmp.eq.s32.totalorder %s26, 0
    %p198 = por %p196, %p197
    %p199 = scmp.ne.s32.totalorder %s191, %s193
    %p200 = scmp.eq.s32.totalorder %s31, 1
    %p201 = por %p199, %p200
    %p202 = scmp.ne.s32.totalorder %s193, %s194
    %p203 = scmp.eq.s32.totalorder %s31, 0
    %p204 = por %p202, %p203
    %p205 = scmp.ne.s32.totalorder %s193, %s194
    %p206 = scmp.eq.s32.totalorder %s32, 1
    %p207 = por %p205, %p206
    %p209 = scmp.ne.s32.totalorder %s194, %s208
    %p210 = scmp.eq.s32.totalorder %s32, 0
    %p211 = por %p209, %p210
    %s213 = sadd.s32 %s212, 1
    %p216 = scmp.eq.s32.totalorder %s26, 1
    %p217 = scmp.ne.s32.totalorder %s212, %s214
    %p218 = scmp.eq.s32.totalorder %s26, 0
    %p219 = por %p217, %p218
    %p220 = scmp.ne.s32.totalorder %s212, %s214
    %p221 = scmp.eq.s32.totalorder %s31, 1
    %p222 = por %p220, %p221
    %p223 = scmp.ne.s32.totalorder %s214, %s215
    %p224 = scmp.eq.s32.totalorder %s31, 0
    %p225 = por %p223, %p224
    %p226 = scmp.ne.s32.totalorder %s214, %s215
    %p227 = scmp.eq.s32.totalorder %s32, 1
    %p228 = por %p226, %p227
    %p230 = scmp.ne.s32.totalorder %s215, %s229
    %p231 = scmp.eq.s32.totalorder %s32, 0
    %p232 = por %p230, %p231
    %s234 = sadd.s32 %s233, 1
    %p237 = scmp.eq.s32.totalorder %s26, 1
    %p238 = scmp.ne.s32.totalorder %s233, %s235
    %p239 = scmp.eq.s32.totalorder %s26, 0
    %p240 = por %p238, %p239
    %p241 = scmp.ne.s32.totalorder %s233, %s235
    %p242 = scmp.eq.s32.totalorder %s31, 1
    %p243 = por %p241, %p242
    %p244 = scmp.ne.s32.totalorder %s235, %s236
    %p245 = scmp.eq.s32.totalorder %s31, 0
    %p246 = por %p244, %p245
    %p247 = scmp.ne.s32.totalorder %s235, %s236
    %p248 = scmp.eq.s32.totalorder %s32, 1
    %p249 = por %p247, %p248
    %p251 = scmp.ne.s32.totalorder %s236, %s250
    %p252 = scmp.eq.s32.totalorder %s32, 0
    %p253 = por %p251, %p252
    %s255 = sadd.s32 %s254, 1
    %p258 = scmp.eq.s32.totalorder %s26, 1
    %p259 = scmp.ne.s32.totalorder %s254, %s256
    %p260 = scmp.eq.s32.totalorder %s26, 0
    %p261 = por %p259, %p260
    %p262 = scmp.ne.s32.totalorder %s254, %s256
    %p263 = scmp.eq.s32.totalorder %s31, 1
    %p264 = por %p262, %p263
    %p265 = scmp.ne.s32.totalorder %s256, %s257
    %p266 = scmp.eq.s32.totalorder %s31, 0
    %p267 = por %p265, %p266
    %p268 = scmp.ne.s32.totalorder %s256, %s257
    %p269 = scmp.eq.s32.totalorder %s32, 1
    %p270 = por %p268, %p269
    %p272 = scmp.ne.s32.totalorder %s257, %s271
    %p273 = scmp.eq.s32.totalorder %s32, 0
    %p274 = por %p272, %p273
    %s276 = sadd.s32 %s275, 1
    %p279 = scmp.eq.s32.totalorder %s26, 1
    %p280 = scmp.ne.s32.totalorder %s275, %s277
    %p281 = scmp.eq.s32.totalorder %s26, 0
    %p282 = por %p280, %p281
    %p283 = scmp.ne.s32.totalorder %s275, %s277
    %p284 = scmp.eq.s32.totalorder %s31, 1
    %p285 = por %p283, %p284
    %p286 = scmp.ne.s32.totalorder %s277, %s278
    %p287 = scmp.eq.s32.totalorder %s31, 0
    %p288 = por %p286, %p287
    %p289 = scmp.ne.s32.totalorder %s277, %s278
    %p290 = scmp.eq.s32.totalorder %s32, 1
    %p291 = por %p289, %p290
    %p293 = scmp.ne.s32.totalorder %s278, %s292
    %p294 = scmp.eq.s32.totalorder %s32, 0
    %p295 = por %p293, %p294
    %s297 = sadd.s32 %s296, 1
    %p300 = scmp.eq.s32.totalorder %s26, 1
    %p301 = scmp.ne.s32.totalorder %s296, %s298
    %p302 = scmp.eq.s32.totalorder %s26, 0
    %p303 = por %p301, %p302
    %p304 = scmp.ne.s32.totalorder %s296, %s298
    %p305 = scmp.eq.s32.totalorder %s31, 1
    %p306 = por %p304, %p305
    %p307 = scmp.ne.s32.totalorder %s298, %s299
    %p308 = scmp.eq.s32.totalorder %s31, 0
    %p309 = por %p307, %p308
    %p310 = scmp.ne.s32.totalorder %s298, %s299
    %p311 = scmp.eq.s32.totalorder %s32, 1
    %p312 = por %p310, %p311
    %p314 = scmp.ne.s32.totalorder %s299, %s313
    %p315 = scmp.eq.s32.totalorder %s32, 0
    %p316 = por %p314, %p315
    %s318 = sadd.s32 %s317, 1
    %p321 = scmp.eq.s32.totalorder %s26, 1
    %p322 = scmp.ne.s32.totalorder %s317, %s319
    %p323 = scmp.eq.s32.totalorder %s26, 0
    %p324 = por %p322, %p323
    %p325 = scmp.ne.s32.totalorder %s317, %s319
    %p326 = scmp.eq.s32.totalorder %s31, 1
    %p327 = por %p325, %p326
    %p328 = scmp.ne.s32.totalorder %s319, %s320
    %p329 = scmp.eq.s32.totalorder %s31, 0
    %p330 = por %p328, %p329
    %p331 = scmp.ne.s32.totalorder %s319, %s320
    %p332 = scmp.eq.s32.totalorder %s32, 1
    %p333 = por %p331, %p332
    %p335 = scmp.ne.s32.totalorder %s320, %s334
    %p336 = scmp.eq.s32.totalorder %s32, 0
    %p337 = por %p335, %p336
    %s338 = ssub.s32 %s26, %s33
    %p339 = scmp.eq.s32.totalorder %s338, 0
    %s341 = sadd.s32 %s340, 1
    %s342 = scalar_select %p339, %s340, %s341
    %p345 = pneg %p339
    %p346 = scmp.eq.s32.totalorder %s26, 1
    %p347 = por %p345, %p346
    %p348 = scmp.ne.s32.totalorder %s340, %s343
    %p349 = scmp.eq.s32.totalorder %s26, 0
    %p350 = por %p348, %p349
    %p351 = scmp.ne.s32.totalorder %s340, %s343
    %p352 = scmp.eq.s32.totalorder %s31, 1
    %p353 = por %p351, %p352
    %p354 = scmp.ne.s32.totalorder %s343, %s344
    %p355 = scmp.eq.s32.totalorder %s31, 0
    %p356 = por %p354, %p355
    %p357 = scmp.ne.s32.totalorder %s343, %s344
    %p358 = scmp.eq.s32.totalorder %s32, 1
    %p359 = por %p357, %p358
    %p361 = scmp.ne.s32.totalorder %s344, %s360
    %p362 = scmp.eq.s32.totalorder %s32, 0
    %p363 = por %p361, %p362
    %s364 = ssub.s32 %s26, %s33
    %p365 = scmp.eq.s32.totalorder %s364, 0
    %s367 = sadd.s32 %s366, 1
    %s368 = scalar_select %p365, %s366, %s367
    %p371 = pneg %p365
    %p372 = scmp.eq.s32.totalorder %s26, 1
    %p373 = por %p371, %p372
    %p374 = scmp.ne.s32.totalorder %s366, %s369
    %p375 = scmp.eq.s32.totalorder %s26, 0
    %p376 = por %p374, %p375
    %p377 = scmp.ne.s32.totalorder %s366, %s369
    %p378 = scmp.eq.s32.totalorder %s31, 1
    %p379 = por %p377, %p378
    %p380 = scmp.ne.s32.totalorder %s369, %s370
    %p381 = scmp.eq.s32.totalorder %s31, 0
    %p382 = por %p380, %p381
    %p383 = scmp.ne.s32.totalorder %s369, %s370
    %p384 = scmp.eq.s32.totalorder %s32, 1
    %p385 = por %p383, %p384
    %p387 = scmp.ne.s32.totalorder %s370, %s386
    %p388 = scmp.eq.s32.totalorder %s32, 0
    %p389 = por %p387, %p388
    %p390 = scmp.le.s32.totalorder 1, %s26
    %p391 = scmp.lt.s32.totalorder %s26, 3
    %p392 = pnand %p390, %p391
    %p393 = pneg %p392
    // Predicated region
    $region9: #{_lambda_.8} parent=5 // pred_check
      _
    $region10: #{_lambda_.8} parent=5 // pred_check_branch
      %395 = sbr.rel (%p392) target = $region12
    $region11: #{_lambda_.8} parent=5 // pred_region
      %s396 = ssub.s32 %s26, 1
      // Predicated region
      $region13: #{_lambda_.8} parent=11 // pred_check
        %p397 = pneg %p99
      $region14: #{_lambda_.8} parent=11 // pred_check_branch
        %399 = sbr.rel (%p397) target = $region16
      $region15: #{_lambda_.8} parent=11 // pred_region
        _
      $region16: #{_lambda_.8} parent=11 // pred_fallthru
        _
      // Predicated region
      $region17: #{_lambda_.8} parent=11 // pred_check
        %p400 = pneg %p120
      $region18: #{_lambda_.8} parent=11 // pred_check_branch
        %402 = sbr.rel (%p400) target = $region20
      $region19: #{_lambda_.8} parent=11 // pred_region
        _
      $region20: #{_lambda_.8} parent=11 // pred_fallthru
        _
      // Predicated region
      $region21: #{_lambda_.8} parent=11 // pred_check
        %p403 = pneg %p141
      $region22: #{_lambda_.8} parent=11 // pred_check_branch
        %405 = sbr.rel (%p403) target = $region24
      $region23: #{_lambda_.8} parent=11 // pred_region
        _
      $region24: #{_lambda_.8} parent=11 // pred_fallthru
        _
      // Predicated region
      $region25: #{_lambda_.8} parent=11 // pred_check
        %p406 = pneg %p162
      $region26: #{_lambda_.8} parent=11 // pred_check_branch
        %408 = sbr.rel (%p406) target = $region28
      $region27: #{_lambda_.8} parent=11 // pred_region
        _
      $region28: #{_lambda_.8} parent=11 // pred_fallthru
        _
      // Predicated region
      $region29: #{_lambda_.8} parent=11 // pred_check
        %p409 = pneg %p183
      $region30: #{_lambda_.8} parent=11 // pred_check_branch
        %411 = sbr.rel (%p409) target = $region32
      $region31: #{_lambda_.8} parent=11 // pred_region
        _
      $region32: #{_lambda_.8} parent=11 // pred_fallthru
        _
      // Predicated region
      $region33: #{_lambda_.8} parent=11 // pred_check
        %p412 = pneg %p204
      $region34: #{_lambda_.8} parent=11 // pred_check_branch
        %414 = sbr.rel (%p412) target = $region36
      $region35: #{_lambda_.8} parent=11 // pred_region
        _
      $region36: #{_lambda_.8} parent=11 // pred_fallthru
        _
      // Predicated region
      $region37: #{_lambda_.8} parent=11 // pred_check
        %p415 = pneg %p225
      $region38: #{_lambda_.8} parent=11 // pred_check_branch
        %417 = sbr.rel (%p415) target = $region40
      $region39: #{_lambda_.8} parent=11 // pred_region
        _
      $region40: #{_lambda_.8} parent=11 // pred_fallthru
        _
      // Predicated region
      $region41: #{_lambda_.8} parent=11 // pred_check
        %p418 = pneg %p246
      $region42: #{_lambda_.8} parent=11 // pred_check_branch
        %420 = sbr.rel (%p418) target = $region44
      $region43: #{_lambda_.8} parent=11 // pred_region
        _
      $region44: #{_lambda_.8} parent=11 // pred_fallthru
        _
      // Predicated region
      $region45: #{_lambda_.8} parent=11 // pred_check
        %p421 = pneg %p267
      $region46: #{_lambda_.8} parent=11 // pred_check_branch
        %423 = sbr.rel (%p421) target = $region48
      $region47: #{_lambda_.8} parent=11 // pred_region
        _
      $region48: #{_lambda_.8} parent=11 // pred_fallthru
        _
      // Predicated region
      $region49: #{_lambda_.8} parent=11 // pred_check
        %p424 = pneg %p288
      $region50: #{_lambda_.8} parent=11 // pred_check_branch
        %426 = sbr.rel (%p424) target = $region52
      $region51: #{_lambda_.8} parent=11 // pred_region
        _
      $region52: #{_lambda_.8} parent=11 // pred_fallthru
        _
      // Predicated region
      $region53: #{_lambda_.8} parent=11 // pred_check
        %p427 = pneg %p309
      $region54: #{_lambda_.8} parent=11 // pred_check_branch
        %429 = sbr.rel (%p427) target = $region56
      $region55: #{_lambda_.8} parent=11 // pred_region
        _
      $region56: #{_lambda_.8} parent=11 // pred_fallthru
        _
      // Predicated region
      $region57: #{_lambda_.8} parent=11 // pred_check
        %p430 = pneg %p330
      $region58: #{_lambda_.8} parent=11 // pred_check_branch
        %432 = sbr.rel (%p430) target = $region60
      $region59: #{_lambda_.8} parent=11 // pred_region
        _
      $region60: #{_lambda_.8} parent=11 // pred_fallthru
        _
    $region12: #{_lambda_.8} parent=5 // pred_fallthru
      _
    %p433 = scmp.lt.s32.totalorder %s26, 2
    // Predicated region
    $region61: #{_lambda_.8} parent=5 // pred_check
      %p434 = pneg %p433
    $region62: #{_lambda_.8} parent=5 // pred_check_branch
      %436 = sbr.rel (%p434) target = $region64
    $region63: #{_lambda_.8} parent=5 // pred_region
      // Predicated region
      $region65: #{_lambda_.8} parent=63 // pred_check
        %p437 = pneg %p46
      $region66: #{_lambda_.8} parent=63 // pred_check_branch
        %439 = sbr.rel (%p437) target = $region68
      $region67: #{_lambda_.8} parent=63 // pred_region
        %p440 = scmp.lt.s32.totalorder %s26, 1
        %s441 = scalar_select %p440, %s26, 1
        %s442 = smul.addr %s441, 2
        %s443 = smul.addr %s442, 8
        %s444 = scalar_lea.vmem %s0, %s443
      $region68: #{_lambda_.8} parent=63 // pred_fallthru
        _
      // Predicated region
      $region69: #{_lambda_.8} parent=63 // pred_check
        %p445 = pneg %p72
      $region70: #{_lambda_.8} parent=63 // pred_check_branch
        %447 = sbr.rel (%p445) target = $region72
      $region71: #{_lambda_.8} parent=63 // pred_region
        %p448 = scmp.lt.s32.totalorder %s26, 1
        %s449 = scalar_select %p448, %s26, 1
        %s450 = smul.addr %s449, 2
        %s451 = smul.addr %s450, 8
        %s452 = scalar_lea.vmem %s1, %s451
      $region72: #{_lambda_.8} parent=63 // pred_fallthru
        _
    $region64: #{_lambda_.8} parent=5 // pred_fallthru
      _
    %p453 = scmp.le.s32.totalorder 1, %s26
    %p454 = scmp.lt.s32.totalorder %s26, 3
    %p455 = pnand %p453, %p454
    %p456 = pneg %p455
    // Predicated region
    $region73: #{_lambda_.8} parent=5 // pred_check
      _
    $region74: #{_lambda_.8} parent=5 // pred_check_branch
      %458 = sbr.rel (%p455) target = $region76
    $region75: #{_lambda_.8} parent=5 // pred_region
      %s459 = ssub.s32 %s26, 1
      %p460 = scmp.lt.s32.totalorder %s31, 1
      %s461 = scalar_select %p460, %s31, 1
      %s462 = smul.addr %s461, 2
      %s463 = smul.addr %s462, 8
      %s464 = scalar_lea.vmem %s0, %s463
      %p465 = pneg %p52
      %p466 = pneg %p49
      %p467 = scmp.lt.s32.totalorder %s31, 1
      %s468 = scalar_select %p467, %s31, 1
      %s469 = smul.addr %s468, 2
      %s470 = smul.addr %s469, 8
      %s471 = scalar_lea.vmem %s1, %s470
      %p472 = pneg %p78
      %p473 = pneg %p75
      %p474 = pneg %p99
      %p475 = pneg %p96
      %p476 = pneg %p120
      %p477 = pneg %p117
      %p478 = pneg %p141
      %p479 = pneg %p138
      %p480 = pneg %p162
      %p481 = pneg %p159
      %p482 = pneg %p183
      %p483 = pneg %p180
      %p484 = pneg %p204
      %p485 = pneg %p201
      %p486 = pneg %p225
      %p487 = pneg %p222
      %p488 = pneg %p246
      %p489 = pneg %p243
      %p490 = pneg %p267
      %p491 = pneg %p264
      %p492 = pneg %p288
      %p493 = pneg %p285
      %p494 = pneg %p309
      %p495 = pneg %p306
      %p496 = pneg %p330
      %p497 = pneg %p327
      %p498 = pneg %p356
      %p499 = pneg %p353
      %p500 = scmp.lt.s32.totalorder %s31, 1
      %s501 = scalar_select %p500, %s31, 1
      %s502 = smul.addr %s501, 2
      %s503 = smul.addr %s502, 8
      %s504 = scalar_lea.vmem %s14, %s503
      %p505 = pneg %p382
      %p506 = pneg %p379
      %p507 = scmp.lt.s32.totalorder %s31, 1
      %s508 = scalar_select %p507, %s31, 1
      %s509 = smul.addr %s508, 2
      %s510 = smul.addr %s509, 8
      %s511 = scalar_lea.vmem %s15, %s510
      %p512 = scmp.lt.s32.totalorder %s31, 1
      %s513 = scalar_select %p512, %s31, 1
      %s514 = smul.addr %s513, 2
      %s515 = smul.addr %s514, 8
      %s516 = scalar_lea.vmem %s0, %s515
      %p517 = scmp.lt.s32.totalorder %s31, 1
      %s518 = scalar_select %p517, %s31, 1
      %s519 = smul.addr %s518, 2
      %s520 = smul.addr %s519, 8
      %s521 = scalar_lea.vmem %s1, %s520
      %p522 = scmp.lt.s32.totalorder %s31, 1
      %s523 = scalar_select %p522, %s31, 1
      %s524 = smul.addr %s523, 2
      %s525 = smul.addr %s524, 8
      %s526 = scalar_lea.vmem %s14, %s525
      %p527 = scmp.lt.s32.totalorder %s31, 1
      %s528 = scalar_select %p527, %s31, 1
      %s529 = smul.addr %s528, 2
      %s530 = smul.addr %s529, 8
      %s531 = scalar_lea.vmem %s15, %s530
      %v532 = vld [vmem:[#allocation3] sm:$0x1]
      %v533 = vld [vmem:[#allocation4] sm:$0x1]
      %v534 = vld [vmem:[%s516] sm:$0xff]
      %v535 = vld [vmem:[%s516 + $0x8] sm:$0xff]
      %v536 = vld [vmem:[%s2] sm:$0xff]
      %v537 = vld [vmem:[%s2 + $0x8] sm:$0xff]
      %v538 = vld [vmem:[%s2 + $0x10] sm:$0xff]
      %v539 = vld [vmem:[%s2 + $0x18] sm:$0xff]
      %v540 = vld [vmem:[%s3] sm:$0x1]
      %v542 = vlaneseq
      %v543 = vshrl.u32 %v542, 7
      %v544 = vsub.s32 0, %v543
      %v545 = vrot.slane %v540, %v544
      %vm547 = vcmask 261120
      %v549 = vsel %vm547, %v534, 0
      %v552 = vsel %vm547, %v535, 0
      %554 = vmatprep.subr.mxu0 0.0
      %555 = vmatpush1.msra.mxu0 0.0
      %556 = vmatprep.subr.mxu0 0.0
      %557 = vmatpush1.msra.mxu0 0.0
      %558 = vmatprep.subr.mxu0 0.0
      %559 = vmatpush1.msra.mxu0 0.0
      %560 = vmatprep.subr.mxu0 0.0
      %561 = vmatpush1.msra.mxu0 0.0
      %562 = vmatprep.subr.mxu0 0.0
      %563 = vmatpush1.msra.mxu0 0.0
      %564 = vmatprep.subr.mxu0 0.0
      %565 = vmatpush1.msra.mxu0 0.0
      %566 = vmatprep.subr.mxu0 0.0
      %567 = vmatpush1.msra.mxu0 0.0
      %568 = vmatprep.subr.mxu0 0.0
      %569 = vmatpush1.msra.mxu0 0.0
      %570 = vmatprep.subr.mxu0 0.0
      %571 = vmatpush1.msra.mxu0 0.0
      %572 = vmatprep.subr.mxu0 0.0
      %573 = vmatpush1.msra.mxu0 0.0
      %574 = vmatprep.subr.mxu0 0.0
      %575 = vmatpush1.msra.mxu0 0.0
      %576 = vmatprep.subr.mxu0 0.0
      %577 = vmatpush1.msra.mxu0 0.0
      %578 = vmatprep.subr.mxu0 0.0
      %579 = vmatpush1.msra.mxu0 %v539
      %580 = vmatprep.subr.mxu0 0.0
      %581 = vmatpush1.msra.mxu0 %v538
      %582 = vmatprep.subr.mxu0 0.0
      %583 = vmatpush1.msra.mxu0 %v537
      %584 = vmatprep.subr.mxu0 0.0
      %585 = vmatpush1.msra.mxu0 %v536
      %586 = vmatprep.subr.mxu0 0.0
      %587 = vmatpush2.msra.mxu0 0.0
      %588 = vmatprep.subr.mxu0 0.0
      %589 = vmatpush2.msra.mxu0 0.0
      %590 = vmatprep.subr.mxu0 0.0
      %591 = vmatpush2.msra.mxu0 0.0
      %592 = vmatprep.subr.mxu0 0.0
      %593 = vmatpush2.msra.mxu0 0.0
      %594 = vmatprep.subr.mxu0 0.0
      %595 = vmatpush2.msra.mxu0 0.0
      %596 = vmatprep.subr.mxu0 0.0
      %597 = vmatpush2.msra.mxu0 0.0
      %598 = vmatprep.subr.mxu0 0.0
      %599 = vmatpush2.msra.mxu0 0.0
      %600 = vmatprep.subr.mxu0 0.0
      %601 = vmatpush2.msra.mxu0 0.0
      %602 = vmatprep.subr.mxu0 0.0
      %603 = vmatpush2.msra.mxu0 0.0
      %604 = vmatprep.subr.mxu0 0.0
      %605 = vmatpush2.msra.mxu0 0.0
      %606 = vmatprep.subr.mxu0 0.0
      %607 = vmatpush2.msra.mxu0 0.0
      %608 = vmatprep.subr.mxu0 0.0
      %609 = vmatpush2.msra.mxu0 0.0
      %610 = vmatprep.subr.mxu0 0.0
      %611 = vmatpush2.msra.mxu0 0.0
      %612 = vmatprep.subr.mxu0 0.0
      %613 = vmatpush2.msra.mxu0 0.0
      %614 = vmatprep.subr.mxu0 0.0
      %615 = vmatpush2.msra.mxu0 0.0
      %616 = vmatprep.subr.mxu0 0.0
      %617 = vmatpush2.msra.mxu0 0.0
      %618 = vmatprep.mubr.f32.mxu0 0.0
      %619 = vmatmul.mubr.f32.gmra.mxu0 %v549
      %v620 = vpop.f32.mrf.mxu0
      %v621 = vadd.f32 %v545, %v620
      %v622 = vpop.f32.mrf.mxu0
      %623 = vmatprep.mubr.f32.mxu0 0.0
      %624 = vmatmul.mubr.f32.gmra.mxu0 %v552
      %v625 = vpop.f32.mrf.mxu0
      %v626 = vadd.f32 %v545, %v625
      %v627 = vpop.f32.mrf.mxu0
      %628 = vdwg.mxu0
      %vm629 = vcmp.ge.f32.partialorder %v621, 0.0
      %vm630 = vcmp.ge.f32.partialorder %v626, 0.0
      %v632 = vlaneseq
      %v633 = vshrl.u32 %v632, 7
      %v634 = vsub.s32 0, %v633
      %v635 = vrot.slane %v532, %v634
      %636 = vset.pattern.permute.xlu0 0
      %637 = vperm.xlu0 %636, %v635
      %v638 = vpop.permute.xlu0 %637
      %v640 = vmul.f32 %v638, %v621
      %v641 = vmul.f32 %v638, %v626
      %v642 = vsel %vm629, %v621, %v640
      %v643 = vsel %vm630, %v626, %v641
      %vm644 = vcmask 523264
      %645 = vst.msk [vmem:[#allocation2 + $0x2] sm:$0xff] %vm644, %v642
      %646 = vst.msk [vmem:[#allocation2 + $0xa] sm:$0xff] %vm644, %v643
      %v647 = vld [vmem:[%s3] sm:$0x1]
      %vm648 = vcmp.ge.f32.partialorder %v647, 0.0
      %649 = vset.pattern.permute.xlu0 0
      %650 = vperm.xlu0 %649, %v532
      %v651 = vpop.permute.xlu0 %650
      %v653 = vlaneseq
      %v654 = vshrl.u32 %v653, 7
      %v655 = vsub.s32 0, %v654
      %v656 = vrot.slane %v651, %v655
      %v657 = vmul.f32 %v656, %v647
      %v658 = vsel %vm648, %v647, %v657
      %v660 = vlaneseq
      %v661 = vshrl.u32 %v660, 7
      %v662 = vsub.s32 0, %v661
      %v663 = vrot.slane %v658, %v662
      %vm665 = vcmask 517120
      %666 = vst.msk [vmem:[#allocation2] sm:$0x3] %vm665, %v663
      %667 = vst.msk [vmem:[#allocation2 + $0x12] sm:$0x3] %vm665, %v663
      %v668 = vld [vmem:[#allocation2] sm:$0xff]
      %v669 = vld [vmem:[#allocation2 + $0x8] sm:$0xff]
      %v670 = vld [vmem:[#allocation2 + $0x10] sm:$0xf]
      %v671 = vsel %vm644, %v668, 0.0
      %v672 = vsel %vm644, %v669, 0.0
      %v673 = vadd.f32 %v671, %v672
      %vm674 = vcmask 519168
      %v675 = vsel %vm674, %v670, 0.0
      %v676 = vadd.f32 %v673, %v675
      %677 = vadd.xlane.f32.xlu0 %v676
      %v678 = vpop.xlane.xlu0 %677
      %v679 = vrot.slane %v678, 4
      %v680 = vadd.f32 %v678, %v679
      %v681 = vrot.slane %v680, 2
      %v682 = vadd.f32 %v680, %v681
      %v683 = vrot.slane %v682, 1
      %v684 = vadd.f32 %v682, %v683
      %s685 = vtos %v684
      %v686 = vrcp.pop 1280.0
      %s687 = vtos %v686
      %s688 = smul.f32 %s685, %s687
      %v689 = vstv %s688
      %v690 = vsub.f32 %v668, %v689
      %v691 = vsub.f32 %v669, %v689
      %v692 = vsub.f32 %v670, %v689
      %v693 = vmul.f32 %v690, %v690
      %v694 = vmul.f32 %v691, %v691
      %v695 = vmul.f32 %v692, %v692
      %v696 = vsel %vm644, %v693, 0.0
      %v697 = vsel %vm644, %v694, 0.0
      %v698 = vadd.f32 %v696, %v697
      %v699 = vsel %vm674, %v695, 0.0
      %v700 = vadd.f32 %v698, %v699
      %701 = vadd.xlane.f32.xlu0 %v700
      %v702 = vpop.xlane.xlu0 %701
      %v703 = vrot.slane %v702, 4
      %v704 = vadd.f32 %v702, %v703
      %v705 = vrot.slane %v704, 2
      %v706 = vadd.f32 %v704, %v705
      %v707 = vrot.slane %v706, 1
      %v708 = vadd.f32 %v706, %v707
      %s709 = vtos %v708
      %v710 = vrcp.pop 1280.0
      %s711 = vtos %v710
      %s712 = smul.f32 %s709, %s711
      %s713 = sadd.f32 %s712, 1e-08
      %v714 = vstv %s713
      %v715 = vrsqrt.pop %v714
      %s716 = vtos %v715
      %v717 = vstv %s716
      %v718 = vmul.f32 %v690, %v717
      %v719 = vmul.f32 %v691, %v717
      %v720 = vmul.f32 %v692, %v717
      %v721 = vld [vmem:[%s5] sm:$0x1]
      %v723 = vlaneseq
      %v724 = vshrl.u32 %v723, 7
      %v725 = vsub.s32 0, %v724
      %v726 = vrot.slane %v721, %v725
      %v728 = vmul.f32 %v718, %v726
      %v729 = vmul.f32 %v719, %v726
      %v730 = vmul.f32 %v720, %v726
      %v731 = vld [vmem:[%s6] sm:$0x1]
      %v733 = vlaneseq
      %v734 = vshrl.u32 %v733, 7
      %v735 = vsub.s32 0, %v734
      %v736 = vrot.slane %v731, %v735
      %v738 = vadd.f32 %v728, %v736
      %v739 = vadd.f32 %v729, %v736
      %v740 = vadd.f32 %v730, %v736
      %741 = vst.msk [vmem:[#allocation2] sm:$0xff] %vm644, %v738
      %742 = vst.msk [vmem:[#allocation2 + $0x8] sm:$0xff] %vm644, %v739
      %743 = vst.msk [vmem:[#allocation2 + $0x10] sm:$0xf] %vm674, %v740
      %v744 = vld [vmem:[#allocation2] sm:$0xff]
      %v745 = vld [vmem:[#allocation2 + $0x8] sm:$0xff]
      %v746 = vld [vmem:[%s7] sm:$0x1]
      %v747 = vlaneseq
      %v748 = vshrl.u32 %v747, 7
      %v749 = vsub.s32 0, %v748
      %v750 = vrot.slane %v746, %v749
      %v751 = vmul.f32 %v744, %v750
      %v752 = vmul.f32 %v745, %v750
      %v753 = vadd.f32 %v751, 0.0
      %v754 = vadd.f32 %v752, 0.0
      %v755 = vld [vmem:[#allocation2 + $0x2] sm:$0xff]
      %v756 = vld [vmem:[#allocation2 + $0xa] sm:$0xff]
      %v757 = vld [vmem:[%s7 + $0x1] sm:$0x1]
      %v758 = vlaneseq
      %v759 = vshrl.u32 %v758, 7
      %v760 = vsub.s32 0, %v759
      %v761 = vrot.slane %v757, %v760
      %v762 = vmul.f32 %v755, %v761
      %v763 = vmul.f32 %v756, %v761
      %v764 = vadd.f32 %v753, %v762
      %v765 = vadd.f32 %v754, %v763
      %v766 = vld [vmem:[#allocation2 + $0x4] sm:$0xff]
      %v767 = vld [vmem:[#allocation2 + $0xc] sm:$0xff]
      %v768 = vld [vmem:[%s7 + $0x2] sm:$0x1]
      %v769 = vlaneseq
      %v770 = vshrl.u32 %v769, 7
      %v771 = vsub.s32 0, %v770
      %v772 = vrot.slane %v768, %v771
      %v773 = vmul.f32 %v766, %v772
      %v774 = vmul.f32 %v767, %v772
      %v775 = vadd.f32 %v764, %v773
      %v776 = vadd.f32 %v765, %v774
      %v777 = vld [vmem:[%s8] sm:$0x1]
      %v779 = vlaneseq
      %v780 = vshrl.u32 %v779, 7
      %v781 = vsub.s32 0, %v780
      %v782 = vrot.slane %v777, %v781
      %v784 = vadd.f32 %v775, %v782
      %v785 = vadd.f32 %v776, %v782
      %vm786 = vcmp.ge.f32.partialorder %v784, 0.0
      %vm787 = vcmp.ge.f32.partialorder %v785, 0.0
      %v789 = vlaneseq
      %v790 = vshrl.u32 %v789, 7
      %v791 = vsub.s32 0, %v790
      %v792 = vrot.slane %v533, %v791
      %793 = vset.pattern.permute.xlu0 0
      %794 = vperm.xlu0 %793, %v792
      %v795 = vpop.permute.xlu0 %794
      %v797 = vmul.f32 %v795, %v784
      %v798 = vmul.f32 %v795, %v785
      %v799 = vsel %vm786, %v784, %v797
      %v800 = vsel %vm787, %v785, %v798
      %v801 = vsel %vm644, %v799, 0.0
      %v802 = vsel %vm644, %v800, 0.0
      %v803 = vadd.f32 %v801, %v802
      %804 = vadd.xlane.f32.xlu0 %v803
      %v805 = vpop.xlane.xlu0 %804
      %v806 = vrot.slane %v805, 4
      %v807 = vadd.f32 %v805, %v806
      %v808 = vrot.slane %v807, 2
      %v809 = vadd.f32 %v807, %v808
      %v810 = vrot.slane %v809, 1
      %v811 = vadd.f32 %v809, %v810
      %s812 = vtos %v811
      %v813 = vrcp.pop 1024.0
      %s814 = vtos %v813
      %s815 = smul.f32 %s812, %s814
      %v816 = vstv %s815
      %v817 = vsub.f32 %v799, %v816
      %v818 = vsub.f32 %v800, %v816
      %v819 = vmul.f32 %v817, %v817
      %v820 = vmul.f32 %v818, %v818
      %v821 = vsel %vm644, %v819, 0.0
      %v822 = vsel %vm644, %v820, 0.0
      %v823 = vadd.f32 %v821, %v822
      %824 = vadd.xlane.f32.xlu0 %v823
      %v825 = vpop.xlane.xlu0 %824
      %v826 = vrot.slane %v825, 4
      %v827 = vadd.f32 %v825, %v826
      %v828 = vrot.slane %v827, 2
      %v829 = vadd.f32 %v827, %v828
      %v830 = vrot.slane %v829, 1
      %v831 = vadd.f32 %v829, %v830
      %s832 = vtos %v831
      %v833 = vrcp.pop 1024.0
      %s834 = vtos %v833
      %s835 = smul.f32 %s832, %s834
      %s836 = sadd.f32 %s835, 1e-08
      %v837 = vstv %s836
      %v838 = vrsqrt.pop %v837
      %s839 = vtos %v838
      %v840 = vstv %s839
      %v841 = vmul.f32 %v817, %v840
      %v842 = vmul.f32 %v818, %v840
      %v843 = vld [vmem:[%s10] sm:$0x1]
      %v845 = vlaneseq
      %v846 = vshrl.u32 %v845, 7
      %v847 = vsub.s32 0, %v846
      %v848 = vrot.slane %v843, %v847
      %v850 = vmul.f32 %v841, %v848
      %v851 = vmul.f32 %v842, %v848
      %v852 = vld [vmem:[%s11] sm:$0x1]
      %v854 = vlaneseq
      %v855 = vshrl.u32 %v854, 7
      %v856 = vsub.s32 0, %v855
      %v857 = vrot.slane %v852, %v856
      %v859 = vadd.f32 %v850, %v857
      %v860 = vadd.f32 %v851, %v857
      %v861 = vld [vmem:[%s12] sm:$0xff]
      %v862 = vld [vmem:[%s12 + $0x8] sm:$0xff]
      %v863 = vld [vmem:[%s12 + $0x10] sm:$0xff]
      %v864 = vld [vmem:[%s12 + $0x18] sm:$0xff]
      %v865 = vld [vmem:[%s12 + $0x20] sm:$0xff]
      %v866 = vld [vmem:[%s12 + $0x28] sm:$0xff]
      %v867 = vld [vmem:[%s12 + $0x30] sm:$0xff]
      %v868 = vld [vmem:[%s12 + $0x38] sm:$0xff]
      %v869 = vld [vmem:[%s13] sm:$0x1]
      %v871 = vlaneseq
      %v872 = vshrl.u32 %v871, 7
      %v873 = vsub.s32 0, %v872
      %v874 = vrot.slane %v869, %v873
      %v877 = vsel %vm644, %v859, 0
      %v880 = vsel %vm644, %v860, 0
      %882 = vmatprep.subr.mxu0 0.0
      %883 = vmatpush1.msra.mxu0 0.0
      %884 = vmatprep.subr.mxu0 0.0
      %885 = vmatpush1.msra.mxu0 0.0
      %886 = vmatprep.subr.mxu0 0.0
      %887 = vmatpush1.msra.mxu0 0.0
      %888 = vmatprep.subr.mxu0 0.0
      %889 = vmatpush1.msra.mxu0 0.0
      %890 = vmatprep.subr.mxu0 0.0
      %891 = vmatpush1.msra.mxu0 0.0
      %892 = vmatprep.subr.mxu0 0.0
      %893 = vmatpush1.msra.mxu0 0.0
      %894 = vmatprep.subr.mxu0 0.0
      %895 = vmatpush1.msra.mxu0 0.0
      %896 = vmatprep.subr.mxu0 0.0
      %897 = vmatpush1.msra.mxu0 0.0
      %898 = vmatprep.subr.mxu0 0.0
      %899 = vmatpush1.msra.mxu0 %v868
      %900 = vmatprep.subr.mxu0 0.0
      %901 = vmatpush1.msra.mxu0 %v867
      %902 = vmatprep.subr.mxu0 0.0
      %903 = vmatpush1.msra.mxu0 %v866
      %904 = vmatprep.subr.mxu0 0.0
      %905 = vmatpush1.msra.mxu0 %v865
      %906 = vmatprep.subr.mxu0 0.0
      %907 = vmatpush1.msra.mxu0 %v864
      %908 = vmatprep.subr.mxu0 0.0
      %909 = vmatpush1.msra.mxu0 %v863
      %910 = vmatprep.subr.mxu0 0.0
      %911 = vmatpush1.msra.mxu0 %v862
      %912 = vmatprep.subr.mxu0 0.0
      %913 = vmatpush1.msra.mxu0 %v861
      %914 = vmatprep.subr.mxu0 0.0
      %915 = vmatpush2.msra.mxu0 0.0
      %916 = vmatprep.subr.mxu0 0.0
      %917 = vmatpush2.msra.mxu0 0.0
      %918 = vmatprep.subr.mxu0 0.0
      %919 = vmatpush2.msra.mxu0 0.0
      %920 = vmatprep.subr.mxu0 0.0
      %921 = vmatpush2.msra.mxu0 0.0
      %922 = vmatprep.subr.mxu0 0.0
      %923 = vmatpush2.msra.mxu0 0.0
      %924 = vmatprep.subr.mxu0 0.0
      %925 = vmatpush2.msra.mxu0 0.0
      %926 = vmatprep.subr.mxu0 0.0
      %927 = vmatpush2.msra.mxu0 0.0
      %928 = vmatprep.subr.mxu0 0.0
      %929 = vmatpush2.msra.mxu0 0.0
      %930 = vmatprep.subr.mxu0 0.0
      %931 = vmatpush2.msra.mxu0 0.0
      %932 = vmatprep.subr.mxu0 0.0
      %933 = vmatpush2.msra.mxu0 0.0
      %934 = vmatprep.subr.mxu0 0.0
      %935 = vmatpush2.msra.mxu0 0.0
      %936 = vmatprep.subr.mxu0 0.0
      %937 = vmatpush2.msra.mxu0 0.0
      %938 = vmatprep.subr.mxu0 0.0
      %939 = vmatpush2.msra.mxu0 0.0
      %940 = vmatprep.subr.mxu0 0.0
      %941 = vmatpush2.msra.mxu0 0.0
      %942 = vmatprep.subr.mxu0 0.0
      %943 = vmatpush2.msra.mxu0 0.0
      %944 = vmatprep.subr.mxu0 0.0
      %945 = vmatpush2.msra.mxu0 0.0
      %946 = vmatprep.mubr.f32.mxu0 0.0
      %947 = vmatmul.mubr.f32.gmra.mxu0 %v877
      %v948 = vpop.f32.mrf.mxu0
      %v949 = vadd.f32 %v874, %v948
      %v950 = vpop.f32.mrf.mxu0
      %951 = vmatprep.mubr.f32.mxu0 0.0
      %952 = vmatmul.mubr.f32.gmra.mxu0 %v880
      %v953 = vpop.f32.mrf.mxu0
      %v954 = vadd.f32 %v874, %v953
      %v955 = vpop.f32.mrf.mxu0
      %956 = vdwg.mxu0
      %v957 = vadd.f32 %v534, %v949
      %v958 = vadd.f32 %v535, %v954
      %959 = vst.msk [vmem:[%s526] sm:$0xff] %vm547, %v957
      %960 = vst.msk [vmem:[%s526 + $0x8] sm:$0xff] %vm547, %v958
      %v961 = vld [vmem:[%s521] sm:$0xff]
      %v962 = vld [vmem:[%s521 + $0x8] sm:$0xff]
      %965 = vrot.lane.b32.xlu0 %v949, 96
      %v966 = vpop.permute.xlu0 %965
      %967 = vrot.lane.b32.xlu0 %v954, 96
      %v968 = vpop.permute.xlu0 %967
      %v971 = vadd.f32 %v961, %v966
      %v972 = vadd.f32 %v962, %v968
      %973 = vst.msk [vmem:[%s531] sm:$0xff] %vm547, %v971
      %974 = vst.msk [vmem:[%s531 + $0x8] sm:$0xff] %vm547, %v972
      %p975 = scmp.lt.s32.totalorder %s31, 1
      %s976 = scalar_select %p975, %s31, 1
      %s977 = smul.addr %s976, 2
      %s978 = smul.addr %s977, 8
      %s979 = scalar_lea.vmem %s14, %s978
      %p980 = scmp.lt.s32.totalorder %s31, 1
      %s981 = scalar_select %p980, %s31, 1
      %s982 = smul.addr %s981, 2
      %s983 = smul.addr %s982, 8
      %s984 = scalar_lea.vmem %s15, %s983
      // Predicated region
      $region77: #{_lambda_.8} parent=75 // pred_check
        %p985 = pneg %p353
      $region78: #{_lambda_.8} parent=75 // pred_check_branch
        %987 = sbr.rel (%p985) target = $region80
      $region79: #{_lambda_.8} parent=75 // pred_region
        _
      $region80: #{_lambda_.8} parent=75 // pred_fallthru
        _
      // Predicated region
      $region81: #{_lambda_.8} parent=75 // pred_check
        %p988 = pneg %p379
      $region82: #{_lambda_.8} parent=75 // pred_check_branch
        %990 = sbr.rel (%p988) target = $region84
      $region83: #{_lambda_.8} parent=75 // pred_region
        _
      $region84: #{_lambda_.8} parent=75 // pred_fallthru
        _
    $region76: #{_lambda_.8} parent=5 // pred_fallthru
      _
    %p991 = scmp.le.s32.totalorder 2, %s26
    // Predicated region
    $region85: #{_lambda_.8} parent=5 // pred_check
      %p992 = pneg %p991
    $region86: #{_lambda_.8} parent=5 // pred_check_branch
      %994 = sbr.rel (%p992) target = $region88
    $region87: #{_lambda_.8} parent=5 // pred_region
      %s995 = ssub.s32 %s26, 2
      // Predicated region
      $region89: #{_lambda_.8} parent=87 // pred_check
        %p996 = pneg %p359
      $region90: #{_lambda_.8} parent=87 // pred_check_branch
        %998 = sbr.rel (%p996) target = $region92
      $region91: #{_lambda_.8} parent=87 // pred_region
        %p999 = scmp.lt.s32.totalorder %s32, 1
        %s1000 = scalar_select %p999, %s32, 1
        %s1001 = smul.addr %s1000, 2
        %s1002 = smul.addr %s1001, 8
        %s1003 = scalar_lea.vmem %s14, %s1002
      $region92: #{_lambda_.8} parent=87 // pred_fallthru
        _
      // Predicated region
      $region93: #{_lambda_.8} parent=87 // pred_check
        %p1004 = pneg %p385
      $region94: #{_lambda_.8} parent=87 // pred_check_branch
        %1006 = sbr.rel (%p1004) target = $region96
      $region95: #{_lambda_.8} parent=87 // pred_region
        %p1007 = scmp.lt.s32.totalorder %s32, 1
        %s1008 = scalar_select %p1007, %s32, 1
        %s1009 = smul.addr %s1008, 2
        %s1010 = smul.addr %s1009, 8
        %s1011 = scalar_lea.vmem %s15, %s1010
      $region96: #{_lambda_.8} parent=87 // pred_fallthru
        _
    $region88: #{_lambda_.8} parent=5 // pred_fallthru
      _
  $region6: #{_lambda_.8} parent=0 // loop_footer
    %s30 = sadd.s32 1, %s26
  $region7: #{_lambda_.8} parent=0 // loop_footer_branch
    %25 = sbr.rel target = $region3
  $region8: #{_lambda_.8} parent=0 // loop_exit
    _

// kernel: _lambda_.10
$region0: #{_lambda_.10}
  #allocation0 [shape = 'u32[]', space=smem, size = 0x4, offset = 0x4, fixed_abs, tag = 'smem constant byte address 0x4 - core index']
  #allocation1 [shape = 'u32[144,128]{1,0:T(1,128)}', space=vmem, size = 0x12000, scoped, tag = 'internal scratch']
  #allocation2 [shape = 'f32[20,64]{1,0:T(8,128)}', space=vmem, size = 0x3000, scoped, tag = 'scratch operand']
  #allocation3 [shape = 'f32[1,1]{1,0:T(1,128)S(1)}', space=vmem, size = 0x200, scoped, tag = 'scoped memory for _lambda_.10']
  #allocation4 [shape = 'f32[1,1]{1,0:T(1,128)S(1)}', space=vmem, size = 0x200, scoped, tag = 'scoped memory for _lambda_.10']
  %s0 = inlined_call_operand.vmem [shape: f32[2,16,32], index: 0, kind: input, shape index: {}]
  %s1 = inlined_call_operand.vmem [shape: f32[2,16,32], index: 1, kind: input, shape index: {}]
  %s2 = inlined_call_operand.vmem [shape: f32[32,64], index: 2, kind: input, shape index: {}]
  %s3 = inlined_call_operand.vmem [shape: f32[1,64], index: 3, kind: input, shape index: {}]
  %s4 = inlined_call_operand.<no memory space> [shape: f32[1,1], index: 4, kind: input, shape index: {}]
  %s5 = inlined_call_operand.vmem [shape: f32[1,64], index: 5, kind: input, shape index: {}]
  %s6 = inlined_call_operand.vmem [shape: f32[1,64], index: 6, kind: input, shape index: {}]
  %s7 = inlined_call_operand.vmem [shape: f32[3,64], index: 7, kind: input, shape index: {}]
  %s8 = inlined_call_operand.vmem [shape: f32[1,64], index: 8, kind: input, shape index: {}]
  %s9 = inlined_call_operand.<no memory space> [shape: f32[1,1], index: 9, kind: input, shape index: {}]
  %s10 = inlined_call_operand.vmem [shape: f32[1,64], index: 10, kind: input, shape index: {}]
  %s11 = inlined_call_operand.vmem [shape: f32[1,64], index: 11, kind: input, shape index: {}]
  %s12 = inlined_call_operand.vmem [shape: f32[64,32], index: 12, kind: input, shape index: {}]
  %s13 = inlined_call_operand.vmem [shape: f32[1,32], index: 13, kind: input, shape index: {}]
  %s14 = inlined_call_operand.hbm [shape: f32[2,16,32], index: 14, kind: output, shape index: {0}]
  %s15 = inlined_call_operand.vmem [shape: f32[2,16,32], index: 15, kind: output, shape index: {1}]
  %16 = xla_tuple %s14, %s15
  %s17 = sld [smem:[#allocation0]]
  $region97: #{_lambda_.10} parent=0
    _
  %s19 = ssub.s32 1, %s17
  %s20 = scalar_select 0, %s19, %s17
  %v21 = vstv %s4
  %22 = vst [vmem:[#allocation3] sm:$0x1] %v21
  %v23 = vstv %s9
  %24 = vst [vmem:[#allocation4] sm:$0x1] %v23
  $region1: #{_lambda_.10} parent=0
    #allocation5 [shape = 'u8[16384]{0}', space=vmem, size = 0x4000, scoped, tag = 'output window, operand 0']
    #allocation6 [shape = 's32[2]{0}', space=sflag, size = 0x8, scoped, tag = 'scoped memory for _lambda_.10']
    %25 = vsyncpa [#allocation6], 0
    %s26 = scalar_lea.sflag [#allocation6], 1
    %27 = vsyncpa %s26, 0
    loop: start=0, step=1, limit=4
    $region2: #{_lambda_.10} parent=1 // loop_pre_header
      _
    $region3: #{_lambda_.10} parent=1 // loop_header
      %s29 = sphi 0, %s33
      %p30 = scmp.ge.s32.totalorder %s29, 4
      %s39 = sphi 0, %s41
      %s42 = sphi 0, %s39
      %s43 = sphi 0, %s42
      %s59 = sphi 0, %s43
      %s65 = sphi 0, %s67
      %s68 = sphi 0, %s65
      %s69 = sphi 0, %s68
      %s85 = sphi 0, %s69
      %s89 = sphi 0, %s89
      %s91 = sphi 0, %s89
      %s92 = sphi 0, %s91
      %s106 = sphi 0, %s92
      %s110 = sphi 0, %s110
      %s112 = sphi 0, %s110
      %s113 = sphi 0, %s112
      %s127 = sphi 0, %s113
      %s131 = sphi 0, %s131
      %s133 = sphi 0, %s131
      %s134 = sphi 0, %s133
      %s148 = sphi 0, %s134
      %s152 = sphi 0, %s152
      %s154 = sphi 0, %s152
      %s155 = sphi 0, %s154
      %s169 = sphi 0, %s155
      %s173 = sphi 0, %s173
      %s175 = sphi 0, %s173
      %s176 = sphi 0, %s175
      %s190 = sphi 0, %s176
      %s194 = sphi 0, %s194
      %s196 = sphi 0, %s194
      %s197 = sphi 0, %s196
      %s211 = sphi 0, %s197
      %s215 = sphi 0, %s215
      %s217 = sphi 0, %s215
      %s218 = sphi 0, %s217
      %s232 = sphi 0, %s218
      %s236 = sphi 0, %s236
      %s238 = sphi 0, %s236
      %s239 = sphi 0, %s238
      %s253 = sphi 0, %s239
      %s257 = sphi 0, %s257
      %s259 = sphi 0, %s257
      %s260 = sphi 0, %s259
      %s274 = sphi 0, %s260
      %s278 = sphi 0, %s278
      %s280 = sphi 0, %s278
      %s281 = sphi 0, %s280
      %s295 = sphi 0, %s281
      %s299 = sphi 0, %s299
      %s301 = sphi 0, %s299
      %s302 = sphi 0, %s301
      %s316 = sphi 0, %s302
      %s320 = sphi 0, %s320
      %s322 = sphi 0, %s320
      %s323 = sphi 0, %s322
      %s337 = sphi 0, %s323
      %s343 = sphi 0, %s345
      %s346 = sphi 0, %s343
      %s347 = sphi 0, %s346
      %s363 = sphi 0, %s347
      %s369 = sphi 0, %s371
      %s372 = sphi 0, %s369
      %s373 = sphi 0, %s372
      %s389 = sphi 0, %s373
    $region4: #{_lambda_.10} parent=1 // loop_header_branch
      %32 = sbr.rel (%p30) target = $region8
    $region5: #{_lambda_.10} parent=1 // loop_body
      %s34 = ssub.s32 %s29, 1
      %s35 = ssub.s32 %s29, 2
      %s36 = sadd.s32 %s29, 1
      %s37 = ssub.s32 %s29, %s36
      %p38 = scmp.eq.s32.totalorder %s37, 0
      %s40 = sadd.s32 %s39, 1
      %s41 = scalar_select %p38, %s39, %s40
      %p44 = pneg %p38
      %p45 = scmp.eq.s32.totalorder %s29, 1
      %p46 = por %p44, %p45
      %p47 = scmp.ne.s32.totalorder %s39, %s42
      %p48 = scmp.eq.s32.totalorder %s29, 0
      %p49 = por %p47, %p48
      %p50 = scmp.ne.s32.totalorder %s39, %s42
      %p51 = scmp.eq.s32.totalorder %s34, 1
      %p52 = por %p50, %p51
      %p53 = scmp.ne.s32.totalorder %s42, %s43
      %p54 = scmp.eq.s32.totalorder %s34, 0
      %p55 = por %p53, %p54
      %p56 = scmp.ne.s32.totalorder %s42, %s43
      %p57 = scmp.eq.s32.totalorder %s35, 1
      %p58 = por %p56, %p57
      %p60 = scmp.ne.s32.totalorder %s43, %s59
      %p61 = scmp.eq.s32.totalorder %s35, 0
      %p62 = por %p60, %p61
      %s63 = ssub.s32 %s29, %s36
      %p64 = scmp.eq.s32.totalorder %s63, 0
      %s66 = sadd.s32 %s65, 1
      %s67 = scalar_select %p64, %s65, %s66
      %p70 = pneg %p64
      %p71 = scmp.eq.s32.totalorder %s29, 1
      %p72 = por %p70, %p71
      %p73 = scmp.ne.s32.totalorder %s65, %s68
      %p74 = scmp.eq.s32.totalorder %s29, 0
      %p75 = por %p73, %p74
      %p76 = scmp.ne.s32.totalorder %s65, %s68
      %p77 = scmp.eq.s32.totalorder %s34, 1
      %p78 = por %p76, %p77
      %p79 = scmp.ne.s32.totalorder %s68, %s69
      %p80 = scmp.eq.s32.totalorder %s34, 0
      %p81 = por %p79, %p80
      %p82 = scmp.ne.s32.totalorder %s68, %s69
      %p83 = scmp.eq.s32.totalorder %s35, 1
      %p84 = por %p82, %p83
      %p86 = scmp.ne.s32.totalorder %s69, %s85
      %p87 = scmp.eq.s32.totalorder %s35, 0
      %p88 = por %p86, %p87
      %s90 = sadd.s32 %s89, 1
      %p93 = scmp.eq.s32.totalorder %s29, 1
      %p94 = scmp.ne.s32.totalorder %s89, %s91
      %p95 = scmp.eq.s32.totalorder %s29, 0
      %p96 = por %p94, %p95
      %p97 = scmp.ne.s32.totalorder %s89, %s91
      %p98 = scmp.eq.s32.totalorder %s34, 1
      %p99 = por %p97, %p98
      %p100 = scmp.ne.s32.totalorder %s91, %s92
      %p101 = scmp.eq.s32.totalorder %s34, 0
      %p102 = por %p100, %p101
      %p103 = scmp.ne.s32.totalorder %s91, %s92
      %p104 = scmp.eq.s32.totalorder %s35, 1
      %p105 = por %p103, %p104
      %p107 = scmp.ne.s32.totalorder %s92, %s106
      %p108 = scmp.eq.s32.totalorder %s35, 0
      %p109 = por %p107, %p108
      %s111 = sadd.s32 %s110, 1
      %p114 = scmp.eq.s32.totalorder %s29, 1
      %p115 = scmp.ne.s32.totalorder %s110, %s112
      %p116 = scmp.eq.s32.totalorder %s29, 0
      %p117 = por %p115, %p116
      %p118 = scmp.ne.s32.totalorder %s110, %s112
      %p119 = scmp.eq.s32.totalorder %s34, 1
      %p120 = por %p118, %p119
      %p121 = scmp.ne.s32.totalorder %s112, %s113
      %p122 = scmp.eq.s32.totalorder %s34, 0
      %p123 = por %p121, %p122
      %p124 = scmp.ne.s32.totalorder %s112, %s113
      %p125 = scmp.eq.s32.totalorder %s35, 1
      %p126 = por %p124, %p125
      %p128 = scmp.ne.s32.totalorder %s113, %s127
      %p129 = scmp.eq.s32.totalorder %s35, 0
      %p130 = por %p128, %p129
      %s132 = sadd.s32 %s131, 1
      %p135 = scmp.eq.s32.totalorder %s29, 1
      %p136 = scmp.ne.s32.totalorder %s131, %s133
      %p137 = scmp.eq.s32.totalorder %s29, 0
      %p138 = por %p136, %p137
      %p139 = scmp.ne.s32.totalorder %s131, %s133
      %p140 = scmp.eq.s32.totalorder %s34, 1
      %p141 = por %p139, %p140
      %p142 = scmp.ne.s32.totalorder %s133, %s134
      %p143 = scmp.eq.s32.totalorder %s34, 0
      %p144 = por %p142, %p143
      %p145 = scmp.ne.s32.totalorder %s133, %s134
      %p146 = scmp.eq.s32.totalorder %s35, 1
      %p147 = por %p145, %p146
      %p149 = scmp.ne.s32.totalorder %s134, %s148
      %p150 = scmp.eq.s32.totalorder %s35, 0
      %p151 = por %p149, %p150
      %s153 = sadd.s32 %s152, 1
      %p156 = scmp.eq.s32.totalorder %s29, 1
      %p157 = scmp.ne.s32.totalorder %s152, %s154
      %p158 = scmp.eq.s32.totalorder %s29, 0
      %p159 = por %p157, %p158
      %p160 = scmp.ne.s32.totalorder %s152, %s154
      %p161 = scmp.eq.s32.totalorder %s34, 1
      %p162 = por %p160, %p161
      %p163 = scmp.ne.s32.totalorder %s154, %s155
      %p164 = scmp.eq.s32.totalorder %s34, 0
      %p165 = por %p163, %p164
      %p166 = scmp.ne.s32.totalorder %s154, %s155
      %p167 = scmp.eq.s32.totalorder %s35, 1
      %p168 = por %p166, %p167
      %p170 = scmp.ne.s32.totalorder %s155, %s169
      %p171 = scmp.eq.s32.totalorder %s35, 0
      %p172 = por %p170, %p171
      %s174 = sadd.s32 %s173, 1
      %p177 = scmp.eq.s32.totalorder %s29, 1
      %p178 = scmp.ne.s32.totalorder %s173, %s175
      %p179 = scmp.eq.s32.totalorder %s29, 0
      %p180 = por %p178, %p179
      %p181 = scmp.ne.s32.totalorder %s173, %s175
      %p182 = scmp.eq.s32.totalorder %s34, 1
      %p183 = por %p181, %p182
      %p184 = scmp.ne.s32.totalorder %s175, %s176
      %p185 = scmp.eq.s32.totalorder %s34, 0
      %p186 = por %p184, %p185
      %p187 = scmp.ne.s32.totalorder %s175, %s176
      %p188 = scmp.eq.s32.totalorder %s35, 1
      %p189 = por %p187, %p188
      %p191 = scmp.ne.s32.totalorder %s176, %s190
      %p192 = scmp.eq.s32.totalorder %s35, 0
      %p193 = por %p191, %p192
      %s195 = sadd.s32 %s194, 1
      %p198 = scmp.eq.s32.totalorder %s29, 1
      %p199 = scmp.ne.s32.totalorder %s194, %s196
      %p200 = scmp.eq.s32.totalorder %s29, 0
      %p201 = por %p199, %p200
      %p202 = scmp.ne.s32.totalorder %s194, %s196
      %p203 = scmp.eq.s32.totalorder %s34, 1
      %p204 = por %p202, %p203
      %p205 = scmp.ne.s32.totalorder %s196, %s197
      %p206 = scmp.eq.s32.totalorder %s34, 0
      %p207 = por %p205, %p206
      %p208 = scmp.ne.s32.totalorder %s196, %s197
      %p209 = scmp.eq.s32.totalorder %s35, 1
      %p210 = por %p208, %p209
      %p212 = scmp.ne.s32.totalorder %s197, %s211
      %p213 = scmp.eq.s32.totalorder %s35, 0
      %p214 = por %p212, %p213
      %s216 = sadd.s32 %s215, 1
      %p219 = scmp.eq.s32.totalorder %s29, 1
      %p220 = scmp.ne.s32.totalorder %s215, %s217
      %p221 = scmp.eq.s32.totalorder %s29, 0
      %p222 = por %p220, %p221
      %p223 = scmp.ne.s32.totalorder %s215, %s217
      %p224 = scmp.eq.s32.totalorder %s34, 1
      %p225 = por %p223, %p224
      %p226 = scmp.ne.s32.totalorder %s217, %s218
      %p227 = scmp.eq.s32.totalorder %s34, 0
      %p228 = por %p226, %p227
      %p229 = scmp.ne.s32.totalorder %s217, %s218
      %p230 = scmp.eq.s32.totalorder %s35, 1
      %p231 = por %p229, %p230
      %p233 = scmp.ne.s32.totalorder %s218, %s232
      %p234 = scmp.eq.s32.totalorder %s35, 0
      %p235 = por %p233, %p234
      %s237 = sadd.s32 %s236, 1
      %p240 = scmp.eq.s32.totalorder %s29, 1
      %p241 = scmp.ne.s32.totalorder %s236, %s238
      %p242 = scmp.eq.s32.totalorder %s29, 0
      %p243 = por %p241, %p242
      %p244 = scmp.ne.s32.totalorder %s236, %s238
      %p245 = scmp.eq.s32.totalorder %s34, 1
      %p246 = por %p244, %p245
      %p247 = scmp.ne.s32.totalorder %s238, %s239
      %p248 = scmp.eq.s32.totalorder %s34, 0
      %p249 = por %p247, %p248
      %p250 = scmp.ne.s32.totalorder %s238, %s239
      %p251 = scmp.eq.s32.totalorder %s35, 1
      %p252 = por %p250, %p251
      %p254 = scmp.ne.s32.totalorder %s239, %s253
      %p255 = scmp.eq.s32.totalorder %s35, 0
      %p256 = por %p254, %p255
      %s258 = sadd.s32 %s257, 1
      %p261 = scmp.eq.s32.totalorder %s29, 1
      %p262 = scmp.ne.s32.totalorder %s257, %s259
      %p263 = scmp.eq.s32.totalorder %s29, 0
      %p264 = por %p262, %p263
      %p265 = scmp.ne.s32.totalorder %s257, %s259
      %p266 = scmp.eq.s32.totalorder %s34, 1
      %p267 = por %p265, %p266
      %p268 = scmp.ne.s32.totalorder %s259, %s260
      %p269 = scmp.eq.s32.totalorder %s34, 0
      %p270 = por %p268, %p269
      %p271 = scmp.ne.s32.totalorder %s259, %s260
      %p272 = scmp.eq.s32.totalorder %s35, 1
      %p273 = por %p271, %p272
      %p275 = scmp.ne.s32.totalorder %s260, %s274
      %p276 = scmp.eq.s32.totalorder %s35, 0
      %p277 = por %p275, %p276
      %s279 = sadd.s32 %s278, 1
      %p282 = scmp.eq.s32.totalorder %s29, 1
      %p283 = scmp.ne.s32.totalorder %s278, %s280
      %p284 = scmp.eq.s32.totalorder %s29, 0
      %p285 = por %p283, %p284
      %p286 = scmp.ne.s32.totalorder %s278, %s280
      %p287 = scmp.eq.s32.totalorder %s34, 1
      %p288 = por %p286, %p287
      %p289 = scmp.ne.s32.totalorder %s280, %s281
      %p290 = scmp.eq.s32.totalorder %s34, 0
      %p291 = por %p289, %p290
      %p292 = scmp.ne.s32.totalorder %s280, %s281
      %p293 = scmp.eq.s32.totalorder %s35, 1
      %p294 = por %p292, %p293
      %p296 = scmp.ne.s32.totalorder %s281, %s295
      %p297 = scmp.eq.s32.totalorder %s35, 0
      %p298 = por %p296, %p297
      %s300 = sadd.s32 %s299, 1
      %p303 = scmp.eq.s32.totalorder %s29, 1
      %p304 = scmp.ne.s32.totalorder %s299, %s301
      %p305 = scmp.eq.s32.totalorder %s29, 0
      %p306 = por %p304, %p305
      %p307 = scmp.ne.s32.totalorder %s299, %s301
      %p308 = scmp.eq.s32.totalorder %s34, 1
      %p309 = por %p307, %p308
      %p310 = scmp.ne.s32.totalorder %s301, %s302
      %p311 = scmp.eq.s32.totalorder %s34, 0
      %p312 = por %p310, %p311
      %p313 = scmp.ne.s32.totalorder %s301, %s302
      %p314 = scmp.eq.s32.totalorder %s35, 1
      %p315 = por %p313, %p314
      %p317 = scmp.ne.s32.totalorder %s302, %s316
      %p318 = scmp.eq.s32.totalorder %s35, 0
      %p319 = por %p317, %p318
      %s321 = sadd.s32 %s320, 1
      %p324 = scmp.eq.s32.totalorder %s29, 1
      %p325 = scmp.ne.s32.totalorder %s320, %s322
      %p326 = scmp.eq.s32.totalorder %s29, 0
      %p327 = por %p325, %p326
      %p328 = scmp.ne.s32.totalorder %s320, %s322
      %p329 = scmp.eq.s32.totalorder %s34, 1
      %p330 = por %p328, %p329
      %p331 = scmp.ne.s32.totalorder %s322, %s323
      %p332 = scmp.eq.s32.totalorder %s34, 0
      %p333 = por %p331, %p332
      %p334 = scmp.ne.s32.totalorder %s322, %s323
      %p335 = scmp.eq.s32.totalorder %s35, 1
      %p336 = por %p334, %p335
      %p338 = scmp.ne.s32.totalorder %s323, %s337
      %p339 = scmp.eq.s32.totalorder %s35, 0
      %p340 = por %p338, %p339
      %s341 = ssub.s32 %s29, %s36
      %p342 = scmp.eq.s32.totalorder %s341, 0
      %s344 = sadd.s32 %s343, 1
      %s345 = scalar_select %p342, %s343, %s344
      %p348 = pneg %p342
      %p349 = scmp.eq.s32.totalorder %s29, 1
      %p350 = por %p348, %p349
      %p351 = scmp.ne.s32.totalorder %s343, %s346
      %p352 = scmp.eq.s32.totalorder %s29, 0
      %p353 = por %p351, %p352
      %p354 = scmp.ne.s32.totalorder %s343, %s346
      %p355 = scmp.eq.s32.totalorder %s34, 1
      %p356 = por %p354, %p355
      %p357 = scmp.ne.s32.totalorder %s346, %s347
      %p358 = scmp.eq.s32.totalorder %s34, 0
      %p359 = por %p357, %p358
      %p360 = scmp.ne.s32.totalorder %s346, %s347
      %p361 = scmp.eq.s32.totalorder %s35, 1
      %p362 = por %p360, %p361
      %p364 = scmp.ne.s32.totalorder %s347, %s363
      %p365 = scmp.eq.s32.totalorder %s35, 0
      %p366 = por %p364, %p365
      %s367 = ssub.s32 %s29, %s36
      %p368 = scmp.eq.s32.totalorder %s367, 0
      %s370 = sadd.s32 %s369, 1
      %s371 = scalar_select %p368, %s369, %s370
      %p374 = pneg %p368
      %p375 = scmp.eq.s32.totalorder %s29, 1
      %p376 = por %p374, %p375
      %p377 = scmp.ne.s32.totalorder %s369, %s372
      %p378 = scmp.eq.s32.totalorder %s29, 0
      %p379 = por %p377, %p378
      %p380 = scmp.ne.s32.totalorder %s369, %s372
      %p381 = scmp.eq.s32.totalorder %s34, 1
      %p382 = por %p380, %p381
      %p383 = scmp.ne.s32.totalorder %s372, %s373
      %p384 = scmp.eq.s32.totalorder %s34, 0
      %p385 = por %p383, %p384
      %p386 = scmp.ne.s32.totalorder %s372, %s373
      %p387 = scmp.eq.s32.totalorder %s35, 1
      %p388 = por %p386, %p387
      %p390 = scmp.ne.s32.totalorder %s373, %s389
      %p391 = scmp.eq.s32.totalorder %s35, 0
      %p392 = por %p390, %p391
      %p393 = scmp.le.s32.totalorder 1, %s29
      %p394 = scmp.lt.s32.totalorder %s29, 3
      %p395 = pnand %p393, %p394
      %p396 = pneg %p395
      // Predicated region
      $region9: #{_lambda_.10} parent=5 // pred_check
        _
      $region10: #{_lambda_.10} parent=5 // pred_check_branch
        %398 = sbr.rel (%p395) target = $region12
      $region11: #{_lambda_.10} parent=5 // pred_region
        %s399 = ssub.s32 %s29, 1
        // Predicated region
        $region13: #{_lambda_.10} parent=11 // pred_check
          %p400 = pneg %p102
        $region14: #{_lambda_.10} parent=11 // pred_check_branch
          %402 = sbr.rel (%p400) target = $region16
        $region15: #{_lambda_.10} parent=11 // pred_region
          _
        $region16: #{_lambda_.10} parent=11 // pred_fallthru
          _
        // Predicated region
        $region17: #{_lambda_.10} parent=11 // pred_check
          %p403 = pneg %p123
        $region18: #{_lambda_.10} parent=11 // pred_check_branch
          %405 = sbr.rel (%p403) target = $region20
        $region19: #{_lambda_.10} parent=11 // pred_region
          _
        $region20: #{_lambda_.10} parent=11 // pred_fallthru
          _
        // Predicated region
        $region21: #{_lambda_.10} parent=11 // pred_check
          %p406 = pneg %p144
        $region22: #{_lambda_.10} parent=11 // pred_check_branch
          %408 = sbr.rel (%p406) target = $region24
        $region23: #{_lambda_.10} parent=11 // pred_region
          _
        $region24: #{_lambda_.10} parent=11 // pred_fallthru
          _
        // Predicated region
        $region25: #{_lambda_.10} parent=11 // pred_check
          %p409 = pneg %p165
        $region26: #{_lambda_.10} parent=11 // pred_check_branch
          %411 = sbr.rel (%p409) target = $region28
        $region27: #{_lambda_.10} parent=11 // pred_region
          _
        $region28: #{_lambda_.10} parent=11 // pred_fallthru
          _
        // Predicated region
        $region29: #{_lambda_.10} parent=11 // pred_check
          %p412 = pneg %p186
        $region30: #{_lambda_.10} parent=11 // pred_check_branch
          %414 = sbr.rel (%p412) target = $region32
        $region31: #{_lambda_.10} parent=11 // pred_region
          _
        $region32: #{_lambda_.10} parent=11 // pred_fallthru
          _
        // Predicated region
        $region33: #{_lambda_.10} parent=11 // pred_check
          %p415 = pneg %p207
        $region34: #{_lambda_.10} parent=11 // pred_check_branch
          %417 = sbr.rel (%p415) target = $region36
        $region35: #{_lambda_.10} parent=11 // pred_region
          _
        $region36: #{_lambda_.10} parent=11 // pred_fallthru
          _
        // Predicated region
        $region37: #{_lambda_.10} parent=11 // pred_check
          %p418 = pneg %p228
        $region38: #{_lambda_.10} parent=11 // pred_check_branch
          %420 = sbr.rel (%p418) target = $region40
        $region39: #{_lambda_.10} parent=11 // pred_region
          _
        $region40: #{_lambda_.10} parent=11 // pred_fallthru
          _
        // Predicated region
        $region41: #{_lambda_.10} parent=11 // pred_check
          %p421 = pneg %p249
        $region42: #{_lambda_.10} parent=11 // pred_check_branch
          %423 = sbr.rel (%p421) target = $region44
        $region43: #{_lambda_.10} parent=11 // pred_region
          _
        $region44: #{_lambda_.10} parent=11 // pred_fallthru
          _
        // Predicated region
        $region45: #{_lambda_.10} parent=11 // pred_check
          %p424 = pneg %p270
        $region46: #{_lambda_.10} parent=11 // pred_check_branch
          %426 = sbr.rel (%p424) target = $region48
        $region47: #{_lambda_.10} parent=11 // pred_region
          _
        $region48: #{_lambda_.10} parent=11 // pred_fallthru
          _
        // Predicated region
        $region49: #{_lambda_.10} parent=11 // pred_check
          %p427 = pneg %p291
        $region50: #{_lambda_.10} parent=11 // pred_check_branch
          %429 = sbr.rel (%p427) target = $region52
        $region51: #{_lambda_.10} parent=11 // pred_region
          _
        $region52: #{_lambda_.10} parent=11 // pred_fallthru
          _
        // Predicated region
        $region53: #{_lambda_.10} parent=11 // pred_check
          %p430 = pneg %p312
        $region54: #{_lambda_.10} parent=11 // pred_check_branch
          %432 = sbr.rel (%p430) target = $region56
        $region55: #{_lambda_.10} parent=11 // pred_region
          _
        $region56: #{_lambda_.10} parent=11 // pred_fallthru
          _
        // Predicated region
        $region57: #{_lambda_.10} parent=11 // pred_check
          %p433 = pneg %p333
        $region58: #{_lambda_.10} parent=11 // pred_check_branch
          %435 = sbr.rel (%p433) target = $region60
        $region59: #{_lambda_.10} parent=11 // pred_region
          _
        $region60: #{_lambda_.10} parent=11 // pred_fallthru
          _
      $region12: #{_lambda_.10} parent=5 // pred_fallthru
        _
      %p436 = scmp.lt.s32.totalorder %s29, 2
      // Predicated region
      $region61: #{_lambda_.10} parent=5 // pred_check
        %p437 = pneg %p436
      $region62: #{_lambda_.10} parent=5 // pred_check_branch
        %439 = sbr.rel (%p437) target = $region64
      $region63: #{_lambda_.10} parent=5 // pred_region
        // Predicated region
        $region65: #{_lambda_.10} parent=63 // pred_check
          %p440 = pneg %p49
        $region66: #{_lambda_.10} parent=63 // pred_check_branch
          %442 = sbr.rel (%p440) target = $region68
        $region67: #{_lambda_.10} parent=63 // pred_region
          %p443 = scmp.lt.s32.totalorder %s29, 1
          %s444 = scalar_select %p443, %s29, 1
          %s445 = smul.addr %s444, 2
          %s446 = smul.addr %s445, 8
          %s447 = scalar_lea.vmem %s0, %s446
        $region68: #{_lambda_.10} parent=63 // pred_fallthru
          _
        // Predicated region
        $region69: #{_lambda_.10} parent=63 // pred_check
          %p448 = pneg %p75
        $region70: #{_lambda_.10} parent=63 // pred_check_branch
          %450 = sbr.rel (%p448) target = $region72
        $region71: #{_lambda_.10} parent=63 // pred_region
          %p451 = scmp.lt.s32.totalorder %s29, 1
          %s452 = scalar_select %p451, %s29, 1
          %s453 = smul.addr %s452, 2
          %s454 = smul.addr %s453, 8
          %s455 = scalar_lea.vmem %s1, %s454
        $region72: #{_lambda_.10} parent=63 // pred_fallthru
          _
      $region64: #{_lambda_.10} parent=5 // pred_fallthru
        _
      %p456 = scmp.le.s32.totalorder 1, %s29
      %p457 = scmp.lt.s32.totalorder %s29, 3
      %p458 = pnand %p456, %p457
      %p459 = pneg %p458
      // Predicated region
      $region73: #{_lambda_.10} parent=5 // pred_check
        _
      $region74: #{_lambda_.10} parent=5 // pred_check_branch
        %461 = sbr.rel (%p458) target = $region76
      $region75: #{_lambda_.10} parent=5 // pred_region
        %s462 = ssub.s32 %s29, 1
        %p463 = scmp.lt.s32.totalorder %s34, 1
        %s464 = scalar_select %p463, %s34, 1
        %s465 = smul.addr %s464, 2
        %s466 = smul.addr %s465, 8
        %s467 = scalar_lea.vmem %s0, %s466
        %p468 = pneg %p55
        %p469 = pneg %p52
        %p470 = scmp.lt.s32.totalorder %s34, 1
        %s471 = scalar_select %p470, %s34, 1
        %s472 = smul.addr %s471, 2
        %s473 = smul.addr %s472, 8
        %s474 = scalar_lea.vmem %s1, %s473
        %p475 = pneg %p81
        %p476 = pneg %p78
        %p477 = pneg %p102
        %p478 = pneg %p99
        %p479 = pneg %p123
        %p480 = pneg %p120
        %p481 = pneg %p144
        %p482 = pneg %p141
        %p483 = pneg %p165
        %p484 = pneg %p162
        %p485 = pneg %p186
        %p486 = pneg %p183
        %p487 = pneg %p207
        %p488 = pneg %p204
        %p489 = pneg %p228
        %p490 = pneg %p225
        %p491 = pneg %p249
        %p492 = pneg %p246
        %p493 = pneg %p270
        %p494 = pneg %p267
        %p495 = pneg %p291
        %p496 = pneg %p288
        %p497 = pneg %p312
        %p498 = pneg %p309
        %p499 = pneg %p333
        %p500 = pneg %p330
        %p501 = pneg %p359
        %p502 = pneg %p356
        %s503 = sand.u32 %s346, 1
        %s504 = scalar_lea.sflag [#allocation6], %s503
        %s505 = sand.u32 %s346, 1
        %s506 = smul.addr %s505, 16
        %s507 = scalar_lea.vmem [#allocation5], %s506
        %p508 = pneg %p385
        %p509 = pneg %p382
        %p510 = scmp.lt.s32.totalorder %s34, 1
        %s511 = scalar_select %p510, %s34, 1
        %s512 = smul.addr %s511, 2
        %s513 = smul.addr %s512, 8
        %s514 = scalar_lea.vmem %s15, %s513
        %p515 = scmp.lt.s32.totalorder %s34, 1
        %s516 = scalar_select %p515, %s34, 1
        %s517 = smul.addr %s516, 2
        %s518 = smul.addr %s517, 8
        %s519 = scalar_lea.vmem %s0, %s518
        %p520 = scmp.lt.s32.totalorder %s34, 1
        %s521 = scalar_select %p520, %s34, 1
        %s522 = smul.addr %s521, 2
        %s523 = smul.addr %s522, 8
        %s524 = scalar_lea.vmem %s1, %s523
        %p525 = scmp.lt.s32.totalorder %s34, 1
        %s526 = scalar_select %p525, %s34, 1
        %s527 = smul.addr %s526, 2
        %s528 = smul.addr %s527, 8
        %s529 = scalar_lea.vmem %s15, %s528
        %v530 = vld [vmem:[#allocation3] sm:$0x1]
        %v531 = vld [vmem:[#allocation4] sm:$0x1]
        %v532 = vld [vmem:[%s519] sm:$0xff]
        %v533 = vld [vmem:[%s519 + $0x8] sm:$0xff]
        %v534 = vld [vmem:[%s2] sm:$0xff]
        %v535 = vld [vmem:[%s2 + $0x8] sm:$0xff]
        %v536 = vld [vmem:[%s2 + $0x10] sm:$0xff]
        %v537 = vld [vmem:[%s2 + $0x18] sm:$0xff]
        %v538 = vld [vmem:[%s3] sm:$0x1]
        %v540 = vlaneseq
        %v541 = vshrl.u32 %v540, 7
        %v542 = vsub.s32 0, %v541
        %v543 = vrot.slane %v538, %v542
        %vm545 = vcmask 261120
        %v547 = vsel %vm545, %v532, 0
        %v550 = vsel %vm545, %v533, 0
        %552 = vmatprep.subr.mxu0 0.0
        %553 = vmatpush1.msra.mxu0 0.0
        %554 = vmatprep.subr.mxu0 0.0
        %555 = vmatpush1.msra.mxu0 0.0
        %556 = vmatprep.subr.mxu0 0.0
        %557 = vmatpush1.msra.mxu0 0.0
        %558 = vmatprep.subr.mxu0 0.0
        %559 = vmatpush1.msra.mxu0 0.0
        %560 = vmatprep.subr.mxu0 0.0
        %561 = vmatpush1.msra.mxu0 0.0
        %562 = vmatprep.subr.mxu0 0.0
        %563 = vmatpush1.msra.mxu0 0.0
        %564 = vmatprep.subr.mxu0 0.0
        %565 = vmatpush1.msra.mxu0 0.0
        %566 = vmatprep.subr.mxu0 0.0
        %567 = vmatpush1.msra.mxu0 0.0
        %568 = vmatprep.subr.mxu0 0.0
        %569 = vmatpush1.msra.mxu0 0.0
        %570 = vmatprep.subr.mxu0 0.0
        %571 = vmatpush1.msra.mxu0 0.0
        %572 = vmatprep.subr.mxu0 0.0
        %573 = vmatpush1.msra.mxu0 0.0
        %574 = vmatprep.subr.mxu0 0.0
        %575 = vmatpush1.msra.mxu0 0.0
        %576 = vmatprep.subr.mxu0 0.0
        %577 = vmatpush1.msra.mxu0 %v537
        %578 = vmatprep.subr.mxu0 0.0
        %579 = vmatpush1.msra.mxu0 %v536
        %580 = vmatprep.subr.mxu0 0.0
        %581 = vmatpush1.msra.mxu0 %v535
        %582 = vmatprep.subr.mxu0 0.0
        %583 = vmatpush1.msra.mxu0 %v534
        %584 = vmatprep.subr.mxu0 0.0
        %585 = vmatpush2.msra.mxu0 0.0
        %586 = vmatprep.subr.mxu0 0.0
        %587 = vmatpush2.msra.mxu0 0.0
        %588 = vmatprep.subr.mxu0 0.0
        %589 = vmatpush2.msra.mxu0 0.0
        %590 = vmatprep.subr.mxu0 0.0
        %591 = vmatpush2.msra.mxu0 0.0
        %592 = vmatprep.subr.mxu0 0.0
        %593 = vmatpush2.msra.mxu0 0.0
        %594 = vmatprep.subr.mxu0 0.0
        %595 = vmatpush2.msra.mxu0 0.0
        %596 = vmatprep.subr.mxu0 0.0
        %597 = vmatpush2.msra.mxu0 0.0
        %598 = vmatprep.subr.mxu0 0.0
        %599 = vmatpush2.msra.mxu0 0.0
        %600 = vmatprep.subr.mxu0 0.0
        %601 = vmatpush2.msra.mxu0 0.0
        %602 = vmatprep.subr.mxu0 0.0
        %603 = vmatpush2.msra.mxu0 0.0
        %604 = vmatprep.subr.mxu0 0.0
        %605 = vmatpush2.msra.mxu0 0.0
        %606 = vmatprep.subr.mxu0 0.0
        %607 = vmatpush2.msra.mxu0 0.0
        %608 = vmatprep.subr.mxu0 0.0
        %609 = vmatpush2.msra.mxu0 0.0
        %610 = vmatprep.subr.mxu0 0.0
        %611 = vmatpush2.msra.mxu0 0.0
        %612 = vmatprep.subr.mxu0 0.0
        %613 = vmatpush2.msra.mxu0 0.0
        %614 = vmatprep.subr.mxu0 0.0
        %615 = vmatpush2.msra.mxu0 0.0
        %616 = vmatprep.mubr.f32.mxu0 0.0
        %617 = vmatmul.mubr.f32.gmra.mxu0 %v547
        %v618 = vpop.f32.mrf.mxu0
        %v619 = vadd.f32 %v543, %v618
        %v620 = vpop.f32.mrf.mxu0
        %621 = vmatprep.mubr.f32.mxu0 0.0
        %622 = vmatmul.mubr.f32.gmra.mxu0 %v550
        %v623 = vpop.f32.mrf.mxu0
        %v624 = vadd.f32 %v543, %v623
        %v625 = vpop.f32.mrf.mxu0
        %626 = vdwg.mxu0
        %vm627 = vcmp.ge.f32.partialorder %v619, 0.0
        %vm628 = vcmp.ge.f32.partialorder %v624, 0.0
        %v630 = vlaneseq
        %v631 = vshrl.u32 %v630, 7
        %v632 = vsub.s32 0, %v631
        %v633 = vrot.slane %v530, %v632
        %634 = vset.pattern.permute.xlu0 0
        %635 = vperm.xlu0 %634, %v633
        %v636 = vpop.permute.xlu0 %635
        %v638 = vmul.f32 %v636, %v619
        %v639 = vmul.f32 %v636, %v624
        %v640 = vsel %vm627, %v619, %v638
        %v641 = vsel %vm628, %v624, %v639
        %vm642 = vcmask 523264
        %643 = vst.msk [vmem:[#allocation2 + $0x2] sm:$0xff] %vm642, %v640
        %644 = vst.msk [vmem:[#allocation2 + $0xa] sm:$0xff] %vm642, %v641
        %v645 = vld [vmem:[%s3] sm:$0x1]
        %vm646 = vcmp.ge.f32.partialorder %v645, 0.0
        %647 = vset.pattern.permute.xlu0 0
        %648 = vperm.xlu0 %647, %v530
        %v649 = vpop.permute.xlu0 %648
        %v651 = vlaneseq
        %v652 = vshrl.u32 %v651, 7
        %v653 = vsub.s32 0, %v652
        %v654 = vrot.slane %v649, %v653
        %v655 = vmul.f32 %v654, %v645
        %v656 = vsel %vm646, %v645, %v655
        %v658 = vlaneseq
        %v659 = vshrl.u32 %v658, 7
        %v660 = vsub.s32 0, %v659
        %v661 = vrot.slane %v656, %v660
        %vm663 = vcmask 517120
        %664 = vst.msk [vmem:[#allocation2] sm:$0x3] %vm663, %v661
        %665 = vst.msk [vmem:[#allocation2 + $0x12] sm:$0x3] %vm663, %v661
        %v666 = vld [vmem:[#allocation2] sm:$0xff]
        %v667 = vld [vmem:[#allocation2 + $0x8] sm:$0xff]
        %v668 = vld [vmem:[#allocation2 + $0x10] sm:$0xf]
        %v669 = vsel %vm642, %v666, 0.0
        %v670 = vsel %vm642, %v667, 0.0
        %v671 = vadd.f32 %v669, %v670
        %vm672 = vcmask 519168
        %v673 = vsel %vm672, %v668, 0.0
        %v674 = vadd.f32 %v671, %v673
        %675 = vadd.xlane.f32.xlu0 %v674
        %v676 = vpop.xlane.xlu0 %675
        %v677 = vrot.slane %v676, 4
        %v678 = vadd.f32 %v676, %v677
        %v679 = vrot.slane %v678, 2
        %v680 = vadd.f32 %v678, %v679
        %v681 = vrot.slane %v680, 1
        %v682 = vadd.f32 %v680, %v681
        %s683 = vtos %v682
        %v684 = vrcp.pop 1280.0
        %s685 = vtos %v684
        %s686 = smul.f32 %s683, %s685
        %v687 = vstv %s686
        %v688 = vsub.f32 %v666, %v687
        %v689 = vsub.f32 %v667, %v687
        %v690 = vsub.f32 %v668, %v687
        %v691 = vmul.f32 %v688, %v688
        %v692 = vmul.f32 %v689, %v689
        %v693 = vmul.f32 %v690, %v690
        %v694 = vsel %vm642, %v691, 0.0
        %v695 = vsel %vm642, %v692, 0.0
        %v696 = vadd.f32 %v694, %v695
        %v697 = vsel %vm672, %v693, 0.0
        %v698 = vadd.f32 %v696, %v697
        %699 = vadd.xlane.f32.xlu0 %v698
        %v700 = vpop.xlane.xlu0 %699
        %v701 = vrot.slane %v700, 4
        %v702 = vadd.f32 %v700, %v701
        %v703 = vrot.slane %v702, 2
        %v704 = vadd.f32 %v702, %v703
        %v705 = vrot.slane %v704, 1
        %v706 = vadd.f32 %v704, %v705
        %s707 = vtos %v706
        %v708 = vrcp.pop 1280.0
        %s709 = vtos %v708
        %s710 = smul.f32 %s707, %s709
        %s711 = sadd.f32 %s710, 1e-08
        %v712 = vstv %s711
        %v713 = vrsqrt.pop %v712
        %s714 = vtos %v713
        %v715 = vstv %s714
        %v716 = vmul.f32 %v688, %v715
        %v717 = vmul.f32 %v689, %v715
        %v718 = vmul.f32 %v690, %v715
        %v719 = vld [vmem:[%s5] sm:$0x1]
        %v721 = vlaneseq
        %v722 = vshrl.u32 %v721, 7
        %v723 = vsub.s32 0, %v722
        %v724 = vrot.slane %v719, %v723
        %v726 = vmul.f32 %v716, %v724
        %v727 = vmul.f32 %v717, %v724
        %v728 = vmul.f32 %v718, %v724
        %v729 = vld [vmem:[%s6] sm:$0x1]
        %v731 = vlaneseq
        %v732 = vshrl.u32 %v731, 7
        %v733 = vsub.s32 0, %v732
        %v734 = vrot.slane %v729, %v733
        %v736 = vadd.f32 %v726, %v734
        %v737 = vadd.f32 %v727, %v734
        %v738 = vadd.f32 %v728, %v734
        %739 = vst.msk [vmem:[#allocation2] sm:$0xff] %vm642, %v736
        %740 = vst.msk [vmem:[#allocation2 + $0x8] sm:$0xff] %vm642, %v737
        %741 = vst.msk [vmem:[#allocation2 + $0x10] sm:$0xf] %vm672, %v738
        %v742 = vld [vmem:[#allocation2] sm:$0xff]
        %v743 = vld [vmem:[#allocation2 + $0x8] sm:$0xff]
        %v744 = vld [vmem:[%s7] sm:$0x1]
        %v745 = vlaneseq
        %v746 = vshrl.u32 %v745, 7
        %v747 = vsub.s32 0, %v746
        %v748 = vrot.slane %v744, %v747
        %v749 = vmul.f32 %v742, %v748
        %v750 = vmul.f32 %v743, %v748
        %v751 = vadd.f32 %v749, 0.0
        %v752 = vadd.f32 %v750, 0.0
        %v753 = vld [vmem:[#allocation2 + $0x2] sm:$0xff]
        %v754 = vld [vmem:[#allocation2 + $0xa] sm:$0xff]
        %v755 = vld [vmem:[%s7 + $0x1] sm:$0x1]
        %v756 = vlaneseq
        %v757 = vshrl.u32 %v756, 7
        %v758 = vsub.s32 0, %v757
        %v759 = vrot.slane %v755, %v758
        %v760 = vmul.f32 %v753, %v759
        %v761 = vmul.f32 %v754, %v759
        %v762 = vadd.f32 %v751, %v760
        %v763 = vadd.f32 %v752, %v761
        %v764 = vld [vmem:[#allocation2 + $0x4] sm:$0xff]
        %v765 = vld [vmem:[#allocation2 + $0xc] sm:$0xff]
        %v766 = vld [vmem:[%s7 + $0x2] sm:$0x1]
        %v767 = vlaneseq
        %v768 = vshrl.u32 %v767, 7
        %v769 = vsub.s32 0, %v768
        %v770 = vrot.slane %v766, %v769
        %v771 = vmul.f32 %v764, %v770
        %v772 = vmul.f32 %v765, %v770
        %v773 = vadd.f32 %v762, %v771
        %v774 = vadd.f32 %v763, %v772
        %v775 = vld [vmem:[%s8] sm:$0x1]
        %v777 = vlaneseq
        %v778 = vshrl.u32 %v777, 7
        %v779 = vsub.s32 0, %v778
        %v780 = vrot.slane %v775, %v779
        %v782 = vadd.f32 %v773, %v780
        %v783 = vadd.f32 %v774, %v780
        %vm784 = vcmp.ge.f32.partialorder %v782, 0.0
        %vm785 = vcmp.ge.f32.partialorder %v783, 0.0
        %v787 = vlaneseq
        %v788 = vshrl.u32 %v787, 7
        %v789 = vsub.s32 0, %v788
        %v790 = vrot.slane %v531, %v789
        %791 = vset.pattern.permute.xlu0 0
        %792 = vperm.xlu0 %791, %v790
        %v793 = vpop.permute.xlu0 %792
        %v795 = vmul.f32 %v793, %v782
        %v796 = vmul.f32 %v793, %v783
        %v797 = vsel %vm784, %v782, %v795
        %v798 = vsel %vm785, %v783, %v796
        %v799 = vsel %vm642, %v797, 0.0
        %v800 = vsel %vm642, %v798, 0.0
        %v801 = vadd.f32 %v799, %v800
        %802 = vadd.xlane.f32.xlu0 %v801
        %v803 = vpop.xlane.xlu0 %802
        %v804 = vrot.slane %v803, 4
        %v805 = vadd.f32 %v803, %v804
        %v806 = vrot.slane %v805, 2
        %v807 = vadd.f32 %v805, %v806
        %v808 = vrot.slane %v807, 1
        %v809 = vadd.f32 %v807, %v808
        %s810 = vtos %v809
        %v811 = vrcp.pop 1024.0
        %s812 = vtos %v811
        %s813 = smul.f32 %s810, %s812
        %v814 = vstv %s813
        %v815 = vsub.f32 %v797, %v814
        %v816 = vsub.f32 %v798, %v814
        %v817 = vmul.f32 %v815, %v815
        %v818 = vmul.f32 %v816, %v816
        %v819 = vsel %vm642, %v817, 0.0
        %v820 = vsel %vm642, %v818, 0.0
        %v821 = vadd.f32 %v819, %v820
        %822 = vadd.xlane.f32.xlu0 %v821
        %v823 = vpop.xlane.xlu0 %822
        %v824 = vrot.slane %v823, 4
        %v825 = vadd.f32 %v823, %v824
        %v826 = vrot.slane %v825, 2
        %v827 = vadd.f32 %v825, %v826
        %v828 = vrot.slane %v827, 1
        %v829 = vadd.f32 %v827, %v828
        %s830 = vtos %v829
        %v831 = vrcp.pop 1024.0
        %s832 = vtos %v831
        %s833 = smul.f32 %s830, %s832
        %s834 = sadd.f32 %s833, 1e-08
        %v835 = vstv %s834
        %v836 = vrsqrt.pop %v835
        %s837 = vtos %v836
        %v838 = vstv %s837
        %v839 = vmul.f32 %v815, %v838
        %v840 = vmul.f32 %v816, %v838
        %v841 = vld [vmem:[%s10] sm:$0x1]
        %v843 = vlaneseq
        %v844 = vshrl.u32 %v843, 7
        %v845 = vsub.s32 0, %v844
        %v846 = vrot.slane %v841, %v845
        %v848 = vmul.f32 %v839, %v846
        %v849 = vmul.f32 %v840, %v846
        %v850 = vld [vmem:[%s11] sm:$0x1]
        %v852 = vlaneseq
        %v853 = vshrl.u32 %v852, 7
        %v854 = vsub.s32 0, %v853
        %v855 = vrot.slane %v850, %v854
        %v857 = vadd.f32 %v848, %v855
        %v858 = vadd.f32 %v849, %v855
        %v859 = vld [vmem:[%s12] sm:$0xff]
        %v860 = vld [vmem:[%s12 + $0x8] sm:$0xff]
        %v861 = vld [vmem:[%s12 + $0x10] sm:$0xff]
        %v862 = vld [vmem:[%s12 + $0x18] sm:$0xff]
        %v863 = vld [vmem:[%s12 + $0x20] sm:$0xff]
        %v864 = vld [vmem:[%s12 + $0x28] sm:$0xff]
        %v865 = vld [vmem:[%s12 + $0x30] sm:$0xff]
        %v866 = vld [vmem:[%s12 + $0x38] sm:$0xff]
        %v867 = vld [vmem:[%s13] sm:$0x1]
        %v869 = vlaneseq
        %v870 = vshrl.u32 %v869, 7
        %v871 = vsub.s32 0, %v870
        %v872 = vrot.slane %v867, %v871
        %v875 = vsel %vm642, %v857, 0
        %v878 = vsel %vm642, %v858, 0
        %880 = vmatprep.subr.mxu0 0.0
        %881 = vmatpush1.msra.mxu0 0.0
        %882 = vmatprep.subr.mxu0 0.0
        %883 = vmatpush1.msra.mxu0 0.0
        %884 = vmatprep.subr.mxu0 0.0
        %885 = vmatpush1.msra.mxu0 0.0
        %886 = vmatprep.subr.mxu0 0.0
        %887 = vmatpush1.msra.mxu0 0.0
        %888 = vmatprep.subr.mxu0 0.0
        %889 = vmatpush1.msra.mxu0 0.0
        %890 = vmatprep.subr.mxu0 0.0
        %891 = vmatpush1.msra.mxu0 0.0
        %892 = vmatprep.subr.mxu0 0.0
        %893 = vmatpush1.msra.mxu0 0.0
        %894 = vmatprep.subr.mxu0 0.0
        %895 = vmatpush1.msra.mxu0 0.0
        %896 = vmatprep.subr.mxu0 0.0
        %897 = vmatpush1.msra.mxu0 %v866
        %898 = vmatprep.subr.mxu0 0.0
        %899 = vmatpush1.msra.mxu0 %v865
        %900 = vmatprep.subr.mxu0 0.0
        %901 = vmatpush1.msra.mxu0 %v864
        %902 = vmatprep.subr.mxu0 0.0
        %903 = vmatpush1.msra.mxu0 %v863
        %904 = vmatprep.subr.mxu0 0.0
        %905 = vmatpush1.msra.mxu0 %v862
        %906 = vmatprep.subr.mxu0 0.0
        %907 = vmatpush1.msra.mxu0 %v861
        %908 = vmatprep.subr.mxu0 0.0
        %909 = vmatpush1.msra.mxu0 %v860
        %910 = vmatprep.subr.mxu0 0.0
        %911 = vmatpush1.msra.mxu0 %v859
        %912 = vmatprep.subr.mxu0 0.0
        %913 = vmatpush2.msra.mxu0 0.0
        %914 = vmatprep.subr.mxu0 0.0
        %915 = vmatpush2.msra.mxu0 0.0
        %916 = vmatprep.subr.mxu0 0.0
        %917 = vmatpush2.msra.mxu0 0.0
        %918 = vmatprep.subr.mxu0 0.0
        %919 = vmatpush2.msra.mxu0 0.0
        %920 = vmatprep.subr.mxu0 0.0
        %921 = vmatpush2.msra.mxu0 0.0
        %922 = vmatprep.subr.mxu0 0.0
        %923 = vmatpush2.msra.mxu0 0.0
        %924 = vmatprep.subr.mxu0 0.0
        %925 = vmatpush2.msra.mxu0 0.0
        %926 = vmatprep.subr.mxu0 0.0
        %927 = vmatpush2.msra.mxu0 0.0
        %928 = vmatprep.subr.mxu0 0.0
        %929 = vmatpush2.msra.mxu0 0.0
        %930 = vmatprep.subr.mxu0 0.0
        %931 = vmatpush2.msra.mxu0 0.0
        %932 = vmatprep.subr.mxu0 0.0
        %933 = vmatpush2.msra.mxu0 0.0
        %934 = vmatprep.subr.mxu0 0.0
        %935 = vmatpush2.msra.mxu0 0.0
        %936 = vmatprep.subr.mxu0 0.0
        %937 = vmatpush2.msra.mxu0 0.0
        %938 = vmatprep.subr.mxu0 0.0
        %939 = vmatpush2.msra.mxu0 0.0
        %940 = vmatprep.subr.mxu0 0.0
        %941 = vmatpush2.msra.mxu0 0.0
        %942 = vmatprep.subr.mxu0 0.0
        %943 = vmatpush2.msra.mxu0 0.0
        %944 = vmatprep.mubr.f32.mxu0 0.0
        %945 = vmatmul.mubr.f32.gmra.mxu0 %v875
        %v946 = vpop.f32.mrf.mxu0
        %v947 = vadd.f32 %v872, %v946
        %v948 = vpop.f32.mrf.mxu0
        %949 = vmatprep.mubr.f32.mxu0 0.0
        %950 = vmatmul.mubr.f32.gmra.mxu0 %v878
        %v951 = vpop.f32.mrf.mxu0
        %v952 = vadd.f32 %v872, %v951
        %v953 = vpop.f32.mrf.mxu0
        %954 = vdwg.mxu0
        %955 = vst.msk [vmem:[%s507] sm:$0xff] %vm545, %v532
        %956 = vst.msk [vmem:[%s507 + $0x8] sm:$0xff] %vm545, %v533
        %v957 = vld [vmem:[%s524] sm:$0xff]
        %v958 = vld [vmem:[%s524 + $0x8] sm:$0xff]
        %v959 = vadd.f32 %v957, %v947
        %v960 = vadd.f32 %v958, %v952
        %961 = vst.msk [vmem:[%s529] sm:$0xff] %vm545, %v959
        %962 = vst.msk [vmem:[%s529 + $0x8] sm:$0xff] %vm545, %v960
        %s963 = sand.u32 %s346, 1
        %s964 = scalar_lea.sflag [#allocation6], %s963
        %s965 = sand.u32 %s346, 1
        %s966 = smul.addr %s965, 16
        %s967 = scalar_lea.vmem [#allocation5], %s966
        %p968 = scmp.lt.s32.totalorder %s34, 1
        %s969 = scalar_select %p968, %s34, 1
        %s970 = smul.addr %s969, 2
        %s971 = smul.addr %s970, 8
        %s972 = scalar_lea.vmem %s15, %s971
        // Predicated region
        $region77: #{_lambda_.10} parent=75 // pred_check
          %p973 = pneg %p356
        $region78: #{_lambda_.10} parent=75 // pred_check_branch
          %975 = sbr.rel (%p973) target = $region80
        $region79: #{_lambda_.10} parent=75 // pred_region
          %s977 = ssub.s32 256, 256
          %978 = vsyncadd %s964, %s977
          %s979 = smul.addr %s34, 2
          %s980 = smul.addr %s979, 128
          %s981 = scalar_lea.hbm %s14, %s980
          %s982 = sshll.u32 %s967, 4
          %s983 = int_to_ptr.vmem [resolvable:$true] %s982
          %988 = dma.vmem_to_hbm [thread:$0]  %s983, 256, %s981, %s964, 128, 128, 8
        $region80: #{_lambda_.10} parent=75 // pred_fallthru
          _
        // Predicated region
        $region81: #{_lambda_.10} parent=75 // pred_check
          %p989 = pneg %p382
        $region82: #{_lambda_.10} parent=75 // pred_check_branch
          %991 = sbr.rel (%p989) target = $region84
        $region83: #{_lambda_.10} parent=75 // pred_region
          _
        $region84: #{_lambda_.10} parent=75 // pred_fallthru
          _
      $region76: #{_lambda_.10} parent=5 // pred_fallthru
        _
      %p992 = scmp.le.s32.totalorder 2, %s29
      // Predicated region
      $region85: #{_lambda_.10} parent=5 // pred_check
        %p993 = pneg %p992
      $region86: #{_lambda_.10} parent=5 // pred_check_branch
        %995 = sbr.rel (%p993) target = $region88
      $region87: #{_lambda_.10} parent=5 // pred_region
        %s996 = ssub.s32 %s29, 2
        // Predicated region
        $region89: #{_lambda_.10} parent=87 // pred_check
          %p997 = pneg %p362
        $region90: #{_lambda_.10} parent=87 // pred_check_branch
          %999 = sbr.rel (%p997) target = $region92
        $region91: #{_lambda_.10} parent=87 // pred_region
          %s1000 = sand.u32 %s347, 1
          %s1001 = scalar_lea.sflag [#allocation6], %s1000
          %s1002 = sand.u32 %s347, 1
          %s1003 = smul.addr %s1002, 16
          %s1004 = scalar_lea.vmem [#allocation5], %s1003
          %1005 = dma.done %s1001, 256
        $region92: #{_lambda_.10} parent=87 // pred_fallthru
          _
        // Predicated region
        $region93: #{_lambda_.10} parent=87 // pred_check
          %p1006 = pneg %p388
        $region94: #{_lambda_.10} parent=87 // pred_check_branch
          %1008 = sbr.rel (%p1006) target = $region96
        $region95: #{_lambda_.10} parent=87 // pred_region
          %p1009 = scmp.lt.s32.totalorder %s35, 1
          %s1010 = scalar_select %p1009, %s35, 1
          %s1011 = smul.addr %s1010, 2
          %s1012 = smul.addr %s1011, 8
          %s1013 = scalar_lea.vmem %s15, %s1012
        $region96: #{_lambda_.10} parent=87 // pred_fallthru
          _
      $region88: #{_lambda_.10} parent=5 // pred_fallthru
        _
    $region6: #{_lambda_.10} parent=1 // loop_footer
      %s33 = sadd.s32 1, %s29
    $region7: #{_lambda_.10} parent=1 // loop_footer_branch
      %28 = sbr.rel target = $region3
    $region8: #{_lambda_.10} parent=1 // loop_exit
      _
    %1014 = vsyncpa [#allocation6], 1
    %s1015 = scalar_lea.sflag [#allocation6], 1
    %1016 = vsyncpa %s1015, 1

// kernel: _lambda_.11
$region0: #{_lambda_.11}
  #allocation0 [shape = 'u32[]', space=smem, size = 0x4, offset = 0x4, fixed_abs, tag = 'smem constant byte address 0x4 - core index']
  #allocation1 [shape = 'u32[144,128]{1,0:T(1,128)}', space=vmem, size = 0x12000, scoped, tag = 'internal scratch']
  #allocation2 [shape = 'f32[1,1]{1,0:T(1,128)S(1)}', space=vmem, size = 0x200, scoped, tag = 'scoped memory for _lambda_.11']
  %s0 = inlined_call_operand.vmem [shape: f32[32,32], index: 0, kind: input, shape index: {}]
  %s1 = inlined_call_operand.vmem [shape: f32[32,64], index: 1, kind: input, shape index: {}]
  %s2 = inlined_call_operand.<no memory space> [shape: f32[1,1], index: 2, kind: input, shape index: {}]
  %s3 = inlined_call_operand.vmem [shape: f32[32,32], index: 3, kind: input, shape index: {}]
  %s4 = inlined_call_operand.vmem [shape: f32[1,32], index: 4, kind: input, shape index: {}]
  %s5 = inlined_call_operand.vmem [shape: f32[32,64], index: 5, kind: input, shape index: {}]
  %s6 = inlined_call_operand.vmem [shape: f32[64,16], index: 6, kind: input, shape index: {}]
  %s7 = inlined_call_operand.vmem [shape: f32[32,16], index: 7, kind: output, shape index: {}]
  %s8 = sld [smem:[#allocation0]]
  $region38: #{_lambda_.11} parent=0
    _
  %s10 = ssub.s32 1, %s8
  %s11 = scalar_select 0, %s10, %s8
  %v12 = vstv %s2
  %13 = vst [vmem:[#allocation2] sm:$0x1] %v12
  // Predicated region
  $region2: #{_lambda_.11} parent=0 // pred_check
    _
  $region3: #{_lambda_.11} parent=0 // pred_check_branch
    %15 = sbr.rel (0) target = $region5
  $region4: #{_lambda_.11} parent=0 // pred_region
    _
  $region5: #{_lambda_.11} parent=0 // pred_fallthru
    _
  // Predicated region
  $region6: #{_lambda_.11} parent=0 // pred_check
    _
  $region7: #{_lambda_.11} parent=0 // pred_check_branch
    %17 = sbr.rel (0) target = $region9
  $region8: #{_lambda_.11} parent=0 // pred_region
    _
  $region9: #{_lambda_.11} parent=0 // pred_fallthru
    _
  // Predicated region
  $region10: #{_lambda_.11} parent=0 // pred_check
    _
  $region11: #{_lambda_.11} parent=0 // pred_check_branch
    %19 = sbr.rel (0) target = $region13
  $region12: #{_lambda_.11} parent=0 // pred_region
    _
  $region13: #{_lambda_.11} parent=0 // pred_fallthru
    _
  // Predicated region
  $region14: #{_lambda_.11} parent=0 // pred_check
    _
  $region15: #{_lambda_.11} parent=0 // pred_check_branch
    %21 = sbr.rel (0) target = $region17
  $region16: #{_lambda_.11} parent=0 // pred_region
    _
  $region17: #{_lambda_.11} parent=0 // pred_fallthru
    _
  // Predicated region
  $region18: #{_lambda_.11} parent=0 // pred_check
    _
  $region19: #{_lambda_.11} parent=0 // pred_check_branch
    %23 = sbr.rel (0) target = $region21
  $region20: #{_lambda_.11} parent=0 // pred_region
    _
  $region21: #{_lambda_.11} parent=0 // pred_fallthru
    _
  // Predicated region
  $region22: #{_lambda_.11} parent=0 // pred_check
    _
  $region23: #{_lambda_.11} parent=0 // pred_check_branch
    %25 = sbr.rel (0) target = $region25
  $region24: #{_lambda_.11} parent=0 // pred_region
    _
  $region25: #{_lambda_.11} parent=0 // pred_fallthru
    _
  // Predicated region
  $region26: #{_lambda_.11} parent=0 // pred_check
    _
  $region27: #{_lambda_.11} parent=0 // pred_check_branch
    %27 = sbr.rel (0) target = $region29
  $region28: #{_lambda_.11} parent=0 // pred_region
    _
  $region29: #{_lambda_.11} parent=0 // pred_fallthru
    _
  %v28 = vld [vmem:[%s0] sm:$0xff]
  %v29 = vld [vmem:[%s0 + $0x8] sm:$0xff]
  %v30 = vld [vmem:[%s0 + $0x10] sm:$0xff]
  %v31 = vld [vmem:[%s0 + $0x18] sm:$0xff]
  %v32 = vld [vmem:[#allocation2] sm:$0x1]
  %vm33 = vcmp.ge.f32.partialorder %v28, 0.0
  %vm34 = vcmp.ge.f32.partialorder %v29, 0.0
  %vm35 = vcmp.ge.f32.partialorder %v30, 0.0
  %vm36 = vcmp.ge.f32.partialorder %v31, 0.0
  %v38 = vlaneseq
  %v39 = vshrl.u32 %v38, 7
  %v40 = vsub.s32 0, %v39
  %v41 = vrot.slane %v32, %v40
  %42 = vset.pattern.permute.xlu0 0
  %43 = vperm.xlu0 %42, %v41
  %v44 = vpop.permute.xlu0 %43
  %v46 = vmul.f32 %v44, %v28
  %v47 = vmul.f32 %v44, %v29
  %v48 = vmul.f32 %v44, %v30
  %v49 = vmul.f32 %v44, %v31
  %v50 = vsel %vm33, %v28, %v46
  %v51 = vsel %vm34, %v29, %v47
  %v52 = vsel %vm35, %v30, %v48
  %v53 = vsel %vm36, %v31, %v49
  %v54 = vld [vmem:[%s5] sm:$0xff]
  %v55 = vld [vmem:[%s5 + $0x8] sm:$0xff]
  %v56 = vld [vmem:[%s5 + $0x10] sm:$0xff]
  %v57 = vld [vmem:[%s5 + $0x18] sm:$0xff]
  %vm58 = vcmask 261120
  %v60 = vsel %vm58, %v50, 0
  %v63 = vsel %vm58, %v51, 0
  %v66 = vsel %vm58, %v52, 0
  %v69 = vsel %vm58, %v53, 0
  %71 = vmatprep.subr.mxu0 0.0
  %72 = vmatpush1.msra.mxu0 0.0
  %73 = vmatprep.subr.mxu0 0.0
  %74 = vmatpush1.msra.mxu0 0.0
  %75 = vmatprep.subr.mxu0 0.0
  %76 = vmatpush1.msra.mxu0 0.0
  %77 = vmatprep.subr.mxu0 0.0
  %78 = vmatpush1.msra.mxu0 0.0
  %79 = vmatprep.subr.mxu0 0.0
  %80 = vmatpush1.msra.mxu0 0.0
  %81 = vmatprep.subr.mxu0 0.0
  %82 = vmatpush1.msra.mxu0 0.0
  %83 = vmatprep.subr.mxu0 0.0
  %84 = vmatpush1.msra.mxu0 0.0
  %85 = vmatprep.subr.mxu0 0.0
  %86 = vmatpush1.msra.mxu0 0.0
  %87 = vmatprep.subr.mxu0 0.0
  %88 = vmatpush1.msra.mxu0 0.0
  %89 = vmatprep.subr.mxu0 0.0
  %90 = vmatpush1.msra.mxu0 0.0
  %91 = vmatprep.subr.mxu0 0.0
  %92 = vmatpush1.msra.mxu0 0.0
  %93 = vmatprep.subr.mxu0 0.0
  %94 = vmatpush1.msra.mxu0 0.0
  %95 = vmatprep.subr.mxu0 0.0
  %96 = vmatpush1.msra.mxu0 %v57
  %97 = vmatprep.subr.mxu0 0.0
  %98 = vmatpush1.msra.mxu0 %v56
  %99 = vmatprep.subr.mxu0 0.0
  %100 = vmatpush1.msra.mxu0 %v55
  %101 = vmatprep.subr.mxu0 0.0
  %102 = vmatpush1.msra.mxu0 %v54
  %103 = vmatprep.subr.mxu0 0.0
  %104 = vmatpush2.msra.mxu0 0.0
  %105 = vmatprep.subr.mxu0 0.0
  %106 = vmatpush2.msra.mxu0 0.0
  %107 = vmatprep.subr.mxu0 0.0
  %108 = vmatpush2.msra.mxu0 0.0
  %109 = vmatprep.subr.mxu0 0.0
  %110 = vmatpush2.msra.mxu0 0.0
  %111 = vmatprep.subr.mxu0 0.0
  %112 = vmatpush2.msra.mxu0 0.0
  %113 = vmatprep.subr.mxu0 0.0
  %114 = vmatpush2.msra.mxu0 0.0
  %115 = vmatprep.subr.mxu0 0.0
  %116 = vmatpush2.msra.mxu0 0.0
  %117 = vmatprep.subr.mxu0 0.0
  %118 = vmatpush2.msra.mxu0 0.0
  %119 = vmatprep.subr.mxu0 0.0
  %120 = vmatpush2.msra.mxu0 0.0
  %121 = vmatprep.subr.mxu0 0.0
  %122 = vmatpush2.msra.mxu0 0.0
  %123 = vmatprep.subr.mxu0 0.0
  %124 = vmatpush2.msra.mxu0 0.0
  %125 = vmatprep.subr.mxu0 0.0
  %126 = vmatpush2.msra.mxu0 0.0
  %127 = vmatprep.subr.mxu0 0.0
  %128 = vmatpush2.msra.mxu0 0.0
  %129 = vmatprep.subr.mxu0 0.0
  %130 = vmatpush2.msra.mxu0 0.0
  %131 = vmatprep.subr.mxu0 0.0
  %132 = vmatpush2.msra.mxu0 0.0
  %133 = vmatprep.subr.mxu0 0.0
  %134 = vmatpush2.msra.mxu0 0.0
  %135 = vmatprep.mubr.f32.mxu0 0.0
  %136 = vmatmul.mubr.f32.gmra.mxu0 %v60
  %v137 = vpop.f32.mrf.mxu0
  %v138 = vadd.f32 0.0, %v137
  %v139 = vpop.f32.mrf.mxu0
  %140 = vmatprep.mubr.f32.mxu0 0.0
  %141 = vmatmul.mubr.f32.gmra.mxu0 %v63
  %v142 = vpop.f32.mrf.mxu0
  %v143 = vadd.f32 0.0, %v142
  %v144 = vpop.f32.mrf.mxu0
  %145 = vmatprep.mubr.f32.mxu0 0.0
  %146 = vmatmul.mubr.f32.gmra.mxu0 %v66
  %v147 = vpop.f32.mrf.mxu0
  %v148 = vadd.f32 0.0, %v147
  %v149 = vpop.f32.mrf.mxu0
  %150 = vmatprep.mubr.f32.mxu0 0.0
  %151 = vmatmul.mubr.f32.gmra.mxu0 %v69
  %v152 = vpop.f32.mrf.mxu0
  %v153 = vadd.f32 0.0, %v152
  %v154 = vpop.f32.mrf.mxu0
  %155 = vdwg.mxu0
  %v156 = vxor.u32 %v138, 2147483648
  %v157 = vxor.u32 %v143, 2147483648
  %v158 = vxor.u32 %v148, 2147483648
  %v159 = vxor.u32 %v153, 2147483648
  %v160 = vmul.f32 %v156, 1.442695
  %v161 = vpow.pop %v160
  %v162 = vmul.f32 %v157, 1.442695
  %v163 = vpow.pop %v162
  %v164 = vmul.f32 %v158, 1.442695
  %v165 = vpow.pop %v164
  %v166 = vmul.f32 %v159, 1.442695
  %v167 = vpow.pop %v166
  %v168 = vadd.f32 %v161, 1.0
  %v169 = vadd.f32 %v163, 1.0
  %v170 = vadd.f32 %v165, 1.0
  %v171 = vadd.f32 %v167, 1.0
  %v172 = vrcp.pop %v168
  %v173 = vmul.f32 1.0, %v172
  %v174 = vrcp.pop %v169
  %v175 = vmul.f32 1.0, %v174
  %v176 = vrcp.pop %v170
  %v177 = vmul.f32 1.0, %v176
  %v178 = vrcp.pop %v171
  %v179 = vmul.f32 1.0, %v178
  %v180 = vld [vmem:[%s1] sm:$0xff]
  %v181 = vld [vmem:[%s1 + $0x8] sm:$0xff]
  %v182 = vld [vmem:[%s1 + $0x10] sm:$0xff]
  %v183 = vld [vmem:[%s1 + $0x18] sm:$0xff]
  %v184 = vmul.f32 %v173, %v180
  %v185 = vmul.f32 %v175, %v181
  %v186 = vmul.f32 %v177, %v182
  %v187 = vmul.f32 %v179, %v183
  %v188 = vld [vmem:[%s6] sm:$0xff]
  %v189 = vld [vmem:[%s6 + $0x8] sm:$0xff]
  %v190 = vld [vmem:[%s6 + $0x10] sm:$0xff]
  %v191 = vld [vmem:[%s6 + $0x18] sm:$0xff]
  %v192 = vld [vmem:[%s6 + $0x20] sm:$0xff]
  %v193 = vld [vmem:[%s6 + $0x28] sm:$0xff]
  %v194 = vld [vmem:[%s6 + $0x30] sm:$0xff]
  %v195 = vld [vmem:[%s6 + $0x38] sm:$0xff]
  %vm196 = vcmask 523264
  %v198 = vsel %vm196, %v184, 0
  %v201 = vsel %vm196, %v185, 0
  %v204 = vsel %vm196, %v186, 0
  %v207 = vsel %vm196, %v187, 0
  %209 = vmatprep.subr.mxu0 0.0
  %210 = vmatpush1.msra.mxu0 0.0
  %211 = vmatprep.subr.mxu0 0.0
  %212 = vmatpush1.msra.mxu0 0.0
  %213 = vmatprep.subr.mxu0 0.0
  %214 = vmatpush1.msra.mxu0 0.0
  %215 = vmatprep.subr.mxu0 0.0
  %216 = vmatpush1.msra.mxu0 0.0
  %217 = vmatprep.subr.mxu0 0.0
  %218 = vmatpush1.msra.mxu0 0.0
  %219 = vmatprep.subr.mxu0 0.0
  %220 = vmatpush1.msra.mxu0 0.0
  %221 = vmatprep.subr.mxu0 0.0
  %222 = vmatpush1.msra.mxu0 0.0
  %223 = vmatprep.subr.mxu0 0.0
  %224 = vmatpush1.msra.mxu0 0.0
  %225 = vmatprep.subr.mxu0 0.0
  %226 = vmatpush1.msra.mxu0 %v195
  %227 = vmatprep.subr.mxu0 0.0
  %228 = vmatpush1.msra.mxu0 %v194
  %229 = vmatprep.subr.mxu0 0.0
  %230 = vmatpush1.msra.mxu0 %v193
  %231 = vmatprep.subr.mxu0 0.0
  %232 = vmatpush1.msra.mxu0 %v192
  %233 = vmatprep.subr.mxu0 0.0
  %234 = vmatpush1.msra.mxu0 %v191
  %235 = vmatprep.subr.mxu0 0.0
  %236 = vmatpush1.msra.mxu0 %v190
  %237 = vmatprep.subr.mxu0 0.0
  %238 = vmatpush1.msra.mxu0 %v189
  %239 = vmatprep.subr.mxu0 0.0
  %240 = vmatpush1.msra.mxu0 %v188
  %241 = vmatprep.subr.mxu0 0.0
  %242 = vmatpush2.msra.mxu0 0.0
  %243 = vmatprep.subr.mxu0 0.0
  %244 = vmatpush2.msra.mxu0 0.0
  %245 = vmatprep.subr.mxu0 0.0
  %246 = vmatpush2.msra.mxu0 0.0
  %247 = vmatprep.subr.mxu0 0.0
  %248 = vmatpush2.msra.mxu0 0.0
  %249 = vmatprep.subr.mxu0 0.0
  %250 = vmatpush2.msra.mxu0 0.0
  %251 = vmatprep.subr.mxu0 0.0
  %252 = vmatpush2.msra.mxu0 0.0
  %253 = vmatprep.subr.mxu0 0.0
  %254 = vmatpush2.msra.mxu0 0.0
  %255 = vmatprep.subr.mxu0 0.0
  %256 = vmatpush2.msra.mxu0 0.0
  %257 = vmatprep.subr.mxu0 0.0
  %258 = vmatpush2.msra.mxu0 0.0
  %259 = vmatprep.subr.mxu0 0.0
  %260 = vmatpush2.msra.mxu0 0.0
  %261 = vmatprep.subr.mxu0 0.0
  %262 = vmatpush2.msra.mxu0 0.0
  %263 = vmatprep.subr.mxu0 0.0
  %264 = vmatpush2.msra.mxu0 0.0
  %265 = vmatprep.subr.mxu0 0.0
  %266 = vmatpush2.msra.mxu0 0.0
  %267 = vmatprep.subr.mxu0 0.0
  %268 = vmatpush2.msra.mxu0 0.0
  %269 = vmatprep.subr.mxu0 0.0
  %270 = vmatpush2.msra.mxu0 0.0
  %271 = vmatprep.subr.mxu0 0.0
  %272 = vmatpush2.msra.mxu0 0.0
  %273 = vmatprep.mubr.f32.mxu0 0.0
  %274 = vmatmul.mubr.f32.gmra.mxu0 %v198
  %v275 = vpop.f32.mrf.mxu0
  %v276 = vadd.f32 0.0, %v275
  %v277 = vpop.f32.mrf.mxu0
  %278 = vmatprep.mubr.f32.mxu0 0.0
  %279 = vmatmul.mubr.f32.gmra.mxu0 %v201
  %v280 = vpop.f32.mrf.mxu0
  %v281 = vadd.f32 0.0, %v280
  %v282 = vpop.f32.mrf.mxu0
  %283 = vmatprep.mubr.f32.mxu0 0.0
  %284 = vmatmul.mubr.f32.gmra.mxu0 %v204
  %v285 = vpop.f32.mrf.mxu0
  %v286 = vadd.f32 0.0, %v285
  %v287 = vpop.f32.mrf.mxu0
  %288 = vmatprep.mubr.f32.mxu0 0.0
  %289 = vmatmul.mubr.f32.gmra.mxu0 %v207
  %v290 = vpop.f32.mrf.mxu0
  %v291 = vadd.f32 0.0, %v290
  %v292 = vpop.f32.mrf.mxu0
  %293 = vdwg.mxu0
  %vm294 = vcmask 130048
  %295 = vst.msk [vmem:[%s7] sm:$0xff] %vm294, %v276
  %296 = vst.msk [vmem:[%s7 + $0x8] sm:$0xff] %vm294, %v281
  %297 = vst.msk [vmem:[%s7 + $0x10] sm:$0xff] %vm294, %v286
  %298 = vst.msk [vmem:[%s7 + $0x18] sm:$0xff] %vm294, %v291
  // Predicated region
  $region30: #{_lambda_.11} parent=0 // pred_check
    _
  $region31: #{_lambda_.11} parent=0 // pred_check_branch
    %300 = sbr.rel (0) target = $region33
  $region32: #{_lambda_.11} parent=0 // pred_region
    _
  $region33: #{_lambda_.11} parent=0 // pred_fallthru
    _
  // Predicated region
  $region34: #{_lambda_.11} parent=0 // pred_check
    _
  $region35: #{_lambda_.11} parent=0 // pred_check_branch
    %302 = sbr.rel (0) target = $region37
  $region36: #{_lambda_.11} parent=0 // pred_region
    _
  $region37: #{_lambda_.11} parent=0 // pred_fallthru
    _

</llo_original>
